<compile_context>
chip_gen: v6e
topology: v6e:2x2x1
jax: 0.10.0
libtpu: 0.0.40
codegen_flags: <defaults>
</compile_context>

<pallas_src>
import jax
import jax.numpy as jnp
from jax import lax
from jax.experimental import pallas as pl
from jax.experimental.pallas import tpu as pltpu


# ----------------------------- model hyper-parameters -----------------------------
IN_CHANNELS = 3
NUM_CLASSES = 3
NUM_HEADING_ANGLE_BINS = 4
NUM_SIZE_TEMPLATES = 2
OUT_CHANNELS = 3 + NUM_HEADING_ANGLE_BINS * 2 + NUM_SIZE_TEMPLATES * 4  # 19

# width_multiplier = 0.125 applied to blocks ((128,2,None),(256,1,None),(512,1,None))
FEATURE_CHANNELS = [3, 16, 16, 32, 64]
C_FEAT = FEATURE_CHANNELS[-1]
CLASSIFIER_CHANNELS = [C_FEAT + NUM_CLASSES, 64, 32, OUT_CHANNELS]

NUM_LAYERS = 7        # 4 feature layers + 3 classifier layers
LANE = 128            # all channel dims zero-padded to 128 lanes
BN_EPS = 1e-5


# ----------------------------- parameter construction -----------------------------
def _fold_bn(w, b, gamma, beta, mean, var):
    """Fold eval-mode BatchNorm into a preceding matmul layer (w: (C_in, C_out), y = x @ w + b)."""
    scale = gamma / jnp.sqrt(var + BN_EPS)
    w_f = w * scale[None, :]
    b_f = (b - mean) * scale + beta
    return w_f, b_f


def make_params(key):
    """Deterministically build all (BN-folded) per-layer parameters (float32)."""
    params = {"features": [], "classifier": []}

    def layer(key, c_in, c_out, with_bn):
        k = jax.random.split(key, 6)
        w = jax.random.normal(k[0], (c_in, c_out), jnp.float32) * 0.1   # conv/linear W^T
        b = jax.random.normal(k[1], (c_out,), jnp.float32) * 0.1
        if with_bn:
            gamma = jax.random.uniform(k[2], (c_out,), jnp.float32, 0.5, 1.5)
            beta = jax.random.normal(k[3], (c_out,), jnp.float32) * 0.1
            mean = jax.random.normal(k[4], (c_out,), jnp.float32) * 0.1
            var = jax.random.uniform(k[5], (c_out,), jnp.float32, 0.5, 1.5)
            w, b = _fold_bn(w, b, gamma, beta, mean, var)
        return w, b.reshape(1, c_out)

    keys = jax.random.split(key, 8)
    ki = 0
    for c_in, c_out in zip(FEATURE_CHANNELS[:-1], FEATURE_CHANNELS[1:]):
        params["features"].append(layer(keys[ki], c_in, c_out, with_bn=True)); ki += 1
    cc = CLASSIFIER_CHANNELS
    params["classifier"].append(layer(keys[ki], cc[0], cc[1], with_bn=True)); ki += 1
    params["classifier"].append(layer(keys[ki], cc[1], cc[2], with_bn=True)); ki += 1
    params["classifier"].append(layer(keys[ki], cc[2], cc[3], with_bn=False)); ki += 1
    return params


def pack_params(params):
    """Pack parameters into DMA-friendly slabs (everything zero-padded to 128 lanes).

    Returns a dict:
      w    : (7, 128, 128) bf16  MXU weight slab (entry 0 unused; entry 4 = pooled-feature rows only)
      w0   : (8, 128)      f32   layer-0 weight rows (bf16-quantized values) for VPU FMAs
      b    : (8, 128)      f32   per-layer biases (row i = layer i; row 4 unused, folded into oh bias)
      w_oh : (3, 128)      f32   classifier-0 one-hot rows (bf16-quantized values), used by the wrapper
      b4   : (128,)        f32   classifier-0 bias, used by the wrapper
    """
    layers = params["features"] + params["classifier"]          # 7 (w, b) pairs
    w_packed = jnp.zeros((NUM_LAYERS, LANE, LANE), jnp.float32)
    b_packed = jnp.zeros((8, LANE), jnp.float32)                # 7 rows used, sublane-pad to 8
    for i, (w, b) in enumerate(layers):
        c_in, c_out = w.shape
        if i == 0:
            continue                                            # layer 0 lives in the f32 FMA slab
        if i == 4:
            # classifier layer 0: only the pooled-feature rows go on the MXU; the one-hot rows and
            # the bias are folded into a per-sample lane-dense bias in the wrapper.
            w_packed = w_packed.at[i, :C_FEAT, :c_out].set(w[:C_FEAT])
            continue
        w_packed = w_packed.at[i, :c_in, :c_out].set(w)
        b_packed = b_packed.at[i, :c_out].set(b.reshape(-1))

    # layer 0: quantize like the slab (bf16) but keep f32 for the VPU FMAs
    w0, b0 = layers[0]
    w0_packed = jnp.zeros((8, LANE), jnp.float32)
    w0_packed = w0_packed.at[:IN_CHANNELS, :w0.shape[1]].set(
        w0.astype(jnp.bfloat16).astype(jnp.float32))
    b_packed = b_packed.at[0, :w0.shape[1]].set(b0.reshape(-1))

    # classifier layer 0: one-hot rows + bias for wrapper-side folding
    w4, b4 = layers[4]
    w_oh = jnp.zeros((NUM_CLASSES, LANE), jnp.float32)
    w_oh = w_oh.at[:, :w4.shape[1]].set(
        w4[C_FEAT:C_FEAT + NUM_CLASSES].astype(jnp.bfloat16).astype(jnp.float32))
    b4_packed = jnp.zeros((LANE,), jnp.float32).at[:w4.shape[1]].set(b4.reshape(-1))

    return dict(w=w_packed.astype(jnp.bfloat16), w0=w0_packed, b=b_packed,
                w_oh=w_oh, b4=b4_packed)


# ----------------------------- Pallas kernel -----------------------------
def box_estimation_kernel(coords_ref, ohb_ref, w_ref, w0_ref, b_ref, out_ref, feat_acc):
    """One grid step: (batch_tile, n_chunk) points through the feature chain + running max-pool.

    Grid = (batch_tiles [parallel], point_chunks [arbitrary, reduction]).
    Classifier runs only on the last point-chunk step of each batch tile.
    """
    j = pl.program_id(1)
    nk = pl.num_programs(1)
    tb, nc, _ = coords_ref.shape

    @pl.when(j == 0)
    def _init():
        feat_acc[...] = jnp.full_like(feat_acc, -jnp.inf)

    x = coords_ref[...]                               # (tb, nc, 3) f32
    w0 = w0_ref[...]                                  # (8, 128)   f32 (rows 0..2 real, rest 0)
    b_all = b_ref[...]                                # (8, 128)   f32

    # ---- layer 0 (3 -> 16): VPU broadcast FMAs; a K=3 MXU dot would waste a pass ----
    h = (x[..., 0:1] * w0[0] + x[..., 1:2] * w0[1] + x[..., 2:3] * w0[2] + b_all[0])
    h = jnp.maximum(h, 0.0).reshape(tb * nc, LANE)    # layout-free (nc % 8 == 0)
    h = h.astype(jnp.bfloat16)                        # bf16 activation carry

    # ---- layers 1..2: bf16 MXU dots, f32 accumulate, bias+ReLU in f32, single bf16 cast ----
    for li in (1, 2):
        acc = jnp.dot(h, w_ref[li], preferred_element_type=jnp.float32) + b_all[li]
        h = jnp.maximum(acc, 0.0).astype(jnp.bfloat16)

    # ---- layer 3: output only feeds the max-pool, so keep it f32 (no cast needed) ----
    h3 = jnp.maximum(jnp.dot(h, w_ref[3], preferred_element_type=jnp.float32) + b_all[3], 0.0)

    # ---- running global max pool over points (torch dim=-1) ----
    chunk_max = jnp.max(h3.reshape(tb, nc, LANE), axis=1)        # (tb, 128); lanes >= 64 are 0
    feat_acc[...] = jnp.maximum(feat_acc[...], chunk_max)

    # ---- classifier: only after the last point chunk of this batch tile ----
    @pl.when(j == nk - 1)
    def _classify():
        feat = feat_acc[...].astype(jnp.bfloat16)                # (tb, 128)
        # concat([feat, one_hot]) @ Wc1 + bc1 : one-hot part + bias pre-folded into ohb_ref
        z = jnp.dot(feat, w_ref[4], preferred_element_type=jnp.float32) + ohb_ref[...]
        z = jnp.maximum(z, 0.0).astype(jnp.bfloat16)
        z = jnp.dot(z, w_ref[5], preferred_element_type=jnp.float32) + b_all[5]
        z = jnp.maximum(z, 0.0).astype(jnp.bfloat16)
        # lane-dense padded output; real channels are [:, :OUT_CHANNELS]
        out_ref[...] = jnp.dot(z, w_ref[6], preferred_element_type=jnp.float32) + b_all[6]


# ----------------------------- wrapper -----------------------------
def _choose_tiles(B, N, batch_tile, n_chunk):
    # Point chunk: multiple of 8, large enough that the MXU M-dim is in the hundreds/thousands
    # but bounded so batch_tile * n_chunk stays VMEM-friendly on v7x (64 MiB) / v5e (16 MiB scoped).
    if n_chunk is None:
        n_chunk = N
        while n_chunk > 1024 and n_chunk % 16 == 0:
            n_chunk //= 2
    # Batch tile: multiple of 8 (block tiling) or the full batch; prefer >= 2 batch tiles so the
    # "parallel" grid axis actually pipelines / shards across v7x's two TensorCores.
    if batch_tile is None:
        batch_tile = B
        for cand in (8, 16, 32):
            if B % cand == 0 and B // cand >= 2:
                batch_tile = cand
                break
    assert B % batch_tile == 0
    assert batch_tile == B or batch_tile % 8 == 0
    assert N % n_chunk == 0 and n_chunk % 8 == 0
    return batch_tile, n_chunk


def box_estimation_forward(coords, one_hot_vectors, packed, *, batch_tile=None, n_chunk=None):
    """coords: (B, 3, N) float32 (PyTorch layout), one_hot_vectors: (B, num_classes) float32."""
    B, cin, N = coords.shape
    assert cin == IN_CHANNELS
    batch_tile, n_chunk = _choose_tiles(B, N, batch_tile, n_chunk)

    # Layout plumbing (outside the kernel): points to sublanes, channels minor.
    coords_t = jnp.transpose(coords, (0, 2, 1))                         # (B, N, 3)
    # One-hot folding: per-sample lane-dense bias = one_hot @ Wc1[one-hot rows] + bc1.
    oh_bias = (jnp.dot(one_hot_vectors, packed["w_oh"],
                       precision=lax.Precision.HIGHEST) + packed["b4"]).astype(jnp.float32)

    grid = (B // batch_tile, N // n_chunk)

    grid_spec = pltpu.PrefetchScalarGridSpec(
        num_scalar_prefetch=0,
        grid=grid,
        in_specs=[
            pl.BlockSpec((batch_tile, n_chunk, IN_CHANNELS), lambda i, j: (i, j, 0)),  # coords
            pl.BlockSpec((batch_tile, LANE), lambda i, j: (i, 0)),                     # folded oh bias
            pl.BlockSpec(packed["w"].shape, lambda i, j: (0, 0, 0)),                   # bf16 weight slab
            pl.BlockSpec(packed["w0"].shape, lambda i, j: (0, 0)),                     # layer-0 f32 slab
            pl.BlockSpec(packed["b"].shape, lambda i, j: (0, 0)),                      # bias slab
        ],
        out_specs=pl.BlockSpec((batch_tile, LANE), lambda i, j: (i, 0)),
        scratch_shapes=[pltpu.VMEM((batch_tile, LANE), jnp.float32)],                  # running max
    )

    flops = int(2 * B * N * (3 * LANE + 3 * LANE * LANE) + 2 * B * 3 * LANE * LANE)
    bytes_accessed = int(coords_t.size * 4 + oh_bias.size * 4 + packed["w"].size * 2
                         + packed["w0"].size * 4 + packed["b"].size * 4 + B * LANE * 4)

    out_padded = pl.pallas_call(
        box_estimation_kernel,
        out_shape=jax.ShapeDtypeStruct((B, LANE), jnp.float32),
        grid_spec=grid_spec,
        compiler_params=pltpu.CompilerParams(
            dimension_semantics=("parallel", "arbitrary")),
        cost_estimate=pl.CostEstimate(flops=flops, transcendentals=0,
                                      bytes_accessed=bytes_accessed),
    )(coords_t, oh_bias, packed["w"], packed["w0"], packed["b"])
    return out_padded[:, :OUT_CHANNELS]


# ----------------------------- plain-JAX reference -----------------------------
def reference_forward(coords, one_hot_vectors, params):
    """Pure-JAX reference using the same bf16 weight quantization / f32 accumulation."""
    x = jnp.transpose(coords, (0, 2, 1))                          # (B, N, 3)
    for i, (w, b) in enumerate(params["features"]):
        w_bf16 = w.astype(jnp.bfloat16)
        if i == 0:
            y = jnp.einsum("bnc,cd->bnd", x, w_bf16.astype(jnp.float32),
                           precision=lax.Precision.HIGHEST)
        else:
            y = jnp.einsum("bnc,cd->bnd", x.astype(jnp.bfloat16), w_bf16,
                           preferred_element_type=jnp.float32)
        x = jnp.maximum(y + b, 0.0)
    feat = jnp.max(x, axis=1)                                     # (B, C4)
    z = jnp.concatenate([feat, one_hot_vectors], axis=1)
    (wc1, bc1), (wc2, bc2), (wc3, bc3) = params["classifier"]
    z = jnp.maximum(jnp.dot(z.astype(jnp.bfloat16), wc1.astype(jnp.bfloat16),
                            preferred_element_type=jnp.float32) + bc1, 0.0)
    z = jnp.maximum(jnp.dot(z.astype(jnp.bfloat16), wc2.astype(jnp.bfloat16),
                            preferred_element_type=jnp.float32) + bc2, 0.0)
    return jnp.dot(z.astype(jnp.bfloat16), wc3.astype(jnp.bfloat16),
                   preferred_element_type=jnp.float32) + bc3


# ----------------------------- driver -----------------------------
if __name__ == "__main__":
    key = jax.random.PRNGKey(0)
    k_param, k_coords, k_cls = jax.random.split(key, 3)

    B, N = 16, 256                     # small, but enough rows/steps to exercise both grid axes
    params = make_params(k_param)
    packed = pack_params(params)

    # inputs['coords'] in torch layout (B, 3, N)
    coords = jax.random.normal(k_coords, (B, IN_CHANNELS, N), jnp.float32)
    class_ids = jax.random.randint(k_cls, (B,), 0, NUM_CLASSES)
    one_hot_vectors = jax.nn.one_hot(class_ids, NUM_CLASSES, dtype=jnp.float32)

    # grid = (2 batch tiles [parallel], 2 point chunks [arbitrary]); 1024 point-rows per step.
    out = box_estimation_forward(coords, one_hot_vectors, packed, batch_tile=8, n_chunk=128)
    out = jax.block_until_ready(out)

    ref = reference_forward(coords, one_hot_vectors, params)
    assert out.shape == (B, OUT_CHANNELS), out.shape
    max_err = jnp.max(jnp.abs(out - ref))
    assert jnp.allclose(out, ref, atol=5e-3, rtol=5e-3), f"max abs err = {max_err}"

    print("KERNEL_OK")
</pallas_src>

<mosaic_0001>
module attributes {stable_mosaic.version = 11 : i64} {
  func.func @box_estimation_kernel(%arg0: i32, %arg1: i32, %arg2: memref<8x128x3xf32, #tpu.memory_space<vmem>>, %arg3: memref<8x128xf32, #tpu.memory_space<vmem>>, %arg4: memref<7x128x128xbf16, #tpu.memory_space<vmem>>, %arg5: memref<8x128xf32, #tpu.memory_space<vmem>>, %arg6: memref<8x128xf32, #tpu.memory_space<vmem>>, %arg7: memref<8x128xf32, #tpu.memory_space<vmem>>, %arg8: memref<8x128xf32, #tpu.memory_space<vmem>>) attributes {dimension_semantics = [#tpu.dimension_semantics<parallel>, #tpu.dimension_semantics<arbitrary>], iteration_bounds = array<i64: 2, 2>, scalar_prefetch = 0 : i64, scratch_operands = 1 : i64, tpu.core_type = #tpu.core_type<tc>, window_params = [{transform_indices = @transform_0, window_bounds = array<i64: 8, 128, 3>}, {transform_indices = @transform_1, window_bounds = array<i64: 8, 128>}, {pipeline_mode = #tpu.pipeline_mode<synchronous>, transform_indices = @transform_2, window_bounds = array<i64: 7, 128, 128>}, {pipeline_mode = #tpu.pipeline_mode<synchronous>, transform_indices = @transform_3, window_bounds = array<i64: 8, 128>}, {pipeline_mode = #tpu.pipeline_mode<synchronous>, transform_indices = @transform_4, window_bounds = array<i64: 8, 128>}, {transform_indices = @transform_5, window_bounds = array<i64: 8, 128>}]} {
    %c0_i32 = arith.constant 0 : i32
    %0 = arith.cmpi eq, %arg1, %c0_i32 : i32
    %1 = arith.extui %0 : i1 to i32
    %c0_i32_0 = arith.constant 0 : i32
    %2 = arith.cmpi ne, %1, %c0_i32_0 : i32
    scf.if %2 {
      %cst_25 = arith.constant 0xFF800000 : f32
      %78 = vector.broadcast %cst_25 : f32 to vector<8x128xf32>
      %c0_26 = arith.constant 0 : index
      %c0_27 = arith.constant 0 : index
      %79 = vector.load %arg8[%c0_26, %c0_27] : memref<8x128xf32, #tpu.memory_space<vmem>>, vector<8x128xf32>
      tpu.vector_store %arg8[%c0_26, %c0_27], %78 {strides = array<i32>} : memref<8x128xf32, #tpu.memory_space<vmem>>, vector<8x128xf32>,
    } else {
    }
    %c0 = arith.constant 0 : index
    %c0_1 = arith.constant 0 : index
    %c0_2 = arith.constant 0 : index
    %3 = vector.load %arg2[%c0, %c0_1, %c0_2] : memref<8x128x3xf32, #tpu.memory_space<vmem>>, vector<8x128x3xf32>
    %c0_3 = arith.constant 0 : index
    %c0_4 = arith.constant 0 : index
    %4 = vector.load %arg5[%c0_3, %c0_4] : memref<8x128xf32, #tpu.memory_space<vmem>>, vector<8x128xf32>
    %c0_5 = arith.constant 0 : index
    %c0_6 = arith.constant 0 : index
    %5 = vector.load %arg6[%c0_5, %c0_6] : memref<8x128xf32, #tpu.memory_space<vmem>>, vector<8x128xf32>
    %6 = vector.extract_strided_slice %3 {offsets = [0, 0, 0], sizes = [8, 128, 1], strides = [1, 1, 1]} : vector<8x128x3xf32> to vector<8x128x1xf32>
    %7 = vector.extract_strided_slice %4 {offsets = [0, 0], sizes = [1, 128], strides = [1, 1]} : vector<8x128xf32> to vector<1x128xf32>
    %8 = vector.shape_cast %7 : vector<1x128xf32> to vector<128xf32>
    %9 = vector.shape_cast %8 : vector<128xf32> to vector<1x1x128xf32>
    %10 = vector.broadcast %6 : vector<8x128x1xf32> to vector<8x128x128xf32>
    %11 = vector.broadcast %9 : vector<1x1x128xf32> to vector<8x128x128xf32>
    %12 = arith.mulf %10, %11 : vector<8x128x128xf32>
    %13 = vector.extract_strided_slice %3 {offsets = [0, 0, 1], sizes = [8, 128, 1], strides = [1, 1, 1]} : vector<8x128x3xf32> to vector<8x128x1xf32>
    %14 = vector.extract_strided_slice %4 {offsets = [1, 0], sizes = [1, 128], strides = [1, 1]} : vector<8x128xf32> to vector<1x128xf32>
    %15 = vector.shape_cast %14 : vector<1x128xf32> to vector<128xf32>
    %16 = vector.shape_cast %15 : vector<128xf32> to vector<1x1x128xf32>
    %17 = vector.broadcast %13 : vector<8x128x1xf32> to vector<8x128x128xf32>
    %18 = vector.broadcast %16 : vector<1x1x128xf32> to vector<8x128x128xf32>
    %19 = arith.mulf %17, %18 : vector<8x128x128xf32>
    %20 = arith.addf %12, %19 : vector<8x128x128xf32>
    %21 = vector.extract_strided_slice %3 {offsets = [0, 0, 2], sizes = [8, 128, 1], strides = [1, 1, 1]} : vector<8x128x3xf32> to vector<8x128x1xf32>
    %22 = vector.extract_strided_slice %4 {offsets = [2, 0], sizes = [1, 128], strides = [1, 1]} : vector<8x128xf32> to vector<1x128xf32>
    %23 = vector.shape_cast %22 : vector<1x128xf32> to vector<128xf32>
    %24 = vector.shape_cast %23 : vector<128xf32> to vector<1x1x128xf32>
    %25 = vector.broadcast %21 : vector<8x128x1xf32> to vector<8x128x128xf32>
    %26 = vector.broadcast %24 : vector<1x1x128xf32> to vector<8x128x128xf32>
    %27 = arith.mulf %25, %26 : vector<8x128x128xf32>
    %28 = arith.addf %20, %27 : vector<8x128x128xf32>
    %29 = vector.extract_strided_slice %5 {offsets = [0, 0], sizes = [1, 128], strides = [1, 1]} : vector<8x128xf32> to vector<1x128xf32>
    %30 = vector.shape_cast %29 : vector<1x128xf32> to vector<128xf32>
    %31 = vector.shape_cast %30 : vector<128xf32> to vector<1x1x128xf32>
    %32 = vector.broadcast %31 : vector<1x1x128xf32> to vector<8x128x128xf32>
    %33 = arith.addf %28, %32 : vector<8x128x128xf32>
    %cst = arith.constant 0.000000e+00 : f32
    %34 = vector.broadcast %cst : f32 to vector<8x128x128xf32>
    %35 = arith.maximumf %33, %34 : vector<8x128x128xf32>
    %36 = vector.shape_cast %35 : vector<8x128x128xf32> to vector<1024x128xf32>
    %37 = arith.truncf %36 : vector<1024x128xf32> to vector<1024x128xbf16>
    %c1 = arith.constant 1 : index
    %c0_7 = arith.constant 0 : index
    %c0_8 = arith.constant 0 : index
    %38 = vector.load %arg4[%c1, %c0_7, %c0_8] : memref<7x128x128xbf16, #tpu.memory_space<vmem>>, vector<1x128x128xbf16>
    %39 = vector.shape_cast %38 : vector<1x128x128xbf16> to vector<128x128xbf16>
    %cst_9 = arith.constant dense<0.000000e+00> : vector<1024x128xf32>
    %40 = tpu.matmul %37, %39, %cst_9 {dimension_numbers = #tpu.dot_dimension_numbers<[1], [0], [0], [1], [0, 0, 1, 1], [], []>} : vector<1024x128xbf16>, vector<128x128xbf16>, vector<1024x128xf32> -> vector<1024x128xf32>
    %41 = vector.extract_strided_slice %5 {offsets = [1, 0], sizes = [1, 128], strides = [1, 1]} : vector<8x128xf32> to vector<1x128xf32>
    %42 = vector.shape_cast %41 : vector<1x128xf32> to vector<128xf32>
    %43 = vector.shape_cast %42 : vector<128xf32> to vector<1x128xf32>
    %44 = vector.broadcast %43 : vector<1x128xf32> to vector<1024x128xf32>
    %45 = arith.addf %40, %44 : vector<1024x128xf32>
    %cst_10 = arith.constant 0.000000e+00 : f32
    %46 = vector.broadcast %cst_10 : f32 to vector<1024x128xf32>
    %47 = arith.maximumf %45, %46 : vector<1024x128xf32>
    %48 = arith.truncf %47 : vector<1024x128xf32> to vector<1024x128xbf16>
    %c2 = arith.constant 2 : index
    %c0_11 = arith.constant 0 : index
    %c0_12 = arith.constant 0 : index
    %49 = vector.load %arg4[%c2, %c0_11, %c0_12] : memref<7x128x128xbf16, #tpu.memory_space<vmem>>, vector<1x128x128xbf16>
    %50 = vector.shape_cast %49 : vector<1x128x128xbf16> to vector<128x128xbf16>
    %cst_13 = arith.constant dense<0.000000e+00> : vector<1024x128xf32>
    %51 = tpu.matmul %48, %50, %cst_13 {dimension_numbers = #tpu.dot_dimension_numbers<[1], [0], [0], [1], [0, 0, 1, 1], [], []>} : vector<1024x128xbf16>, vector<128x128xbf16>, vector<1024x128xf32> -> vector<1024x128xf32>
    %52 = vector.extract_strided_slice %5 {offsets = [2, 0], sizes = [1, 128], strides = [1, 1]} : vector<8x128xf32> to vector<1x128xf32>
    %53 = vector.shape_cast %52 : vector<1x128xf32> to vector<128xf32>
    %54 = vector.shape_cast %53 : vector<128xf32> to vector<1x128xf32>
    %55 = vector.broadcast %54 : vector<1x128xf32> to vector<1024x128xf32>
    %56 = arith.addf %51, %55 : vector<1024x128xf32>
    %cst_14 = arith.constant 0.000000e+00 : f32
    %57 = vector.broadcast %cst_14 : f32 to vector<1024x128xf32>
    %58 = arith.maximumf %56, %57 : vector<1024x128xf32>
    %59 = arith.truncf %58 : vector<1024x128xf32> to vector<1024x128xbf16>
    %c3 = arith.constant 3 : index
    %c0_15 = arith.constant 0 : index
    %c0_16 = arith.constant 0 : index
    %60 = vector.load %arg4[%c3, %c0_15, %c0_16] : memref<7x128x128xbf16, #tpu.memory_space<vmem>>, vector<1x128x128xbf16>
    %61 = vector.shape_cast %60 : vector<1x128x128xbf16> to vector<128x128xbf16>
    %cst_17 = arith.constant dense<0.000000e+00> : vector<1024x128xf32>
    %62 = tpu.matmul %59, %61, %cst_17 {dimension_numbers = #tpu.dot_dimension_numbers<[1], [0], [0], [1], [0, 0, 1, 1], [], []>} : vector<1024x128xbf16>, vector<128x128xbf16>, vector<1024x128xf32> -> vector<1024x128xf32>
    %63 = vector.extract_strided_slice %5 {offsets = [3, 0], sizes = [1, 128], strides = [1, 1]} : vector<8x128xf32> to vector<1x128xf32>
    %64 = vector.shape_cast %63 : vector<1x128xf32> to vector<128xf32>
    %65 = vector.shape_cast %64 : vector<128xf32> to vector<1x128xf32>
    %66 = vector.broadcast %65 : vector<1x128xf32> to vector<1024x128xf32>
    %67 = arith.addf %62, %66 : vector<1024x128xf32>
    %cst_18 = arith.constant 0.000000e+00 : f32
    %68 = vector.broadcast %cst_18 : f32 to vector<1024x128xf32>
    %69 = arith.maximumf %67, %68 : vector<1024x128xf32>
    %70 = vector.shape_cast %69 : vector<1024x128xf32> to vector<8x128x128xf32>
    %cst_19 = arith.constant dense<0xFF800000> : vector<8x128xf32>
    %71 = vector.multi_reduction <maximumf>, %70, %cst_19 [1] : vector<8x128x128xf32> to vector<8x128xf32>
    %c0_20 = arith.constant 0 : index
    %c0_21 = arith.constant 0 : index
    %72 = vector.load %arg8[%c0_20, %c0_21] : memref<8x128xf32, #tpu.memory_space<vmem>>, vector<8x128xf32>
    %73 = arith.maximumf %72, %71 : vector<8x128xf32>
    %c0_22 = arith.constant 0 : index
    %c0_23 = arith.constant 0 : index
    %74 = vector.load %arg8[%c0_22, %c0_23] : memref<8x128xf32, #tpu.memory_space<vmem>>, vector<8x128xf32>
    tpu.vector_store %arg8[%c0_22, %c0_23], %73 {strides = array<i32>} : memref<8x128xf32, #tpu.memory_space<vmem>>, vector<8x128xf32>,
    %c1_i32 = arith.constant 1 : i32
    %75 = arith.cmpi eq, %arg1, %c1_i32 : i32
    %76 = arith.extui %75 : i1 to i32
    %c0_i32_24 = arith.constant 0 : i32
    %77 = arith.cmpi ne, %76, %c0_i32_24 : i32
    scf.if %77 {
      %c0_25 = arith.constant 0 : index
      %c0_26 = arith.constant 0 : index
      %78 = vector.load %arg8[%c0_25, %c0_26] : memref<8x128xf32, #tpu.memory_space<vmem>>, vector<8x128xf32>
      %79 = arith.truncf %78 : vector<8x128xf32> to vector<8x128xbf16>
      %c4 = arith.constant 4 : index
      %c0_27 = arith.constant 0 : index
      %c0_28 = arith.constant 0 : index
      %80 = vector.load %arg4[%c4, %c0_27, %c0_28] : memref<7x128x128xbf16, #tpu.memory_space<vmem>>, vector<1x128x128xbf16>
      %81 = vector.shape_cast %80 : vector<1x128x128xbf16> to vector<128x128xbf16>
      %cst_29 = arith.constant dense<0.000000e+00> : vector<8x128xf32>
      %82 = tpu.matmul %79, %81, %cst_29 {dimension_numbers = #tpu.dot_dimension_numbers<[1], [0], [0], [1], [0, 0, 1, 1], [], []>} : vector<8x128xbf16>, vector<128x128xbf16>, vector<8x128xf32> -> vector<8x128xf32>
      %c0_30 = arith.constant 0 : index
      %c0_31 = arith.constant 0 : index
      %83 = vector.load %arg3[%c0_30, %c0_31] : memref<8x128xf32, #tpu.memory_space<vmem>>, vector<8x128xf32>
      %84 = arith.addf %82, %83 : vector<8x128xf32>
      %cst_32 = arith.constant 0.000000e+00 : f32
      %85 = vector.broadcast %cst_32 : f32 to vector<8x128xf32>
      %86 = arith.maximumf %84, %85 : vector<8x128xf32>
      %87 = arith.truncf %86 : vector<8x128xf32> to vector<8x128xbf16>
      %c5 = arith.constant 5 : index
      %c0_33 = arith.constant 0 : index
      %c0_34 = arith.constant 0 : index
      %88 = vector.load %arg4[%c5, %c0_33, %c0_34] : memref<7x128x128xbf16, #tpu.memory_space<vmem>>, vector<1x128x128xbf16>
      %89 = vector.shape_cast %88 : vector<1x128x128xbf16> to vector<128x128xbf16>
      %cst_35 = arith.constant dense<0.000000e+00> : vector<8x128xf32>
      %90 = tpu.matmul %87, %89, %cst_35 {dimension_numbers = #tpu.dot_dimension_numbers<[1], [0], [0], [1], [0, 0, 1, 1], [], []>} : vector<8x128xbf16>, vector<128x128xbf16>, vector<8x128xf32> -> vector<8x128xf32>
      %91 = vector.extract_strided_slice %5 {offsets = [5, 0], sizes = [1, 128], strides = [1, 1]} : vector<8x128xf32> to vector<1x128xf32>
      %92 = vector.shape_cast %91 : vector<1x128xf32> to vector<128xf32>
      %93 = vector.shape_cast %92 : vector<128xf32> to vector<1x128xf32>
      %94 = vector.broadcast %93 : vector<1x128xf32> to vector<8x128xf32>
      %95 = arith.addf %90, %94 : vector<8x128xf32>
      %cst_36 = arith.constant 0.000000e+00 : f32
      %96 = vector.broadcast %cst_36 : f32 to vector<8x128xf32>
      %97 = arith.maximumf %95, %96 : vector<8x128xf32>
      %98 = arith.truncf %97 : vector<8x128xf32> to vector<8x128xbf16>
      %c6 = arith.constant 6 : index
      %c0_37 = arith.constant 0 : index
      %c0_38 = arith.constant 0 : index
      %99 = vector.load %arg4[%c6, %c0_37, %c0_38] : memref<7x128x128xbf16, #tpu.memory_space<vmem>>, vector<1x128x128xbf16>
      %100 = vector.shape_cast %99 : vector<1x128x128xbf16> to vector<128x128xbf16>
      %cst_39 = arith.constant dense<0.000000e+00> : vector<8x128xf32>
      %101 = tpu.matmul %98, %100, %cst_39 {dimension_numbers = #tpu.dot_dimension_numbers<[1], [0], [0], [1], [0, 0, 1, 1], [], []>} : vector<8x128xbf16>, vector<128x128xbf16>, vector<8x128xf32> -> vector<8x128xf32>
      %102 = vector.extract_strided_slice %5 {offsets = [6, 0], sizes = [1, 128], strides = [1, 1]} : vector<8x128xf32> to vector<1x128xf32>
      %103 = vector.shape_cast %102 : vector<1x128xf32> to vector<128xf32>
      %104 = vector.shape_cast %103 : vector<128xf32> to vector<1x128xf32>
      %105 = vector.broadcast %104 : vector<1x128xf32> to vector<8x128xf32>
      %106 = arith.addf %101, %105 : vector<8x128xf32>
      %c0_40 = arith.constant 0 : index
      %c0_41 = arith.constant 0 : index
      %107 = vector.load %arg7[%c0_40, %c0_41] : memref<8x128xf32, #tpu.memory_space<vmem>>, vector<8x128xf32>
      tpu.vector_store %arg7[%c0_40, %c0_41], %106 {strides = array<i32>} : memref<8x128xf32, #tpu.memory_space<vmem>>, vector<8x128xf32>,
    } else {
    }
    return
  }
  func.func @transform_0(%arg0: i32, %arg1: i32) -> (i32, i32, i32) {
    %c0_i32 = arith.constant 0 : i32
    %c0_i32_0 = arith.constant 0 : i32
    return %arg0, %arg1, %c0_i32 : i32, i32, i32
  }
  func.func @transform_1(%arg0: i32, %arg1: i32) -> (i32, i32) {
    %c0_i32 = arith.constant 0 : i32
    %c0_i32_0 = arith.constant 0 : i32
    return %arg0, %c0_i32 : i32, i32
  }
  func.func @transform_2(%arg0: i32, %arg1: i32) -> (i32, i32, i32) {
    %c0_i32 = arith.constant 0 : i32
    %c0_i32_0 = arith.constant 0 : i32
    %c0_i32_1 = arith.constant 0 : i32
    %c0_i32_2 = arith.constant 0 : i32
    return %c0_i32, %c0_i32_0, %c0_i32_1 : i32, i32, i32
  }
  func.func @transform_3(%arg0: i32, %arg1: i32) -> (i32, i32) {
    %c0_i32 = arith.constant 0 : i32
    %c0_i32_0 = arith.constant 0 : i32
    %c0_i32_1 = arith.constant 0 : i32
    return %c0_i32, %c0_i32_0 : i32, i32
  }
  func.func @transform_4(%arg0: i32, %arg1: i32) -> (i32, i32) {
    %c0_i32 = arith.constant 0 : i32
    %c0_i32_0 = arith.constant 0 : i32
    %c0_i32_1 = arith.constant 0 : i32
    return %c0_i32, %c0_i32_0 : i32, i32
  }
  func.func @transform_5(%arg0: i32, %arg1: i32) -> (i32, i32) {
    %c0_i32 = arith.constant 0 : i32
    %c0_i32_0 = arith.constant 0 : i32
    return %arg0, %c0_i32 : i32, i32
  }
}

</mosaic_0001>

<llo_original>
// kernel: tpu_custom_call.1
$region0: #{tpu_custom_call.1}
  #allocation0 [shape = 'u32[]', space=smem, size = 0x4, offset = 0x4, fixed_abs, tag = 'smem constant byte address 0x4 - core index']
  #allocation1 [shape = 'u32[144,128]{1,0:T(1,128)}', space=vmem, size = 0x12000, scoped, tag = 'internal scratch']
  #allocation2 [shape = 'f32[8,128]{1,0:T(8,128)}', space=vmem, size = 0x1000, scoped, tag = 'scratch operand']
  %s0 = inlined_call_operand.vmem [shape: f32[16,256,3], index: 0, kind: input, shape index: {}]
  %s1 = inlined_call_operand.vmem [shape: f32[16,128], index: 1, kind: input, shape index: {}]
  %s2 = inlined_call_operand.vmem [shape: bf16[7,128,128], index: 2, kind: input, shape index: {}]
  %s3 = inlined_call_operand.vmem [shape: f32[8,128], index: 3, kind: input, shape index: {}]
  %s4 = inlined_call_operand.vmem [shape: f32[8,128], index: 4, kind: input, shape index: {}]
  %s5 = inlined_call_operand.hbm [shape: f32[16,128], index: 5, kind: output, shape index: {}]
  %s6 = sld [smem:[#allocation0]]
  $region99: #{tpu_custom_call.1} parent=0
    _
  %s8 = ssub.s32 1, %s6
  %s9 = scalar_select 0, %s8, %s6
  $region1: #{tpu_custom_call.1} parent=0
    #allocation3 [shape = 'u8[1048576]{0}', space=vmem, size = 0x100000, scoped, tag = 'input window, operand 0']
    #allocation4 [shape = 'u8[8192]{0}', space=vmem, size = 0x2000, scoped, tag = 'output window, operand 0']
    #allocation5 [shape = 's32[2]{0}', space=sflag, size = 0x8, scoped, tag = 'scoped memory for tpu_custom_call.1']
    %10 = vsyncpa [#allocation5], 0
    %s11 = scalar_lea.sflag [#allocation5], 1
    %12 = vsyncpa %s11, 0
    loop: start=0, step=1, limit=6
    $region2: #{tpu_custom_call.1} parent=1 // loop_pre_header
      _
    $region3: #{tpu_custom_call.1} parent=1 // loop_header
      %s14 = sphi 0, %s18
      %p15 = scmp.ge.s32.totalorder %s14, 6
      %s21 = sphi 0, %s33
      %s22 = sphi 0, %s29
      %s23 = sphi 0, %s21
      %s24 = sphi 0, %s22
      %s25 = sphi 0, %s23
      %s26 = sphi 0, %s24
      %s38 = sphi 0, %s40
      %s41 = sphi 0, %s38
      %s42 = sphi 0, %s41
      %s58 = sphi 0, %s42
      %s64 = sphi 0, %s66
      %s67 = sphi 0, %s64
      %s68 = sphi 0, %s67
      %s84 = sphi 0, %s68
      %s88 = sphi 0, %s88
      %s90 = sphi 0, %s88
      %s91 = sphi 0, %s90
      %s105 = sphi 0, %s91
      %s109 = sphi 0, %s109
      %s111 = sphi 0, %s109
      %s112 = sphi 0, %s111
      %s126 = sphi 0, %s112
      %s130 = sphi 0, %s130
      %s132 = sphi 0, %s130
      %s133 = sphi 0, %s132
      %s147 = sphi 0, %s133
      %s153 = sphi 0, %s155
      %s156 = sphi 0, %s153
      %s157 = sphi 0, %s156
      %s173 = sphi 0, %s157
    $region4: #{tpu_custom_call.1} parent=1 // loop_header_branch
      %17 = sbr.rel (%p15) target = $region8
    $region5: #{tpu_custom_call.1} parent=1 // loop_body
      %s19 = ssub.s32 %s14, 1
      %s20 = ssub.s32 %s14, 2
      %s27 = sadd.s32 1, %s22
      %p28 = scmp.ge.s32.totalorder %s27, 2
      %s29 = scalar_select %p28, 0, %s27
      %s30 = sadd.s32 1, %s21
      %s31 = scalar_select %p28, %s30, %s21
      %p32 = scmp.ge.s32.totalorder %s31, 2
      %s33 = scalar_select %p32, 0, %s31
      %s34 = ssub.s32 %s21, %s33
      %s35 = ssub.s32 %s22, %s29
      %s36 = sor.u32 %s34, %s35
      %p37 = scmp.eq.s32.totalorder %s36, 0
      %s39 = sadd.s32 %s38, 1
      %s40 = scalar_select %p37, %s38, %s39
      %p43 = pneg %p37
      %p44 = scmp.eq.s32.totalorder %s14, 3
      %p45 = por %p43, %p44
      %p46 = scmp.ne.s32.totalorder %s38, %s41
      %p47 = scmp.eq.s32.totalorder %s14, 0
      %p48 = por %p46, %p47
      %p49 = scmp.ne.s32.totalorder %s38, %s41
      %p50 = scmp.eq.s32.totalorder %s19, 3
      %p51 = por %p49, %p50
      %p52 = scmp.ne.s32.totalorder %s41, %s42
      %p53 = scmp.eq.s32.totalorder %s19, 0
      %p54 = por %p52, %p53
      %p55 = scmp.ne.s32.totalorder %s41, %s42
      %p56 = scmp.eq.s32.totalorder %s20, 3
      %p57 = por %p55, %p56
      %p59 = scmp.ne.s32.totalorder %s42, %s58
      %p60 = scmp.eq.s32.totalorder %s20, 0
      %p61 = por %p59, %p60
      %s62 = ssub.s32 %s21, %s33
      %p63 = scmp.eq.s32.totalorder %s62, 0
      %s65 = sadd.s32 %s64, 1
      %s66 = scalar_select %p63, %s64, %s65
      %p69 = pneg %p63
      %p70 = scmp.eq.s32.totalorder %s14, 3
      %p71 = por %p69, %p70
      %p72 = scmp.ne.s32.totalorder %s64, %s67
      %p73 = scmp.eq.s32.totalorder %s14, 0
      %p74 = por %p72, %p73
      %p75 = scmp.ne.s32.totalorder %s64, %s67
      %p76 = scmp.eq.s32.totalorder %s19, 3
      %p77 = por %p75, %p76
      %p78 = scmp.ne.s32.totalorder %s67, %s68
      %p79 = scmp.eq.s32.totalorder %s19, 0
      %p80 = por %p78, %p79
      %p81 = scmp.ne.s32.totalorder %s67, %s68
      %p82 = scmp.eq.s32.totalorder %s20, 3
      %p83 = por %p81, %p82
      %p85 = scmp.ne.s32.totalorder %s68, %s84
      %p86 = scmp.eq.s32.totalorder %s20, 0
      %p87 = por %p85, %p86
      %s89 = sadd.s32 %s88, 1
      %p92 = scmp.eq.s32.totalorder %s14, 3
      %p93 = scmp.ne.s32.totalorder %s88, %s90
      %p94 = scmp.eq.s32.totalorder %s14, 0
      %p95 = por %p93, %p94
      %p96 = scmp.ne.s32.totalorder %s88, %s90
      %p97 = scmp.eq.s32.totalorder %s19, 3
      %p98 = por %p96, %p97
      %p99 = scmp.ne.s32.totalorder %s90, %s91
      %p100 = scmp.eq.s32.totalorder %s19, 0
      %p101 = por %p99, %p100
      %p102 = scmp.ne.s32.totalorder %s90, %s91
      %p103 = scmp.eq.s32.totalorder %s20, 3
      %p104 = por %p102, %p103
      %p106 = scmp.ne.s32.totalorder %s91, %s105
      %p107 = scmp.eq.s32.totalorder %s20, 0
      %p108 = por %p106, %p107
      %s110 = sadd.s32 %s109, 1
      %p113 = scmp.eq.s32.totalorder %s14, 3
      %p114 = scmp.ne.s32.totalorder %s109, %s111
      %p115 = scmp.eq.s32.totalorder %s14, 0
      %p116 = por %p114, %p115
      %p117 = scmp.ne.s32.totalorder %s109, %s111
      %p118 = scmp.eq.s32.totalorder %s19, 3
      %p119 = por %p117, %p118
      %p120 = scmp.ne.s32.totalorder %s111, %s112
      %p121 = scmp.eq.s32.totalorder %s19, 0
      %p122 = por %p120, %p121
      %p123 = scmp.ne.s32.totalorder %s111, %s112
      %p124 = scmp.eq.s32.totalorder %s20, 3
      %p125 = por %p123, %p124
      %p127 = scmp.ne.s32.totalorder %s112, %s126
      %p128 = scmp.eq.s32.totalorder %s20, 0
      %p129 = por %p127, %p128
      %s131 = sadd.s32 %s130, 1
      %p134 = scmp.eq.s32.totalorder %s14, 3
      %p135 = scmp.ne.s32.totalorder %s130, %s132
      %p136 = scmp.eq.s32.totalorder %s14, 0
      %p137 = por %p135, %p136
      %p138 = scmp.ne.s32.totalorder %s130, %s132
      %p139 = scmp.eq.s32.totalorder %s19, 3
      %p140 = por %p138, %p139
      %p141 = scmp.ne.s32.totalorder %s132, %s133
      %p142 = scmp.eq.s32.totalorder %s19, 0
      %p143 = por %p141, %p142
      %p144 = scmp.ne.s32.totalorder %s132, %s133
      %p145 = scmp.eq.s32.totalorder %s20, 3
      %p146 = por %p144, %p145
      %p148 = scmp.ne.s32.totalorder %s133, %s147
      %p149 = scmp.eq.s32.totalorder %s20, 0
      %p150 = por %p148, %p149
      %s151 = ssub.s32 %s21, %s33
      %p152 = scmp.eq.s32.totalorder %s151, 0
      %s154 = sadd.s32 %s153, 1
      %s155 = scalar_select %p152, %s153, %s154
      %p158 = pneg %p152
      %p159 = scmp.eq.s32.totalorder %s14, 3
      %p160 = por %p158, %p159
      %p161 = scmp.ne.s32.totalorder %s153, %s156
      %p162 = scmp.eq.s32.totalorder %s14, 0
      %p163 = por %p161, %p162
      %p164 = scmp.ne.s32.totalorder %s153, %s156
      %p165 = scmp.eq.s32.totalorder %s19, 3
      %p166 = por %p164, %p165
      %p167 = scmp.ne.s32.totalorder %s156, %s157
      %p168 = scmp.eq.s32.totalorder %s19, 0
      %p169 = por %p167, %p168
      %p170 = scmp.ne.s32.totalorder %s156, %s157
      %p171 = scmp.eq.s32.totalorder %s20, 3
      %p172 = por %p170, %p171
      %p174 = scmp.ne.s32.totalorder %s157, %s173
      %p175 = scmp.eq.s32.totalorder %s20, 0
      %p176 = por %p174, %p175
      %p177 = scmp.le.s32.totalorder 1, %s14
      %p178 = scmp.lt.s32.totalorder %s14, 5
      %p179 = pnand %p177, %p178
      %p180 = pneg %p179
      // Predicated region
      $region9: #{tpu_custom_call.1} parent=5 // pred_check
        _
      $region10: #{tpu_custom_call.1} parent=5 // pred_check_branch
        %182 = sbr.rel (%p179) target = $region12
      $region11: #{tpu_custom_call.1} parent=5 // pred_region
        %s183 = ssub.s32 %s14, 1
        // Predicated region
        $region13: #{tpu_custom_call.1} parent=11 // pred_check
          %p184 = pneg %p101
        $region14: #{tpu_custom_call.1} parent=11 // pred_check_branch
          %186 = sbr.rel (%p184) target = $region16
        $region15: #{tpu_custom_call.1} parent=11 // pred_region
          _
        $region16: #{tpu_custom_call.1} parent=11 // pred_fallthru
          _
        // Predicated region
        $region17: #{tpu_custom_call.1} parent=11 // pred_check
          %p187 = pneg %p122
        $region18: #{tpu_custom_call.1} parent=11 // pred_check_branch
          %189 = sbr.rel (%p187) target = $region20
        $region19: #{tpu_custom_call.1} parent=11 // pred_region
          _
        $region20: #{tpu_custom_call.1} parent=11 // pred_fallthru
          _
        // Predicated region
        $region21: #{tpu_custom_call.1} parent=11 // pred_check
          %p190 = pneg %p143
        $region22: #{tpu_custom_call.1} parent=11 // pred_check_branch
          %192 = sbr.rel (%p190) target = $region24
        $region23: #{tpu_custom_call.1} parent=11 // pred_region
          _
        $region24: #{tpu_custom_call.1} parent=11 // pred_fallthru
          _
      $region12: #{tpu_custom_call.1} parent=5 // pred_fallthru
        _
      %p193 = scmp.lt.s32.totalorder %s14, 4
      // Predicated region
      $region25: #{tpu_custom_call.1} parent=5 // pred_check
        %p194 = pneg %p193
      $region26: #{tpu_custom_call.1} parent=5 // pred_check_branch
        %196 = sbr.rel (%p194) target = $region28
      $region27: #{tpu_custom_call.1} parent=5 // pred_region
        // Predicated region
        $region29: #{tpu_custom_call.1} parent=27 // pred_check
          %p197 = pneg %p48
        $region30: #{tpu_custom_call.1} parent=27 // pred_check_branch
          %199 = sbr.rel (%p197) target = $region32
        $region31: #{tpu_custom_call.1} parent=27 // pred_region
          %s200 = sand.u32 %s38, 1
          %s201 = sand.u32 %s38, 1
          %s202 = smul.addr %s201, 1024
          %s203 = scalar_lea.vmem [#allocation3], %s202
          %s204 = smul.u32 8, %s21
          %s205 = smul.u32 16, %s22
          %s206 = smul.addr %s204, 32
          %s207 = sadd.s32 %s205, %s206
          %s208 = smul.addr %s207, 8
          %s209 = scalar_lea.vmem %s0, %s208
          // Predicated region
          $region33: #{tpu_custom_call.1} parent=31 // pred_check
            _
          $region34: #{tpu_custom_call.1} parent=31 // pred_check_branch
            %211 = sbr.rel (0) target = $region36
          $region35: #{tpu_custom_call.1} parent=31 // pred_region
            // Predicated region
            $region37: #{tpu_custom_call.1} parent=35 // pred_check
              _
            $region38: #{tpu_custom_call.1} parent=35 // pred_check_branch
              %213 = sbr.rel (0) target = $region40
            $region39: #{tpu_custom_call.1} parent=35 // pred_region
              // Predicated region
              $region52: #{tpu_custom_call.1} parent=39 // pred_check
                _
              $region53: #{tpu_custom_call.1} parent=39 // pred_check_branch
                %483 = sbr.rel (0) target = $region55
              $region54: #{tpu_custom_call.1} parent=39 // pred_region
                loop: start=0, step=1, limit=1
                $region56: #{tpu_custom_call.1} parent=54 // loop_pre_header
                  _
                $region57: #{tpu_custom_call.1} parent=54 // loop_header
                  %s485 = sphi 0, %s489
                  %p486 = scmp.ge.s32.totalorder %s485, 1
                  %s490 = sphi %s209, %s209
                  %s491 = sphi %s203, %s203
                $region58: #{tpu_custom_call.1} parent=54 // loop_header_branch
                  %488 = sbr.rel (%p486) target = $region62
                $region59: #{tpu_custom_call.1} parent=54 // loop_body
                  %v492 = vld [vmem:[%s490] sm:$0xff]
                  %493 = vst [vmem:[%s491] sm:$0xff] %v492
                  %v494 = vld [vmem:[%s490 + $0x8] sm:$0xff]
                  %495 = vst [vmem:[%s491 + $0x8] sm:$0xff] %v494
                  %v496 = vld [vmem:[%s490 + $0x10] sm:$0xff]
                  %497 = vst [vmem:[%s491 + $0x10] sm:$0xff] %v496
                  %v498 = vld [vmem:[%s490 + $0x18] sm:$0xff]
                  %499 = vst [vmem:[%s491 + $0x18] sm:$0xff] %v498
                  %v500 = vld [vmem:[%s490 + $0x20] sm:$0xff]
                  %501 = vst [vmem:[%s491 + $0x20] sm:$0xff] %v500
                  %v502 = vld [vmem:[%s490 + $0x28] sm:$0xff]
                  %503 = vst [vmem:[%s491 + $0x28] sm:$0xff] %v502
                  %v504 = vld [vmem:[%s490 + $0x30] sm:$0xff]
                  %505 = vst [vmem:[%s491 + $0x30] sm:$0xff] %v504
                  %v506 = vld [vmem:[%s490 + $0x38] sm:$0xff]
                  %507 = vst [vmem:[%s491 + $0x38] sm:$0xff] %v506
                  %v508 = vld [vmem:[%s490 + $0x40] sm:$0xff]
                  %509 = vst [vmem:[%s491 + $0x40] sm:$0xff] %v508
                  %v510 = vld [vmem:[%s490 + $0x48] sm:$0xff]
                  %511 = vst [vmem:[%s491 + $0x48] sm:$0xff] %v510
                  %v512 = vld [vmem:[%s490 + $0x50] sm:$0xff]
                  %513 = vst [vmem:[%s491 + $0x50] sm:$0xff] %v512
                  %v514 = vld [vmem:[%s490 + $0x58] sm:$0xff]
                  %515 = vst [vmem:[%s491 + $0x58] sm:$0xff] %v514
                  %v516 = vld [vmem:[%s490 + $0x60] sm:$0xff]
                  %517 = vst [vmem:[%s491 + $0x60] sm:$0xff] %v516
                  %v518 = vld [vmem:[%s490 + $0x68] sm:$0xff]
                  %519 = vst [vmem:[%s491 + $0x68] sm:$0xff] %v518
                  %v520 = vld [vmem:[%s490 + $0x70] sm:$0xff]
                  %521 = vst [vmem:[%s491 + $0x70] sm:$0xff] %v520
                  %v522 = vld [vmem:[%s490 + $0x78] sm:$0xff]
                  %523 = vst [vmem:[%s491 + $0x78] sm:$0xff] %v522
                  %v524 = vld [vmem:[%s490 + $0x100] sm:$0xff]
                  %525 = vst [vmem:[%s491 + $0x80] sm:$0xff] %v524
                  %v526 = vld [vmem:[%s490 + $0x108] sm:$0xff]
                  %527 = vst [vmem:[%s491 + $0x88] sm:$0xff] %v526
                  %v528 = vld [vmem:[%s490 + $0x110] sm:$0xff]
                  %529 = vst [vmem:[%s491 + $0x90] sm:$0xff] %v528
                  %v530 = vld [vmem:[%s490 + $0x118] sm:$0xff]
                  %531 = vst [vmem:[%s491 + $0x98] sm:$0xff] %v530
                  %v532 = vld [vmem:[%s490 + $0x120] sm:$0xff]
                  %533 = vst [vmem:[%s491 + $0xa0] sm:$0xff] %v532
                  %v534 = vld [vmem:[%s490 + $0x128] sm:$0xff]
                  %535 = vst [vmem:[%s491 + $0xa8] sm:$0xff] %v534
                  %v536 = vld [vmem:[%s490 + $0x130] sm:$0xff]
                  %537 = vst [vmem:[%s491 + $0xb0] sm:$0xff] %v536
                  %v538 = vld [vmem:[%s490 + $0x138] sm:$0xff]
                  %539 = vst [vmem:[%s491 + $0xb8] sm:$0xff] %v538
                  %v540 = vld [vmem:[%s490 + $0x140] sm:$0xff]
                  %541 = vst [vmem:[%s491 + $0xc0] sm:$0xff] %v540
                  %v542 = vld [vmem:[%s490 + $0x148] sm:$0xff]
                  %543 = vst [vmem:[%s491 + $0xc8] sm:$0xff] %v542
                  %v544 = vld [vmem:[%s490 + $0x150] sm:$0xff]
                  %545 = vst [vmem:[%s491 + $0xd0] sm:$0xff] %v544
                  %v546 = vld [vmem:[%s490 + $0x158] sm:$0xff]
                  %547 = vst [vmem:[%s491 + $0xd8] sm:$0xff] %v546
                  %v548 = vld [vmem:[%s490 + $0x160] sm:$0xff]
                  %549 = vst [vmem:[%s491 + $0xe0] sm:$0xff] %v548
                  %v550 = vld [vmem:[%s490 + $0x168] sm:$0xff]
                  %551 = vst [vmem:[%s491 + $0xe8] sm:$0xff] %v550
                  %v552 = vld [vmem:[%s490 + $0x170] sm:$0xff]
                  %553 = vst [vmem:[%s491 + $0xf0] sm:$0xff] %v552
                  %v554 = vld [vmem:[%s490 + $0x178] sm:$0xff]
                  %555 = vst [vmem:[%s491 + $0xf8] sm:$0xff] %v554
                  %v556 = vld [vmem:[%s490 + $0x200] sm:$0xff]
                  %557 = vst [vmem:[%s491 + $0x100] sm:$0xff] %v556
                  %v558 = vld [vmem:[%s490 + $0x208] sm:$0xff]
                  %559 = vst [vmem:[%s491 + $0x108] sm:$0xff] %v558
                  %v560 = vld [vmem:[%s490 + $0x210] sm:$0xff]
                  %561 = vst [vmem:[%s491 + $0x110] sm:$0xff] %v560
                  %v562 = vld [vmem:[%s490 + $0x218] sm:$0xff]
                  %563 = vst [vmem:[%s491 + $0x118] sm:$0xff] %v562
                  %v564 = vld [vmem:[%s490 + $0x220] sm:$0xff]
                  %565 = vst [vmem:[%s491 + $0x120] sm:$0xff] %v564
                  %v566 = vld [vmem:[%s490 + $0x228] sm:$0xff]
                  %567 = vst [vmem:[%s491 + $0x128] sm:$0xff] %v566
                  %v568 = vld [vmem:[%s490 + $0x230] sm:$0xff]
                  %569 = vst [vmem:[%s491 + $0x130] sm:$0xff] %v568
                  %v570 = vld [vmem:[%s490 + $0x238] sm:$0xff]
                  %571 = vst [vmem:[%s491 + $0x138] sm:$0xff] %v570
                  %v572 = vld [vmem:[%s490 + $0x240] sm:$0xff]
                  %573 = vst [vmem:[%s491 + $0x140] sm:$0xff] %v572
                  %v574 = vld [vmem:[%s490 + $0x248] sm:$0xff]
                  %575 = vst [vmem:[%s491 + $0x148] sm:$0xff] %v574
                  %v576 = vld [vmem:[%s490 + $0x250] sm:$0xff]
                  %577 = vst [vmem:[%s491 + $0x150] sm:$0xff] %v576
                  %v578 = vld [vmem:[%s490 + $0x258] sm:$0xff]
                  %579 = vst [vmem:[%s491 + $0x158] sm:$0xff] %v578
                  %v580 = vld [vmem:[%s490 + $0x260] sm:$0xff]
                  %581 = vst [vmem:[%s491 + $0x160] sm:$0xff] %v580
                  %v582 = vld [vmem:[%s490 + $0x268] sm:$0xff]
                  %583 = vst [vmem:[%s491 + $0x168] sm:$0xff] %v582
                  %v584 = vld [vmem:[%s490 + $0x270] sm:$0xff]
                  %585 = vst [vmem:[%s491 + $0x170] sm:$0xff] %v584
                  %v586 = vld [vmem:[%s490 + $0x278] sm:$0xff]
                  %587 = vst [vmem:[%s491 + $0x178] sm:$0xff] %v586
                  %v588 = vld [vmem:[%s490 + $0x300] sm:$0xff]
                  %589 = vst [vmem:[%s491 + $0x180] sm:$0xff] %v588
                  %v590 = vld [vmem:[%s490 + $0x308] sm:$0xff]
                  %591 = vst [vmem:[%s491 + $0x188] sm:$0xff] %v590
                  %v592 = vld [vmem:[%s490 + $0x310] sm:$0xff]
                  %593 = vst [vmem:[%s491 + $0x190] sm:$0xff] %v592
                  %v594 = vld [vmem:[%s490 + $0x318] sm:$0xff]
                  %595 = vst [vmem:[%s491 + $0x198] sm:$0xff] %v594
                  %v596 = vld [vmem:[%s490 + $0x320] sm:$0xff]
                  %597 = vst [vmem:[%s491 + $0x1a0] sm:$0xff] %v596
                  %v598 = vld [vmem:[%s490 + $0x328] sm:$0xff]
                  %599 = vst [vmem:[%s491 + $0x1a8] sm:$0xff] %v598
                  %v600 = vld [vmem:[%s490 + $0x330] sm:$0xff]
                  %601 = vst [vmem:[%s491 + $0x1b0] sm:$0xff] %v600
                  %v602 = vld [vmem:[%s490 + $0x338] sm:$0xff]
                  %603 = vst [vmem:[%s491 + $0x1b8] sm:$0xff] %v602
                  %v604 = vld [vmem:[%s490 + $0x340] sm:$0xff]
                  %605 = vst [vmem:[%s491 + $0x1c0] sm:$0xff] %v604
                  %v606 = vld [vmem:[%s490 + $0x348] sm:$0xff]
                  %607 = vst [vmem:[%s491 + $0x1c8] sm:$0xff] %v606
                  %v608 = vld [vmem:[%s490 + $0x350] sm:$0xff]
                  %609 = vst [vmem:[%s491 + $0x1d0] sm:$0xff] %v608
                  %v610 = vld [vmem:[%s490 + $0x358] sm:$0xff]
                  %611 = vst [vmem:[%s491 + $0x1d8] sm:$0xff] %v610
                  %v612 = vld [vmem:[%s490 + $0x360] sm:$0xff]
                  %613 = vst [vmem:[%s491 + $0x1e0] sm:$0xff] %v612
                  %v614 = vld [vmem:[%s490 + $0x368] sm:$0xff]
                  %615 = vst [vmem:[%s491 + $0x1e8] sm:$0xff] %v614
                  %v616 = vld [vmem:[%s490 + $0x370] sm:$0xff]
                  %617 = vst [vmem:[%s491 + $0x1f0] sm:$0xff] %v616
                  %v618 = vld [vmem:[%s490 + $0x378] sm:$0xff]
                  %619 = vst [vmem:[%s491 + $0x1f8] sm:$0xff] %v618
                  %v620 = vld [vmem:[%s490 + $0x400] sm:$0xff]
                  %621 = vst [vmem:[%s491 + $0x200] sm:$0xff] %v620
                  %v622 = vld [vmem:[%s490 + $0x408] sm:$0xff]
                  %623 = vst [vmem:[%s491 + $0x208] sm:$0xff] %v622
                  %v624 = vld [vmem:[%s490 + $0x410] sm:$0xff]
                  %625 = vst [vmem:[%s491 + $0x210] sm:$0xff] %v624
                  %v626 = vld [vmem:[%s490 + $0x418] sm:$0xff]
                  %627 = vst [vmem:[%s491 + $0x218] sm:$0xff] %v626
                  %v628 = vld [vmem:[%s490 + $0x420] sm:$0xff]
                  %629 = vst [vmem:[%s491 + $0x220] sm:$0xff] %v628
                  %v630 = vld [vmem:[%s490 + $0x428] sm:$0xff]
                  %631 = vst [vmem:[%s491 + $0x228] sm:$0xff] %v630
                  %v632 = vld [vmem:[%s490 + $0x430] sm:$0xff]
                  %633 = vst [vmem:[%s491 + $0x230] sm:$0xff] %v632
                  %v634 = vld [vmem:[%s490 + $0x438] sm:$0xff]
                  %635 = vst [vmem:[%s491 + $0x238] sm:$0xff] %v634
                  %v636 = vld [vmem:[%s490 + $0x440] sm:$0xff]
                  %637 = vst [vmem:[%s491 + $0x240] sm:$0xff] %v636
                  %v638 = vld [vmem:[%s490 + $0x448] sm:$0xff]
                  %639 = vst [vmem:[%s491 + $0x248] sm:$0xff] %v638
                  %v640 = vld [vmem:[%s490 + $0x450] sm:$0xff]
                  %641 = vst [vmem:[%s491 + $0x250] sm:$0xff] %v640
                  %v642 = vld [vmem:[%s490 + $0x458] sm:$0xff]
                  %643 = vst [vmem:[%s491 + $0x258] sm:$0xff] %v642
                  %v644 = vld [vmem:[%s490 + $0x460] sm:$0xff]
                  %645 = vst [vmem:[%s491 + $0x260] sm:$0xff] %v644
                  %v646 = vld [vmem:[%s490 + $0x468] sm:$0xff]
                  %647 = vst [vmem:[%s491 + $0x268] sm:$0xff] %v646
                  %v648 = vld [vmem:[%s490 + $0x470] sm:$0xff]
                  %649 = vst [vmem:[%s491 + $0x270] sm:$0xff] %v648
                  %v650 = vld [vmem:[%s490 + $0x478] sm:$0xff]
                  %651 = vst [vmem:[%s491 + $0x278] sm:$0xff] %v650
                  %v652 = vld [vmem:[%s490 + $0x500] sm:$0xff]
                  %653 = vst [vmem:[%s491 + $0x280] sm:$0xff] %v652
                  %v654 = vld [vmem:[%s490 + $0x508] sm:$0xff]
                  %655 = vst [vmem:[%s491 + $0x288] sm:$0xff] %v654
                  %v656 = vld [vmem:[%s490 + $0x510] sm:$0xff]
                  %657 = vst [vmem:[%s491 + $0x290] sm:$0xff] %v656
                  %v658 = vld [vmem:[%s490 + $0x518] sm:$0xff]
                  %659 = vst [vmem:[%s491 + $0x298] sm:$0xff] %v658
                  %v660 = vld [vmem:[%s490 + $0x520] sm:$0xff]
                  %661 = vst [vmem:[%s491 + $0x2a0] sm:$0xff] %v660
                  %v662 = vld [vmem:[%s490 + $0x528] sm:$0xff]
                  %663 = vst [vmem:[%s491 + $0x2a8] sm:$0xff] %v662
                  %v664 = vld [vmem:[%s490 + $0x530] sm:$0xff]
                  %665 = vst [vmem:[%s491 + $0x2b0] sm:$0xff] %v664
                  %v666 = vld [vmem:[%s490 + $0x538] sm:$0xff]
                  %667 = vst [vmem:[%s491 + $0x2b8] sm:$0xff] %v666
                  %v668 = vld [vmem:[%s490 + $0x540] sm:$0xff]
                  %669 = vst [vmem:[%s491 + $0x2c0] sm:$0xff] %v668
                  %v670 = vld [vmem:[%s490 + $0x548] sm:$0xff]
                  %671 = vst [vmem:[%s491 + $0x2c8] sm:$0xff] %v670
                  %v672 = vld [vmem:[%s490 + $0x550] sm:$0xff]
                  %673 = vst [vmem:[%s491 + $0x2d0] sm:$0xff] %v672
                  %v674 = vld [vmem:[%s490 + $0x558] sm:$0xff]
                  %675 = vst [vmem:[%s491 + $0x2d8] sm:$0xff] %v674
                  %v676 = vld [vmem:[%s490 + $0x560] sm:$0xff]
                  %677 = vst [vmem:[%s491 + $0x2e0] sm:$0xff] %v676
                  %v678 = vld [vmem:[%s490 + $0x568] sm:$0xff]
                  %679 = vst [vmem:[%s491 + $0x2e8] sm:$0xff] %v678
                  %v680 = vld [vmem:[%s490 + $0x570] sm:$0xff]
                  %681 = vst [vmem:[%s491 + $0x2f0] sm:$0xff] %v680
                  %v682 = vld [vmem:[%s490 + $0x578] sm:$0xff]
                  %683 = vst [vmem:[%s491 + $0x2f8] sm:$0xff] %v682
                  %v684 = vld [vmem:[%s490 + $0x600] sm:$0xff]
                  %685 = vst [vmem:[%s491 + $0x300] sm:$0xff] %v684
                  %v686 = vld [vmem:[%s490 + $0x608] sm:$0xff]
                  %687 = vst [vmem:[%s491 + $0x308] sm:$0xff] %v686
                  %v688 = vld [vmem:[%s490 + $0x610] sm:$0xff]
                  %689 = vst [vmem:[%s491 + $0x310] sm:$0xff] %v688
                  %v690 = vld [vmem:[%s490 + $0x618] sm:$0xff]
                  %691 = vst [vmem:[%s491 + $0x318] sm:$0xff] %v690
                  %v692 = vld [vmem:[%s490 + $0x620] sm:$0xff]
                  %693 = vst [vmem:[%s491 + $0x320] sm:$0xff] %v692
                  %v694 = vld [vmem:[%s490 + $0x628] sm:$0xff]
                  %695 = vst [vmem:[%s491 + $0x328] sm:$0xff] %v694
                  %v696 = vld [vmem:[%s490 + $0x630] sm:$0xff]
                  %697 = vst [vmem:[%s491 + $0x330] sm:$0xff] %v696
                  %v698 = vld [vmem:[%s490 + $0x638] sm:$0xff]
                  %699 = vst [vmem:[%s491 + $0x338] sm:$0xff] %v698
                  %v700 = vld [vmem:[%s490 + $0x640] sm:$0xff]
                  %701 = vst [vmem:[%s491 + $0x340] sm:$0xff] %v700
                  %v702 = vld [vmem:[%s490 + $0x648] sm:$0xff]
                  %703 = vst [vmem:[%s491 + $0x348] sm:$0xff] %v702
                  %v704 = vld [vmem:[%s490 + $0x650] sm:$0xff]
                  %705 = vst [vmem:[%s491 + $0x350] sm:$0xff] %v704
                  %v706 = vld [vmem:[%s490 + $0x658] sm:$0xff]
                  %707 = vst [vmem:[%s491 + $0x358] sm:$0xff] %v706
                  %v708 = vld [vmem:[%s490 + $0x660] sm:$0xff]
                  %709 = vst [vmem:[%s491 + $0x360] sm:$0xff] %v708
                  %v710 = vld [vmem:[%s490 + $0x668] sm:$0xff]
                  %711 = vst [vmem:[%s491 + $0x368] sm:$0xff] %v710
                  %v712 = vld [vmem:[%s490 + $0x670] sm:$0xff]
                  %713 = vst [vmem:[%s491 + $0x370] sm:$0xff] %v712
                  %v714 = vld [vmem:[%s490 + $0x678] sm:$0xff]
                  %715 = vst [vmem:[%s491 + $0x378] sm:$0xff] %v714
                  %v716 = vld [vmem:[%s490 + $0x700] sm:$0xff]
                  %717 = vst [vmem:[%s491 + $0x380] sm:$0xff] %v716
                  %v718 = vld [vmem:[%s490 + $0x708] sm:$0xff]
                  %719 = vst [vmem:[%s491 + $0x388] sm:$0xff] %v718
                  %v720 = vld [vmem:[%s490 + $0x710] sm:$0xff]
                  %721 = vst [vmem:[%s491 + $0x390] sm:$0xff] %v720
                  %v722 = vld [vmem:[%s490 + $0x718] sm:$0xff]
                  %723 = vst [vmem:[%s491 + $0x398] sm:$0xff] %v722
                  %v724 = vld [vmem:[%s490 + $0x720] sm:$0xff]
                  %725 = vst [vmem:[%s491 + $0x3a0] sm:$0xff] %v724
                  %v726 = vld [vmem:[%s490 + $0x728] sm:$0xff]
                  %727 = vst [vmem:[%s491 + $0x3a8] sm:$0xff] %v726
                  %v728 = vld [vmem:[%s490 + $0x730] sm:$0xff]
                  %729 = vst [vmem:[%s491 + $0x3b0] sm:$0xff] %v728
                  %v730 = vld [vmem:[%s490 + $0x738] sm:$0xff]
                  %731 = vst [vmem:[%s491 + $0x3b8] sm:$0xff] %v730
                  %v732 = vld [vmem:[%s490 + $0x740] sm:$0xff]
                  %733 = vst [vmem:[%s491 + $0x3c0] sm:$0xff] %v732
                  %v734 = vld [vmem:[%s490 + $0x748] sm:$0xff]
                  %735 = vst [vmem:[%s491 + $0x3c8] sm:$0xff] %v734
                  %v736 = vld [vmem:[%s490 + $0x750] sm:$0xff]
                  %737 = vst [vmem:[%s491 + $0x3d0] sm:$0xff] %v736
                  %v738 = vld [vmem:[%s490 + $0x758] sm:$0xff]
                  %739 = vst [vmem:[%s491 + $0x3d8] sm:$0xff] %v738
                  %v740 = vld [vmem:[%s490 + $0x760] sm:$0xff]
                  %741 = vst [vmem:[%s491 + $0x3e0] sm:$0xff] %v740
                  %v742 = vld [vmem:[%s490 + $0x768] sm:$0xff]
                  %743 = vst [vmem:[%s491 + $0x3e8] sm:$0xff] %v742
                  %v744 = vld [vmem:[%s490 + $0x770] sm:$0xff]
                  %745 = vst [vmem:[%s491 + $0x3f0] sm:$0xff] %v744
                  %v746 = vld [vmem:[%s490 + $0x778] sm:$0xff]
                  %747 = vst [vmem:[%s491 + $0x3f8] sm:$0xff] %v746
                $region60: #{tpu_custom_call.1} parent=54 // loop_footer
                  %s489 = sadd.s32 1, %s485
                $region61: #{tpu_custom_call.1} parent=54 // loop_footer_branch
                  %484 = sbr.rel target = $region57
                $region62: #{tpu_custom_call.1} parent=54 // loop_exit
                  _
              $region55: #{tpu_custom_call.1} parent=39 // pred_fallthru
                _
              // Predicated region
              $region63: #{tpu_custom_call.1} parent=39 // pred_check
                _
              $region64: #{tpu_custom_call.1} parent=39 // pred_check_branch
                %749 = sbr.rel target = $region66
              $region65: #{tpu_custom_call.1} parent=39 // pred_region
                _
              $region66: #{tpu_custom_call.1} parent=39 // pred_fallthru
                _
            $region40: #{tpu_custom_call.1} parent=35 // pred_fallthru
              _
            // Predicated region
            $region41: #{tpu_custom_call.1} parent=35 // pred_check
              _
            $region42: #{tpu_custom_call.1} parent=35 // pred_check_branch
              %215 = sbr.rel target = $region44
            $region43: #{tpu_custom_call.1} parent=35 // pred_region
              %s217 = ssub.s32 256, 1
              loop: start=0, step=1, limit=1
              $region45: #{tpu_custom_call.1} parent=43 // loop_pre_header
                _
              $region46: #{tpu_custom_call.1} parent=43 // loop_header
                %s219 = sphi 0, %s223
                %p220 = scmp.ge.s32.totalorder %s219, 1
                %s224 = sphi %s209, %s209
                %s225 = sphi %s203, %s203
              $region47: #{tpu_custom_call.1} parent=43 // loop_header_branch
                %222 = sbr.rel (%p220) target = $region51
              $region48: #{tpu_custom_call.1} parent=43 // loop_body
                %v226 = vld [vmem:[%s224] sm:%s217]
                %227 = vst [vmem:[%s225] sm:%s217] %v226
                %v228 = vld [vmem:[%s224 + $0x8] sm:%s217]
                %229 = vst [vmem:[%s225 + $0x8] sm:%s217] %v228
                %v230 = vld [vmem:[%s224 + $0x10] sm:%s217]
                %231 = vst [vmem:[%s225 + $0x10] sm:%s217] %v230
                %v232 = vld [vmem:[%s224 + $0x18] sm:%s217]
                %233 = vst [vmem:[%s225 + $0x18] sm:%s217] %v232
                %v234 = vld [vmem:[%s224 + $0x20] sm:%s217]
                %235 = vst [vmem:[%s225 + $0x20] sm:%s217] %v234
                %v236 = vld [vmem:[%s224 + $0x28] sm:%s217]
                %237 = vst [vmem:[%s225 + $0x28] sm:%s217] %v236
                %v238 = vld [vmem:[%s224 + $0x30] sm:%s217]
                %239 = vst [vmem:[%s225 + $0x30] sm:%s217] %v238
                %v240 = vld [vmem:[%s224 + $0x38] sm:%s217]
                %241 = vst [vmem:[%s225 + $0x38] sm:%s217] %v240
                %v242 = vld [vmem:[%s224 + $0x40] sm:%s217]
                %243 = vst [vmem:[%s225 + $0x40] sm:%s217] %v242
                %v244 = vld [vmem:[%s224 + $0x48] sm:%s217]
                %245 = vst [vmem:[%s225 + $0x48] sm:%s217] %v244
                %v246 = vld [vmem:[%s224 + $0x50] sm:%s217]
                %247 = vst [vmem:[%s225 + $0x50] sm:%s217] %v246
                %v248 = vld [vmem:[%s224 + $0x58] sm:%s217]
                %249 = vst [vmem:[%s225 + $0x58] sm:%s217] %v248
                %v250 = vld [vmem:[%s224 + $0x60] sm:%s217]
                %251 = vst [vmem:[%s225 + $0x60] sm:%s217] %v250
                %v252 = vld [vmem:[%s224 + $0x68] sm:%s217]
                %253 = vst [vmem:[%s225 + $0x68] sm:%s217] %v252
                %v254 = vld [vmem:[%s224 + $0x70] sm:%s217]
                %255 = vst [vmem:[%s225 + $0x70] sm:%s217] %v254
                %v256 = vld [vmem:[%s224 + $0x78] sm:%s217]
                %257 = vst [vmem:[%s225 + $0x78] sm:%s217] %v256
                %v258 = vld [vmem:[%s224 + $0x100] sm:%s217]
                %259 = vst [vmem:[%s225 + $0x80] sm:%s217] %v258
                %v260 = vld [vmem:[%s224 + $0x108] sm:%s217]
                %261 = vst [vmem:[%s225 + $0x88] sm:%s217] %v260
                %v262 = vld [vmem:[%s224 + $0x110] sm:%s217]
                %263 = vst [vmem:[%s225 + $0x90] sm:%s217] %v262
                %v264 = vld [vmem:[%s224 + $0x118] sm:%s217]
                %265 = vst [vmem:[%s225 + $0x98] sm:%s217] %v264
                %v266 = vld [vmem:[%s224 + $0x120] sm:%s217]
                %267 = vst [vmem:[%s225 + $0xa0] sm:%s217] %v266
                %v268 = vld [vmem:[%s224 + $0x128] sm:%s217]
                %269 = vst [vmem:[%s225 + $0xa8] sm:%s217] %v268
                %v270 = vld [vmem:[%s224 + $0x130] sm:%s217]
                %271 = vst [vmem:[%s225 + $0xb0] sm:%s217] %v270
                %v272 = vld [vmem:[%s224 + $0x138] sm:%s217]
                %273 = vst [vmem:[%s225 + $0xb8] sm:%s217] %v272
                %v274 = vld [vmem:[%s224 + $0x140] sm:%s217]
                %275 = vst [vmem:[%s225 + $0xc0] sm:%s217] %v274
                %v276 = vld [vmem:[%s224 + $0x148] sm:%s217]
                %277 = vst [vmem:[%s225 + $0xc8] sm:%s217] %v276
                %v278 = vld [vmem:[%s224 + $0x150] sm:%s217]
                %279 = vst [vmem:[%s225 + $0xd0] sm:%s217] %v278
                %v280 = vld [vmem:[%s224 + $0x158] sm:%s217]
                %281 = vst [vmem:[%s225 + $0xd8] sm:%s217] %v280
                %v282 = vld [vmem:[%s224 + $0x160] sm:%s217]
                %283 = vst [vmem:[%s225 + $0xe0] sm:%s217] %v282
                %v284 = vld [vmem:[%s224 + $0x168] sm:%s217]
                %285 = vst [vmem:[%s225 + $0xe8] sm:%s217] %v284
                %v286 = vld [vmem:[%s224 + $0x170] sm:%s217]
                %287 = vst [vmem:[%s225 + $0xf0] sm:%s217] %v286
                %v288 = vld [vmem:[%s224 + $0x178] sm:%s217]
                %289 = vst [vmem:[%s225 + $0xf8] sm:%s217] %v288
                %v290 = vld [vmem:[%s224 + $0x200] sm:%s217]
                %291 = vst [vmem:[%s225 + $0x100] sm:%s217] %v290
                %v292 = vld [vmem:[%s224 + $0x208] sm:%s217]
                %293 = vst [vmem:[%s225 + $0x108] sm:%s217] %v292
                %v294 = vld [vmem:[%s224 + $0x210] sm:%s217]
                %295 = vst [vmem:[%s225 + $0x110] sm:%s217] %v294
                %v296 = vld [vmem:[%s224 + $0x218] sm:%s217]
                %297 = vst [vmem:[%s225 + $0x118] sm:%s217] %v296
                %v298 = vld [vmem:[%s224 + $0x220] sm:%s217]
                %299 = vst [vmem:[%s225 + $0x120] sm:%s217] %v298
                %v300 = vld [vmem:[%s224 + $0x228] sm:%s217]
                %301 = vst [vmem:[%s225 + $0x128] sm:%s217] %v300
                %v302 = vld [vmem:[%s224 + $0x230] sm:%s217]
                %303 = vst [vmem:[%s225 + $0x130] sm:%s217] %v302
                %v304 = vld [vmem:[%s224 + $0x238] sm:%s217]
                %305 = vst [vmem:[%s225 + $0x138] sm:%s217] %v304
                %v306 = vld [vmem:[%s224 + $0x240] sm:%s217]
                %307 = vst [vmem:[%s225 + $0x140] sm:%s217] %v306
                %v308 = vld [vmem:[%s224 + $0x248] sm:%s217]
                %309 = vst [vmem:[%s225 + $0x148] sm:%s217] %v308
                %v310 = vld [vmem:[%s224 + $0x250] sm:%s217]
                %311 = vst [vmem:[%s225 + $0x150] sm:%s217] %v310
                %v312 = vld [vmem:[%s224 + $0x258] sm:%s217]
                %313 = vst [vmem:[%s225 + $0x158] sm:%s217] %v312
                %v314 = vld [vmem:[%s224 + $0x260] sm:%s217]
                %315 = vst [vmem:[%s225 + $0x160] sm:%s217] %v314
                %v316 = vld [vmem:[%s224 + $0x268] sm:%s217]
                %317 = vst [vmem:[%s225 + $0x168] sm:%s217] %v316
                %v318 = vld [vmem:[%s224 + $0x270] sm:%s217]
                %319 = vst [vmem:[%s225 + $0x170] sm:%s217] %v318
                %v320 = vld [vmem:[%s224 + $0x278] sm:%s217]
                %321 = vst [vmem:[%s225 + $0x178] sm:%s217] %v320
                %v322 = vld [vmem:[%s224 + $0x300] sm:%s217]
                %323 = vst [vmem:[%s225 + $0x180] sm:%s217] %v322
                %v324 = vld [vmem:[%s224 + $0x308] sm:%s217]
                %325 = vst [vmem:[%s225 + $0x188] sm:%s217] %v324
                %v326 = vld [vmem:[%s224 + $0x310] sm:%s217]
                %327 = vst [vmem:[%s225 + $0x190] sm:%s217] %v326
                %v328 = vld [vmem:[%s224 + $0x318] sm:%s217]
                %329 = vst [vmem:[%s225 + $0x198] sm:%s217] %v328
                %v330 = vld [vmem:[%s224 + $0x320] sm:%s217]
                %331 = vst [vmem:[%s225 + $0x1a0] sm:%s217] %v330
                %v332 = vld [vmem:[%s224 + $0x328] sm:%s217]
                %333 = vst [vmem:[%s225 + $0x1a8] sm:%s217] %v332
                %v334 = vld [vmem:[%s224 + $0x330] sm:%s217]
                %335 = vst [vmem:[%s225 + $0x1b0] sm:%s217] %v334
                %v336 = vld [vmem:[%s224 + $0x338] sm:%s217]
                %337 = vst [vmem:[%s225 + $0x1b8] sm:%s217] %v336
                %v338 = vld [vmem:[%s224 + $0x340] sm:%s217]
                %339 = vst [vmem:[%s225 + $0x1c0] sm:%s217] %v338
                %v340 = vld [vmem:[%s224 + $0x348] sm:%s217]
                %341 = vst [vmem:[%s225 + $0x1c8] sm:%s217] %v340
                %v342 = vld [vmem:[%s224 + $0x350] sm:%s217]
                %343 = vst [vmem:[%s225 + $0x1d0] sm:%s217] %v342
                %v344 = vld [vmem:[%s224 + $0x358] sm:%s217]
                %345 = vst [vmem:[%s225 + $0x1d8] sm:%s217] %v344
                %v346 = vld [vmem:[%s224 + $0x360] sm:%s217]
                %347 = vst [vmem:[%s225 + $0x1e0] sm:%s217] %v346
                %v348 = vld [vmem:[%s224 + $0x368] sm:%s217]
                %349 = vst [vmem:[%s225 + $0x1e8] sm:%s217] %v348
                %v350 = vld [vmem:[%s224 + $0x370] sm:%s217]
                %351 = vst [vmem:[%s225 + $0x1f0] sm:%s217] %v350
                %v352 = vld [vmem:[%s224 + $0x378] sm:%s217]
                %353 = vst [vmem:[%s225 + $0x1f8] sm:%s217] %v352
                %v354 = vld [vmem:[%s224 + $0x400] sm:%s217]
                %355 = vst [vmem:[%s225 + $0x200] sm:%s217] %v354
                %v356 = vld [vmem:[%s224 + $0x408] sm:%s217]
                %357 = vst [vmem:[%s225 + $0x208] sm:%s217] %v356
                %v358 = vld [vmem:[%s224 + $0x410] sm:%s217]
                %359 = vst [vmem:[%s225 + $0x210] sm:%s217] %v358
                %v360 = vld [vmem:[%s224 + $0x418] sm:%s217]
                %361 = vst [vmem:[%s225 + $0x218] sm:%s217] %v360
                %v362 = vld [vmem:[%s224 + $0x420] sm:%s217]
                %363 = vst [vmem:[%s225 + $0x220] sm:%s217] %v362
                %v364 = vld [vmem:[%s224 + $0x428] sm:%s217]
                %365 = vst [vmem:[%s225 + $0x228] sm:%s217] %v364
                %v366 = vld [vmem:[%s224 + $0x430] sm:%s217]
                %367 = vst [vmem:[%s225 + $0x230] sm:%s217] %v366
                %v368 = vld [vmem:[%s224 + $0x438] sm:%s217]
                %369 = vst [vmem:[%s225 + $0x238] sm:%s217] %v368
                %v370 = vld [vmem:[%s224 + $0x440] sm:%s217]
                %371 = vst [vmem:[%s225 + $0x240] sm:%s217] %v370
                %v372 = vld [vmem:[%s224 + $0x448] sm:%s217]
                %373 = vst [vmem:[%s225 + $0x248] sm:%s217] %v372
                %v374 = vld [vmem:[%s224 + $0x450] sm:%s217]
                %375 = vst [vmem:[%s225 + $0x250] sm:%s217] %v374
                %v376 = vld [vmem:[%s224 + $0x458] sm:%s217]
                %377 = vst [vmem:[%s225 + $0x258] sm:%s217] %v376
                %v378 = vld [vmem:[%s224 + $0x460] sm:%s217]
                %379 = vst [vmem:[%s225 + $0x260] sm:%s217] %v378
                %v380 = vld [vmem:[%s224 + $0x468] sm:%s217]
                %381 = vst [vmem:[%s225 + $0x268] sm:%s217] %v380
                %v382 = vld [vmem:[%s224 + $0x470] sm:%s217]
                %383 = vst [vmem:[%s225 + $0x270] sm:%s217] %v382
                %v384 = vld [vmem:[%s224 + $0x478] sm:%s217]
                %385 = vst [vmem:[%s225 + $0x278] sm:%s217] %v384
                %v386 = vld [vmem:[%s224 + $0x500] sm:%s217]
                %387 = vst [vmem:[%s225 + $0x280] sm:%s217] %v386
                %v388 = vld [vmem:[%s224 + $0x508] sm:%s217]
                %389 = vst [vmem:[%s225 + $0x288] sm:%s217] %v388
                %v390 = vld [vmem:[%s224 + $0x510] sm:%s217]
                %391 = vst [vmem:[%s225 + $0x290] sm:%s217] %v390
                %v392 = vld [vmem:[%s224 + $0x518] sm:%s217]
                %393 = vst [vmem:[%s225 + $0x298] sm:%s217] %v392
                %v394 = vld [vmem:[%s224 + $0x520] sm:%s217]
                %395 = vst [vmem:[%s225 + $0x2a0] sm:%s217] %v394
                %v396 = vld [vmem:[%s224 + $0x528] sm:%s217]
                %397 = vst [vmem:[%s225 + $0x2a8] sm:%s217] %v396
                %v398 = vld [vmem:[%s224 + $0x530] sm:%s217]
                %399 = vst [vmem:[%s225 + $0x2b0] sm:%s217] %v398
                %v400 = vld [vmem:[%s224 + $0x538] sm:%s217]
                %401 = vst [vmem:[%s225 + $0x2b8] sm:%s217] %v400
                %v402 = vld [vmem:[%s224 + $0x540] sm:%s217]
                %403 = vst [vmem:[%s225 + $0x2c0] sm:%s217] %v402
                %v404 = vld [vmem:[%s224 + $0x548] sm:%s217]
                %405 = vst [vmem:[%s225 + $0x2c8] sm:%s217] %v404
                %v406 = vld [vmem:[%s224 + $0x550] sm:%s217]
                %407 = vst [vmem:[%s225 + $0x2d0] sm:%s217] %v406
                %v408 = vld [vmem:[%s224 + $0x558] sm:%s217]
                %409 = vst [vmem:[%s225 + $0x2d8] sm:%s217] %v408
                %v410 = vld [vmem:[%s224 + $0x560] sm:%s217]
                %411 = vst [vmem:[%s225 + $0x2e0] sm:%s217] %v410
                %v412 = vld [vmem:[%s224 + $0x568] sm:%s217]
                %413 = vst [vmem:[%s225 + $0x2e8] sm:%s217] %v412
                %v414 = vld [vmem:[%s224 + $0x570] sm:%s217]
                %415 = vst [vmem:[%s225 + $0x2f0] sm:%s217] %v414
                %v416 = vld [vmem:[%s224 + $0x578] sm:%s217]
                %417 = vst [vmem:[%s225 + $0x2f8] sm:%s217] %v416
                %v418 = vld [vmem:[%s224 + $0x600] sm:%s217]
                %419 = vst [vmem:[%s225 + $0x300] sm:%s217] %v418
                %v420 = vld [vmem:[%s224 + $0x608] sm:%s217]
                %421 = vst [vmem:[%s225 + $0x308] sm:%s217] %v420
                %v422 = vld [vmem:[%s224 + $0x610] sm:%s217]
                %423 = vst [vmem:[%s225 + $0x310] sm:%s217] %v422
                %v424 = vld [vmem:[%s224 + $0x618] sm:%s217]
                %425 = vst [vmem:[%s225 + $0x318] sm:%s217] %v424
                %v426 = vld [vmem:[%s224 + $0x620] sm:%s217]
                %427 = vst [vmem:[%s225 + $0x320] sm:%s217] %v426
                %v428 = vld [vmem:[%s224 + $0x628] sm:%s217]
                %429 = vst [vmem:[%s225 + $0x328] sm:%s217] %v428
                %v430 = vld [vmem:[%s224 + $0x630] sm:%s217]
                %431 = vst [vmem:[%s225 + $0x330] sm:%s217] %v430
                %v432 = vld [vmem:[%s224 + $0x638] sm:%s217]
                %433 = vst [vmem:[%s225 + $0x338] sm:%s217] %v432
                %v434 = vld [vmem:[%s224 + $0x640] sm:%s217]
                %435 = vst [vmem:[%s225 + $0x340] sm:%s217] %v434
                %v436 = vld [vmem:[%s224 + $0x648] sm:%s217]
                %437 = vst [vmem:[%s225 + $0x348] sm:%s217] %v436
                %v438 = vld [vmem:[%s224 + $0x650] sm:%s217]
                %439 = vst [vmem:[%s225 + $0x350] sm:%s217] %v438
                %v440 = vld [vmem:[%s224 + $0x658] sm:%s217]
                %441 = vst [vmem:[%s225 + $0x358] sm:%s217] %v440
                %v442 = vld [vmem:[%s224 + $0x660] sm:%s217]
                %443 = vst [vmem:[%s225 + $0x360] sm:%s217] %v442
                %v444 = vld [vmem:[%s224 + $0x668] sm:%s217]
                %445 = vst [vmem:[%s225 + $0x368] sm:%s217] %v444
                %v446 = vld [vmem:[%s224 + $0x670] sm:%s217]
                %447 = vst [vmem:[%s225 + $0x370] sm:%s217] %v446
                %v448 = vld [vmem:[%s224 + $0x678] sm:%s217]
                %449 = vst [vmem:[%s225 + $0x378] sm:%s217] %v448
                %v450 = vld [vmem:[%s224 + $0x700] sm:%s217]
                %451 = vst [vmem:[%s225 + $0x380] sm:%s217] %v450
                %v452 = vld [vmem:[%s224 + $0x708] sm:%s217]
                %453 = vst [vmem:[%s225 + $0x388] sm:%s217] %v452
                %v454 = vld [vmem:[%s224 + $0x710] sm:%s217]
                %455 = vst [vmem:[%s225 + $0x390] sm:%s217] %v454
                %v456 = vld [vmem:[%s224 + $0x718] sm:%s217]
                %457 = vst [vmem:[%s225 + $0x398] sm:%s217] %v456
                %v458 = vld [vmem:[%s224 + $0x720] sm:%s217]
                %459 = vst [vmem:[%s225 + $0x3a0] sm:%s217] %v458
                %v460 = vld [vmem:[%s224 + $0x728] sm:%s217]
                %461 = vst [vmem:[%s225 + $0x3a8] sm:%s217] %v460
                %v462 = vld [vmem:[%s224 + $0x730] sm:%s217]
                %463 = vst [vmem:[%s225 + $0x3b0] sm:%s217] %v462
                %v464 = vld [vmem:[%s224 + $0x738] sm:%s217]
                %465 = vst [vmem:[%s225 + $0x3b8] sm:%s217] %v464
                %v466 = vld [vmem:[%s224 + $0x740] sm:%s217]
                %467 = vst [vmem:[%s225 + $0x3c0] sm:%s217] %v466
                %v468 = vld [vmem:[%s224 + $0x748] sm:%s217]
                %469 = vst [vmem:[%s225 + $0x3c8] sm:%s217] %v468
                %v470 = vld [vmem:[%s224 + $0x750] sm:%s217]
                %471 = vst [vmem:[%s225 + $0x3d0] sm:%s217] %v470
                %v472 = vld [vmem:[%s224 + $0x758] sm:%s217]
                %473 = vst [vmem:[%s225 + $0x3d8] sm:%s217] %v472
                %v474 = vld [vmem:[%s224 + $0x760] sm:%s217]
                %475 = vst [vmem:[%s225 + $0x3e0] sm:%s217] %v474
                %v476 = vld [vmem:[%s224 + $0x768] sm:%s217]
                %477 = vst [vmem:[%s225 + $0x3e8] sm:%s217] %v476
                %v478 = vld [vmem:[%s224 + $0x770] sm:%s217]
                %479 = vst [vmem:[%s225 + $0x3f0] sm:%s217] %v478
                %v480 = vld [vmem:[%s224 + $0x778] sm:%s217]
                %481 = vst [vmem:[%s225 + $0x3f8] sm:%s217] %v480
              $region49: #{tpu_custom_call.1} parent=43 // loop_footer
                %s223 = sadd.s32 1, %s219
              $region50: #{tpu_custom_call.1} parent=43 // loop_footer_branch
                %218 = sbr.rel target = $region46
              $region51: #{tpu_custom_call.1} parent=43 // loop_exit
                _
            $region44: #{tpu_custom_call.1} parent=35 // pred_fallthru
              _
          $region36: #{tpu_custom_call.1} parent=31 // pred_fallthru
            _
          %750 = vnop
        $region32: #{tpu_custom_call.1} parent=27 // pred_fallthru
          _
        // Predicated region
        $region67: #{tpu_custom_call.1} parent=27 // pred_check
          %p751 = pneg %p74
        $region68: #{tpu_custom_call.1} parent=27 // pred_check_branch
          %753 = sbr.rel (%p751) target = $region70
        $region69: #{tpu_custom_call.1} parent=27 // pred_region
          %p754 = scmp.lt.s32.totalorder %s21, 1
          %s755 = scalar_select %p754, %s21, 1
          %s756 = smul.addr %s755, 8
          %s757 = scalar_lea.vmem %s1, %s756
        $region70: #{tpu_custom_call.1} parent=27 // pred_fallthru
          _
      $region28: #{tpu_custom_call.1} parent=5 // pred_fallthru
        _
      %p758 = scmp.le.s32.totalorder 1, %s14
      %p759 = scmp.lt.s32.totalorder %s14, 5
      %p760 = pnand %p758, %p759
      %p761 = pneg %p760
      // Predicated region
      $region71: #{tpu_custom_call.1} parent=5 // pred_check
        _
      $region72: #{tpu_custom_call.1} parent=5 // pred_check_branch
        %763 = sbr.rel (%p760) target = $region74
      $region73: #{tpu_custom_call.1} parent=5 // pred_region
        %s764 = ssub.s32 %s14, 1
        %s765 = sand.u32 %s41, 1
        %s766 = sand.u32 %s41, 1
        %s767 = smul.addr %s766, 1024
        %s768 = scalar_lea.vmem [#allocation3], %s767
        // Predicated region
        $region75: #{tpu_custom_call.1} parent=73 // pred_check
          %p769 = pneg %p54
        $region76: #{tpu_custom_call.1} parent=73 // pred_check_branch
          %771 = sbr.rel (%p769) target = $region78
        $region77: #{tpu_custom_call.1} parent=73 // pred_region
          _
        $region78: #{tpu_custom_call.1} parent=73 // pred_fallthru
          _
        %s772 = sand.u32 %s41, 1
        %s773 = sand.u32 %s41, 1
        %s774 = smul.addr %s773, 1024
        %s775 = scalar_lea.vmem [#allocation3], %s774
        %p776 = pneg %p54
        %p777 = pneg %p51
        %p778 = scmp.lt.s32.totalorder %s23, 1
        %s779 = scalar_select %p778, %s23, 1
        %s780 = smul.addr %s779, 8
        %s781 = scalar_lea.vmem %s1, %s780
        %p782 = pneg %p80
        %p783 = pneg %p77
        %p784 = pneg %p101
        %p785 = pneg %p98
        %p786 = pneg %p122
        %p787 = pneg %p119
        %p788 = pneg %p143
        %p789 = pneg %p140
        %p790 = pneg %p169
        %p791 = pneg %p166
        %s792 = sand.u32 %s156, 1
        %s793 = scalar_lea.sflag [#allocation5], %s792
        %s794 = sand.u32 %s156, 1
        %s795 = smul.addr %s794, 8
        %s796 = scalar_lea.vmem [#allocation4], %s795
        %s797 = smul.u32 8, %s23
        %s798 = smul.u32 16, %s24
        %p799 = scmp.lt.s32.totalorder %s23, 1
        %s800 = scalar_select %p799, %s23, 1
        %s801 = smul.addr %s800, 8
        %s802 = scalar_lea.vmem %s1, %s801
        %p804 = scmp.eq.s32.totalorder %s24, 0
        // Predicated region
        $region79: #{tpu_custom_call.1} parent=73 // pred_check
          %p805 = pneg %p804
        $region80: #{tpu_custom_call.1} parent=73 // pred_check_branch
          %807 = sbr.rel (%p805) target = $region82
        $region81: #{tpu_custom_call.1} parent=73 // pred_region
          %808 = vst [vmem:[#allocation2] sm:$0xff] -inf
        $region82: #{tpu_custom_call.1} parent=73 // pred_fallthru
          _
        %v809 = vld [vmem:[%s768] sm:$0xff]
        %v810 = vld [vmem:[%s768 + $0x8] sm:$0xff]
        %v811 = vld [vmem:[%s768 + $0x10] sm:$0xff]
        %v812 = vld [vmem:[%s768 + $0x18] sm:$0xff]
        %v813 = vld [vmem:[%s768 + $0x20] sm:$0xff]
        %v814 = vld [vmem:[%s768 + $0x28] sm:$0xff]
        %v815 = vld [vmem:[%s768 + $0x30] sm:$0xff]
        %v816 = vld [vmem:[%s768 + $0x38] sm:$0xff]
        %v817 = vld [vmem:[%s768 + $0x40] sm:$0xff]
        %v818 = vld [vmem:[%s768 + $0x48] sm:$0xff]
        %v819 = vld [vmem:[%s768 + $0x50] sm:$0xff]
        %v820 = vld [vmem:[%s768 + $0x58] sm:$0xff]
        %v821 = vld [vmem:[%s768 + $0x60] sm:$0xff]
        %v822 = vld [vmem:[%s768 + $0x68] sm:$0xff]
        %v823 = vld [vmem:[%s768 + $0x70] sm:$0xff]
        %v824 = vld [vmem:[%s768 + $0x78] sm:$0xff]
        %v825 = vld [vmem:[%s768 + $0x80] sm:$0xff]
        %v826 = vld [vmem:[%s768 + $0x88] sm:$0xff]
        %v827 = vld [vmem:[%s768 + $0x90] sm:$0xff]
        %v828 = vld [vmem:[%s768 + $0x98] sm:$0xff]
        %v829 = vld [vmem:[%s768 + $0xa0] sm:$0xff]
        %v830 = vld [vmem:[%s768 + $0xa8] sm:$0xff]
        %v831 = vld [vmem:[%s768 + $0xb0] sm:$0xff]
        %v832 = vld [vmem:[%s768 + $0xb8] sm:$0xff]
        %v833 = vld [vmem:[%s768 + $0xc0] sm:$0xff]
        %v834 = vld [vmem:[%s768 + $0xc8] sm:$0xff]
        %v835 = vld [vmem:[%s768 + $0xd0] sm:$0xff]
        %v836 = vld [vmem:[%s768 + $0xd8] sm:$0xff]
        %v837 = vld [vmem:[%s768 + $0xe0] sm:$0xff]
        %v838 = vld [vmem:[%s768 + $0xe8] sm:$0xff]
        %v839 = vld [vmem:[%s768 + $0xf0] sm:$0xff]
        %v840 = vld [vmem:[%s768 + $0xf8] sm:$0xff]
        %v841 = vld [vmem:[%s768 + $0x100] sm:$0xff]
        %v842 = vld [vmem:[%s768 + $0x108] sm:$0xff]
        %v843 = vld [vmem:[%s768 + $0x110] sm:$0xff]
        %v844 = vld [vmem:[%s768 + $0x118] sm:$0xff]
        %v845 = vld [vmem:[%s768 + $0x120] sm:$0xff]
        %v846 = vld [vmem:[%s768 + $0x128] sm:$0xff]
        %v847 = vld [vmem:[%s768 + $0x130] sm:$0xff]
        %v848 = vld [vmem:[%s768 + $0x138] sm:$0xff]
        %v849 = vld [vmem:[%s768 + $0x140] sm:$0xff]
        %v850 = vld [vmem:[%s768 + $0x148] sm:$0xff]
        %v851 = vld [vmem:[%s768 + $0x150] sm:$0xff]
        %v852 = vld [vmem:[%s768 + $0x158] sm:$0xff]
        %v853 = vld [vmem:[%s768 + $0x160] sm:$0xff]
        %v854 = vld [vmem:[%s768 + $0x168] sm:$0xff]
        %v855 = vld [vmem:[%s768 + $0x170] sm:$0xff]
        %v856 = vld [vmem:[%s768 + $0x178] sm:$0xff]
        %v857 = vld [vmem:[%s768 + $0x180] sm:$0xff]
        %v858 = vld [vmem:[%s768 + $0x188] sm:$0xff]
        %v859 = vld [vmem:[%s768 + $0x190] sm:$0xff]
        %v860 = vld [vmem:[%s768 + $0x198] sm:$0xff]
        %v861 = vld [vmem:[%s768 + $0x1a0] sm:$0xff]
        %v862 = vld [vmem:[%s768 + $0x1a8] sm:$0xff]
        %v863 = vld [vmem:[%s768 + $0x1b0] sm:$0xff]
        %v864 = vld [vmem:[%s768 + $0x1b8] sm:$0xff]
        %v865 = vld [vmem:[%s768 + $0x1c0] sm:$0xff]
        %v866 = vld [vmem:[%s768 + $0x1c8] sm:$0xff]
        %v867 = vld [vmem:[%s768 + $0x1d0] sm:$0xff]
        %v868 = vld [vmem:[%s768 + $0x1d8] sm:$0xff]
        %v869 = vld [vmem:[%s768 + $0x1e0] sm:$0xff]
        %v870 = vld [vmem:[%s768 + $0x1e8] sm:$0xff]
        %v871 = vld [vmem:[%s768 + $0x1f0] sm:$0xff]
        %v872 = vld [vmem:[%s768 + $0x1f8] sm:$0xff]
        %v873 = vld [vmem:[%s768 + $0x200] sm:$0xff]
        %v874 = vld [vmem:[%s768 + $0x208] sm:$0xff]
        %v875 = vld [vmem:[%s768 + $0x210] sm:$0xff]
        %v876 = vld [vmem:[%s768 + $0x218] sm:$0xff]
        %v877 = vld [vmem:[%s768 + $0x220] sm:$0xff]
        %v878 = vld [vmem:[%s768 + $0x228] sm:$0xff]
        %v879 = vld [vmem:[%s768 + $0x230] sm:$0xff]
        %v880 = vld [vmem:[%s768 + $0x238] sm:$0xff]
        %v881 = vld [vmem:[%s768 + $0x240] sm:$0xff]
        %v882 = vld [vmem:[%s768 + $0x248] sm:$0xff]
        %v883 = vld [vmem:[%s768 + $0x250] sm:$0xff]
        %v884 = vld [vmem:[%s768 + $0x258] sm:$0xff]
        %v885 = vld [vmem:[%s768 + $0x260] sm:$0xff]
        %v886 = vld [vmem:[%s768 + $0x268] sm:$0xff]
        %v887 = vld [vmem:[%s768 + $0x270] sm:$0xff]
        %v888 = vld [vmem:[%s768 + $0x278] sm:$0xff]
        %v889 = vld [vmem:[%s768 + $0x280] sm:$0xff]
        %v890 = vld [vmem:[%s768 + $0x288] sm:$0xff]
        %v891 = vld [vmem:[%s768 + $0x290] sm:$0xff]
        %v892 = vld [vmem:[%s768 + $0x298] sm:$0xff]
        %v893 = vld [vmem:[%s768 + $0x2a0] sm:$0xff]
        %v894 = vld [vmem:[%s768 + $0x2a8] sm:$0xff]
        %v895 = vld [vmem:[%s768 + $0x2b0] sm:$0xff]
        %v896 = vld [vmem:[%s768 + $0x2b8] sm:$0xff]
        %v897 = vld [vmem:[%s768 + $0x2c0] sm:$0xff]
        %v898 = vld [vmem:[%s768 + $0x2c8] sm:$0xff]
        %v899 = vld [vmem:[%s768 + $0x2d0] sm:$0xff]
        %v900 = vld [vmem:[%s768 + $0x2d8] sm:$0xff]
        %v901 = vld [vmem:[%s768 + $0x2e0] sm:$0xff]
        %v902 = vld [vmem:[%s768 + $0x2e8] sm:$0xff]
        %v903 = vld [vmem:[%s768 + $0x2f0] sm:$0xff]
        %v904 = vld [vmem:[%s768 + $0x2f8] sm:$0xff]
        %v905 = vld [vmem:[%s768 + $0x300] sm:$0xff]
        %v906 = vld [vmem:[%s768 + $0x308] sm:$0xff]
        %v907 = vld [vmem:[%s768 + $0x310] sm:$0xff]
        %v908 = vld [vmem:[%s768 + $0x318] sm:$0xff]
        %v909 = vld [vmem:[%s768 + $0x320] sm:$0xff]
        %v910 = vld [vmem:[%s768 + $0x328] sm:$0xff]
        %v911 = vld [vmem:[%s768 + $0x330] sm:$0xff]
        %v912 = vld [vmem:[%s768 + $0x338] sm:$0xff]
        %v913 = vld [vmem:[%s768 + $0x340] sm:$0xff]
        %v914 = vld [vmem:[%s768 + $0x348] sm:$0xff]
        %v915 = vld [vmem:[%s768 + $0x350] sm:$0xff]
        %v916 = vld [vmem:[%s768 + $0x358] sm:$0xff]
        %v917 = vld [vmem:[%s768 + $0x360] sm:$0xff]
        %v918 = vld [vmem:[%s768 + $0x368] sm:$0xff]
        %v919 = vld [vmem:[%s768 + $0x370] sm:$0xff]
        %v920 = vld [vmem:[%s768 + $0x378] sm:$0xff]
        %v921 = vld [vmem:[%s768 + $0x380] sm:$0xff]
        %v922 = vld [vmem:[%s768 + $0x388] sm:$0xff]
        %v923 = vld [vmem:[%s768 + $0x390] sm:$0xff]
        %v924 = vld [vmem:[%s768 + $0x398] sm:$0xff]
        %v925 = vld [vmem:[%s768 + $0x3a0] sm:$0xff]
        %v926 = vld [vmem:[%s768 + $0x3a8] sm:$0xff]
        %v927 = vld [vmem:[%s768 + $0x3b0] sm:$0xff]
        %v928 = vld [vmem:[%s768 + $0x3b8] sm:$0xff]
        %v929 = vld [vmem:[%s768 + $0x3c0] sm:$0xff]
        %v930 = vld [vmem:[%s768 + $0x3c8] sm:$0xff]
        %v931 = vld [vmem:[%s768 + $0x3d0] sm:$0xff]
        %v932 = vld [vmem:[%s768 + $0x3d8] sm:$0xff]
        %v933 = vld [vmem:[%s768 + $0x3e0] sm:$0xff]
        %v934 = vld [vmem:[%s768 + $0x3e8] sm:$0xff]
        %v935 = vld [vmem:[%s768 + $0x3f0] sm:$0xff]
        %v936 = vld [vmem:[%s768 + $0x3f8] sm:$0xff]
        %v937 = vld [vmem:[%s3] sm:$0xff]
        %v938 = vld [vmem:[%s4] sm:$0xff]
        %940 = vset.pattern.permute.xlu0 0
        %941 = vperm.xlu0 %940, %v809
        %v942 = vpop.permute.xlu0 %941
        %945 = vset.pattern.permute.xlu0 0
        %946 = vperm.xlu0 %945, %v810
        %v947 = vpop.permute.xlu0 %946
        %950 = vset.pattern.permute.xlu0 0
        %951 = vperm.xlu0 %950, %v811
        %v952 = vpop.permute.xlu0 %951
        %955 = vset.pattern.permute.xlu0 0
        %956 = vperm.xlu0 %955, %v812
        %v957 = vpop.permute.xlu0 %956
        %960 = vset.pattern.permute.xlu0 0
        %961 = vperm.xlu0 %960, %v813
        %v962 = vpop.permute.xlu0 %961
        %965 = vset.pattern.permute.xlu0 0
        %966 = vperm.xlu0 %965, %v814
        %v967 = vpop.permute.xlu0 %966
        %970 = vset.pattern.permute.xlu0 0
        %971 = vperm.xlu0 %970, %v815
        %v972 = vpop.permute.xlu0 %971
        %975 = vset.pattern.permute.xlu0 0
        %976 = vperm.xlu0 %975, %v816
        %v977 = vpop.permute.xlu0 %976
        %980 = vset.pattern.permute.xlu0 0
        %981 = vperm.xlu0 %980, %v817
        %v982 = vpop.permute.xlu0 %981
        %985 = vset.pattern.permute.xlu0 0
        %986 = vperm.xlu0 %985, %v818
        %v987 = vpop.permute.xlu0 %986
        %990 = vset.pattern.permute.xlu0 0
        %991 = vperm.xlu0 %990, %v819
        %v992 = vpop.permute.xlu0 %991
        %995 = vset.pattern.permute.xlu0 0
        %996 = vperm.xlu0 %995, %v820
        %v997 = vpop.permute.xlu0 %996
        %1000 = vset.pattern.permute.xlu0 0
        %1001 = vperm.xlu0 %1000, %v821
        %v1002 = vpop.permute.xlu0 %1001
        %1005 = vset.pattern.permute.xlu0 0
        %1006 = vperm.xlu0 %1005, %v822
        %v1007 = vpop.permute.xlu0 %1006
        %1010 = vset.pattern.permute.xlu0 0
        %1011 = vperm.xlu0 %1010, %v823
        %v1012 = vpop.permute.xlu0 %1011
        %1015 = vset.pattern.permute.xlu0 0
        %1016 = vperm.xlu0 %1015, %v824
        %v1017 = vpop.permute.xlu0 %1016
        %1020 = vset.pattern.permute.xlu0 0
        %1021 = vperm.xlu0 %1020, %v825
        %v1022 = vpop.permute.xlu0 %1021
        %1025 = vset.pattern.permute.xlu0 0
        %1026 = vperm.xlu0 %1025, %v826
        %v1027 = vpop.permute.xlu0 %1026
        %1030 = vset.pattern.permute.xlu0 0
        %1031 = vperm.xlu0 %1030, %v827
        %v1032 = vpop.permute.xlu0 %1031
        %1035 = vset.pattern.permute.xlu0 0
        %1036 = vperm.xlu0 %1035, %v828
        %v1037 = vpop.permute.xlu0 %1036
        %1040 = vset.pattern.permute.xlu0 0
        %1041 = vperm.xlu0 %1040, %v829
        %v1042 = vpop.permute.xlu0 %1041
        %1045 = vset.pattern.permute.xlu0 0
        %1046 = vperm.xlu0 %1045, %v830
        %v1047 = vpop.permute.xlu0 %1046
        %1050 = vset.pattern.permute.xlu0 0
        %1051 = vperm.xlu0 %1050, %v831
        %v1052 = vpop.permute.xlu0 %1051
        %1055 = vset.pattern.permute.xlu0 0
        %1056 = vperm.xlu0 %1055, %v832
        %v1057 = vpop.permute.xlu0 %1056
        %1060 = vset.pattern.permute.xlu0 0
        %1061 = vperm.xlu0 %1060, %v833
        %v1062 = vpop.permute.xlu0 %1061
        %1065 = vset.pattern.permute.xlu0 0
        %1066 = vperm.xlu0 %1065, %v834
        %v1067 = vpop.permute.xlu0 %1066
        %1070 = vset.pattern.permute.xlu0 0
        %1071 = vperm.xlu0 %1070, %v835
        %v1072 = vpop.permute.xlu0 %1071
        %1075 = vset.pattern.permute.xlu0 0
        %1076 = vperm.xlu0 %1075, %v836
        %v1077 = vpop.permute.xlu0 %1076
        %1080 = vset.pattern.permute.xlu0 0
        %1081 = vperm.xlu0 %1080, %v837
        %v1082 = vpop.permute.xlu0 %1081
        %1085 = vset.pattern.permute.xlu0 0
        %1086 = vperm.xlu0 %1085, %v838
        %v1087 = vpop.permute.xlu0 %1086
        %1090 = vset.pattern.permute.xlu0 0
        %1091 = vperm.xlu0 %1090, %v839
        %v1092 = vpop.permute.xlu0 %1091
        %1095 = vset.pattern.permute.xlu0 0
        %1096 = vperm.xlu0 %1095, %v840
        %v1097 = vpop.permute.xlu0 %1096
        %1100 = vset.pattern.permute.xlu0 0
        %1101 = vperm.xlu0 %1100, %v841
        %v1102 = vpop.permute.xlu0 %1101
        %1105 = vset.pattern.permute.xlu0 0
        %1106 = vperm.xlu0 %1105, %v842
        %v1107 = vpop.permute.xlu0 %1106
        %1110 = vset.pattern.permute.xlu0 0
        %1111 = vperm.xlu0 %1110, %v843
        %v1112 = vpop.permute.xlu0 %1111
        %1115 = vset.pattern.permute.xlu0 0
        %1116 = vperm.xlu0 %1115, %v844
        %v1117 = vpop.permute.xlu0 %1116
        %1120 = vset.pattern.permute.xlu0 0
        %1121 = vperm.xlu0 %1120, %v845
        %v1122 = vpop.permute.xlu0 %1121
        %1125 = vset.pattern.permute.xlu0 0
        %1126 = vperm.xlu0 %1125, %v846
        %v1127 = vpop.permute.xlu0 %1126
        %1130 = vset.pattern.permute.xlu0 0
        %1131 = vperm.xlu0 %1130, %v847
        %v1132 = vpop.permute.xlu0 %1131
        %1135 = vset.pattern.permute.xlu0 0
        %1136 = vperm.xlu0 %1135, %v848
        %v1137 = vpop.permute.xlu0 %1136
        %1140 = vset.pattern.permute.xlu0 0
        %1141 = vperm.xlu0 %1140, %v849
        %v1142 = vpop.permute.xlu0 %1141
        %1145 = vset.pattern.permute.xlu0 0
        %1146 = vperm.xlu0 %1145, %v850
        %v1147 = vpop.permute.xlu0 %1146
        %1150 = vset.pattern.permute.xlu0 0
        %1151 = vperm.xlu0 %1150, %v851
        %v1152 = vpop.permute.xlu0 %1151
        %1155 = vset.pattern.permute.xlu0 0
        %1156 = vperm.xlu0 %1155, %v852
        %v1157 = vpop.permute.xlu0 %1156
        %1160 = vset.pattern.permute.xlu0 0
        %1161 = vperm.xlu0 %1160, %v853
        %v1162 = vpop.permute.xlu0 %1161
        %1165 = vset.pattern.permute.xlu0 0
        %1166 = vperm.xlu0 %1165, %v854
        %v1167 = vpop.permute.xlu0 %1166
        %1170 = vset.pattern.permute.xlu0 0
        %1171 = vperm.xlu0 %1170, %v855
        %v1172 = vpop.permute.xlu0 %1171
        %1175 = vset.pattern.permute.xlu0 0
        %1176 = vperm.xlu0 %1175, %v856
        %v1177 = vpop.permute.xlu0 %1176
        %1180 = vset.pattern.permute.xlu0 0
        %1181 = vperm.xlu0 %1180, %v857
        %v1182 = vpop.permute.xlu0 %1181
        %1185 = vset.pattern.permute.xlu0 0
        %1186 = vperm.xlu0 %1185, %v858
        %v1187 = vpop.permute.xlu0 %1186
        %1190 = vset.pattern.permute.xlu0 0
        %1191 = vperm.xlu0 %1190, %v859
        %v1192 = vpop.permute.xlu0 %1191
        %1195 = vset.pattern.permute.xlu0 0
        %1196 = vperm.xlu0 %1195, %v860
        %v1197 = vpop.permute.xlu0 %1196
        %1200 = vset.pattern.permute.xlu0 0
        %1201 = vperm.xlu0 %1200, %v861
        %v1202 = vpop.permute.xlu0 %1201
        %1205 = vset.pattern.permute.xlu0 0
        %1206 = vperm.xlu0 %1205, %v862
        %v1207 = vpop.permute.xlu0 %1206
        %1210 = vset.pattern.permute.xlu0 0
        %1211 = vperm.xlu0 %1210, %v863
        %v1212 = vpop.permute.xlu0 %1211
        %1215 = vset.pattern.permute.xlu0 0
        %1216 = vperm.xlu0 %1215, %v864
        %v1217 = vpop.permute.xlu0 %1216
        %1220 = vset.pattern.permute.xlu0 0
        %1221 = vperm.xlu0 %1220, %v865
        %v1222 = vpop.permute.xlu0 %1221
        %1225 = vset.pattern.permute.xlu0 0
        %1226 = vperm.xlu0 %1225, %v866
        %v1227 = vpop.permute.xlu0 %1226
        %1230 = vset.pattern.permute.xlu0 0
        %1231 = vperm.xlu0 %1230, %v867
        %v1232 = vpop.permute.xlu0 %1231
        %1235 = vset.pattern.permute.xlu0 0
        %1236 = vperm.xlu0 %1235, %v868
        %v1237 = vpop.permute.xlu0 %1236
        %1240 = vset.pattern.permute.xlu0 0
        %1241 = vperm.xlu0 %1240, %v869
        %v1242 = vpop.permute.xlu0 %1241
        %1245 = vset.pattern.permute.xlu0 0
        %1246 = vperm.xlu0 %1245, %v870
        %v1247 = vpop.permute.xlu0 %1246
        %1250 = vset.pattern.permute.xlu0 0
        %1251 = vperm.xlu0 %1250, %v871
        %v1252 = vpop.permute.xlu0 %1251
        %1255 = vset.pattern.permute.xlu0 0
        %1256 = vperm.xlu0 %1255, %v872
        %v1257 = vpop.permute.xlu0 %1256
        %1260 = vset.pattern.permute.xlu0 0
        %1261 = vperm.xlu0 %1260, %v873
        %v1262 = vpop.permute.xlu0 %1261
        %1265 = vset.pattern.permute.xlu0 0
        %1266 = vperm.xlu0 %1265, %v874
        %v1267 = vpop.permute.xlu0 %1266
        %1270 = vset.pattern.permute.xlu0 0
        %1271 = vperm.xlu0 %1270, %v875
        %v1272 = vpop.permute.xlu0 %1271
        %1275 = vset.pattern.permute.xlu0 0
        %1276 = vperm.xlu0 %1275, %v876
        %v1277 = vpop.permute.xlu0 %1276
        %1280 = vset.pattern.permute.xlu0 0
        %1281 = vperm.xlu0 %1280, %v877
        %v1282 = vpop.permute.xlu0 %1281
        %1285 = vset.pattern.permute.xlu0 0
        %1286 = vperm.xlu0 %1285, %v878
        %v1287 = vpop.permute.xlu0 %1286
        %1290 = vset.pattern.permute.xlu0 0
        %1291 = vperm.xlu0 %1290, %v879
        %v1292 = vpop.permute.xlu0 %1291
        %1295 = vset.pattern.permute.xlu0 0
        %1296 = vperm.xlu0 %1295, %v880
        %v1297 = vpop.permute.xlu0 %1296
        %1300 = vset.pattern.permute.xlu0 0
        %1301 = vperm.xlu0 %1300, %v881
        %v1302 = vpop.permute.xlu0 %1301
        %1305 = vset.pattern.permute.xlu0 0
        %1306 = vperm.xlu0 %1305, %v882
        %v1307 = vpop.permute.xlu0 %1306
        %1310 = vset.pattern.permute.xlu0 0
        %1311 = vperm.xlu0 %1310, %v883
        %v1312 = vpop.permute.xlu0 %1311
        %1315 = vset.pattern.permute.xlu0 0
        %1316 = vperm.xlu0 %1315, %v884
        %v1317 = vpop.permute.xlu0 %1316
        %1320 = vset.pattern.permute.xlu0 0
        %1321 = vperm.xlu0 %1320, %v885
        %v1322 = vpop.permute.xlu0 %1321
        %1325 = vset.pattern.permute.xlu0 0
        %1326 = vperm.xlu0 %1325, %v886
        %v1327 = vpop.permute.xlu0 %1326
        %1330 = vset.pattern.permute.xlu0 0
        %1331 = vperm.xlu0 %1330, %v887
        %v1332 = vpop.permute.xlu0 %1331
        %1335 = vset.pattern.permute.xlu0 0
        %1336 = vperm.xlu0 %1335, %v888
        %v1337 = vpop.permute.xlu0 %1336
        %1340 = vset.pattern.permute.xlu0 0
        %1341 = vperm.xlu0 %1340, %v889
        %v1342 = vpop.permute.xlu0 %1341
        %1345 = vset.pattern.permute.xlu0 0
        %1346 = vperm.xlu0 %1345, %v890
        %v1347 = vpop.permute.xlu0 %1346
        %1350 = vset.pattern.permute.xlu0 0
        %1351 = vperm.xlu0 %1350, %v891
        %v1352 = vpop.permute.xlu0 %1351
        %1355 = vset.pattern.permute.xlu0 0
        %1356 = vperm.xlu0 %1355, %v892
        %v1357 = vpop.permute.xlu0 %1356
        %1360 = vset.pattern.permute.xlu0 0
        %1361 = vperm.xlu0 %1360, %v893
        %v1362 = vpop.permute.xlu0 %1361
        %1365 = vset.pattern.permute.xlu0 0
        %1366 = vperm.xlu0 %1365, %v894
        %v1367 = vpop.permute.xlu0 %1366
        %1370 = vset.pattern.permute.xlu0 0
        %1371 = vperm.xlu0 %1370, %v895
        %v1372 = vpop.permute.xlu0 %1371
        %1375 = vset.pattern.permute.xlu0 0
        %1376 = vperm.xlu0 %1375, %v896
        %v1377 = vpop.permute.xlu0 %1376
        %1380 = vset.pattern.permute.xlu0 0
        %1381 = vperm.xlu0 %1380, %v897
        %v1382 = vpop.permute.xlu0 %1381
        %1385 = vset.pattern.permute.xlu0 0
        %1386 = vperm.xlu0 %1385, %v898
        %v1387 = vpop.permute.xlu0 %1386
        %1390 = vset.pattern.permute.xlu0 0
        %1391 = vperm.xlu0 %1390, %v899
        %v1392 = vpop.permute.xlu0 %1391
        %1395 = vset.pattern.permute.xlu0 0
        %1396 = vperm.xlu0 %1395, %v900
        %v1397 = vpop.permute.xlu0 %1396
        %1400 = vset.pattern.permute.xlu0 0
        %1401 = vperm.xlu0 %1400, %v901
        %v1402 = vpop.permute.xlu0 %1401
        %1405 = vset.pattern.permute.xlu0 0
        %1406 = vperm.xlu0 %1405, %v902
        %v1407 = vpop.permute.xlu0 %1406
        %1410 = vset.pattern.permute.xlu0 0
        %1411 = vperm.xlu0 %1410, %v903
        %v1412 = vpop.permute.xlu0 %1411
        %1415 = vset.pattern.permute.xlu0 0
        %1416 = vperm.xlu0 %1415, %v904
        %v1417 = vpop.permute.xlu0 %1416
        %1420 = vset.pattern.permute.xlu0 0
        %1421 = vperm.xlu0 %1420, %v905
        %v1422 = vpop.permute.xlu0 %1421
        %1425 = vset.pattern.permute.xlu0 0
        %1426 = vperm.xlu0 %1425, %v906
        %v1427 = vpop.permute.xlu0 %1426
        %1430 = vset.pattern.permute.xlu0 0
        %1431 = vperm.xlu0 %1430, %v907
        %v1432 = vpop.permute.xlu0 %1431
        %1435 = vset.pattern.permute.xlu0 0
        %1436 = vperm.xlu0 %1435, %v908
        %v1437 = vpop.permute.xlu0 %1436
        %1440 = vset.pattern.permute.xlu0 0
        %1441 = vperm.xlu0 %1440, %v909
        %v1442 = vpop.permute.xlu0 %1441
        %1445 = vset.pattern.permute.xlu0 0
        %1446 = vperm.xlu0 %1445, %v910
        %v1447 = vpop.permute.xlu0 %1446
        %1450 = vset.pattern.permute.xlu0 0
        %1451 = vperm.xlu0 %1450, %v911
        %v1452 = vpop.permute.xlu0 %1451
        %1455 = vset.pattern.permute.xlu0 0
        %1456 = vperm.xlu0 %1455, %v912
        %v1457 = vpop.permute.xlu0 %1456
        %1460 = vset.pattern.permute.xlu0 0
        %1461 = vperm.xlu0 %1460, %v913
        %v1462 = vpop.permute.xlu0 %1461
        %1465 = vset.pattern.permute.xlu0 0
        %1466 = vperm.xlu0 %1465, %v914
        %v1467 = vpop.permute.xlu0 %1466
        %1470 = vset.pattern.permute.xlu0 0
        %1471 = vperm.xlu0 %1470, %v915
        %v1472 = vpop.permute.xlu0 %1471
        %1475 = vset.pattern.permute.xlu0 0
        %1476 = vperm.xlu0 %1475, %v916
        %v1477 = vpop.permute.xlu0 %1476
        %1480 = vset.pattern.permute.xlu0 0
        %1481 = vperm.xlu0 %1480, %v917
        %v1482 = vpop.permute.xlu0 %1481
        %1485 = vset.pattern.permute.xlu0 0
        %1486 = vperm.xlu0 %1485, %v918
        %v1487 = vpop.permute.xlu0 %1486
        %1490 = vset.pattern.permute.xlu0 0
        %1491 = vperm.xlu0 %1490, %v919
        %v1492 = vpop.permute.xlu0 %1491
        %1495 = vset.pattern.permute.xlu0 0
        %1496 = vperm.xlu0 %1495, %v920
        %v1497 = vpop.permute.xlu0 %1496
        %1500 = vset.pattern.permute.xlu0 0
        %1501 = vperm.xlu0 %1500, %v921
        %v1502 = vpop.permute.xlu0 %1501
        %1505 = vset.pattern.permute.xlu0 0
        %1506 = vperm.xlu0 %1505, %v922
        %v1507 = vpop.permute.xlu0 %1506
        %1510 = vset.pattern.permute.xlu0 0
        %1511 = vperm.xlu0 %1510, %v923
        %v1512 = vpop.permute.xlu0 %1511
        %1515 = vset.pattern.permute.xlu0 0
        %1516 = vperm.xlu0 %1515, %v924
        %v1517 = vpop.permute.xlu0 %1516
        %1520 = vset.pattern.permute.xlu0 0
        %1521 = vperm.xlu0 %1520, %v925
        %v1522 = vpop.permute.xlu0 %1521
        %1525 = vset.pattern.permute.xlu0 0
        %1526 = vperm.xlu0 %1525, %v926
        %v1527 = vpop.permute.xlu0 %1526
        %1530 = vset.pattern.permute.xlu0 0
        %1531 = vperm.xlu0 %1530, %v927
        %v1532 = vpop.permute.xlu0 %1531
        %1535 = vset.pattern.permute.xlu0 0
        %1536 = vperm.xlu0 %1535, %v928
        %v1537 = vpop.permute.xlu0 %1536
        %1540 = vset.pattern.permute.xlu0 0
        %1541 = vperm.xlu0 %1540, %v929
        %v1542 = vpop.permute.xlu0 %1541
        %1545 = vset.pattern.permute.xlu0 0
        %1546 = vperm.xlu0 %1545, %v930
        %v1547 = vpop.permute.xlu0 %1546
        %1550 = vset.pattern.permute.xlu0 0
        %1551 = vperm.xlu0 %1550, %v931
        %v1552 = vpop.permute.xlu0 %1551
        %1555 = vset.pattern.permute.xlu0 0
        %1556 = vperm.xlu0 %1555, %v932
        %v1557 = vpop.permute.xlu0 %1556
        %1560 = vset.pattern.permute.xlu0 0
        %1561 = vperm.xlu0 %1560, %v933
        %v1562 = vpop.permute.xlu0 %1561
        %1565 = vset.pattern.permute.xlu0 0
        %1566 = vperm.xlu0 %1565, %v934
        %v1567 = vpop.permute.xlu0 %1566
        %1570 = vset.pattern.permute.xlu0 0
        %1571 = vperm.xlu0 %1570, %v935
        %v1572 = vpop.permute.xlu0 %1571
        %1575 = vset.pattern.permute.xlu0 0
        %1576 = vperm.xlu0 %1575, %v936
        %v1577 = vpop.permute.xlu0 %1576
        %v1579 = vlaneseq
        %v1580 = vshrl.u32 %v1579, 7
        %v1581 = vsub.s32 0, %v1580
        %v1582 = vrot.slane %v937, %v1581
        %v1583 = vmul.f32 %v942, %v1582
        %v1584 = vmul.f32 %v947, %v1582
        %v1585 = vmul.f32 %v952, %v1582
        %v1586 = vmul.f32 %v957, %v1582
        %v1587 = vmul.f32 %v962, %v1582
        %v1588 = vmul.f32 %v967, %v1582
        %v1589 = vmul.f32 %v972, %v1582
        %v1590 = vmul.f32 %v977, %v1582
        %v1591 = vmul.f32 %v982, %v1582
        %v1592 = vmul.f32 %v987, %v1582
        %v1593 = vmul.f32 %v992, %v1582
        %v1594 = vmul.f32 %v997, %v1582
        %v1595 = vmul.f32 %v1002, %v1582
        %v1596 = vmul.f32 %v1007, %v1582
        %v1597 = vmul.f32 %v1012, %v1582
        %v1598 = vmul.f32 %v1017, %v1582
        %v1599 = vmul.f32 %v1022, %v1582
        %v1600 = vmul.f32 %v1027, %v1582
        %v1601 = vmul.f32 %v1032, %v1582
        %v1602 = vmul.f32 %v1037, %v1582
        %v1603 = vmul.f32 %v1042, %v1582
        %v1604 = vmul.f32 %v1047, %v1582
        %v1605 = vmul.f32 %v1052, %v1582
        %v1606 = vmul.f32 %v1057, %v1582
        %v1607 = vmul.f32 %v1062, %v1582
        %v1608 = vmul.f32 %v1067, %v1582
        %v1609 = vmul.f32 %v1072, %v1582
        %v1610 = vmul.f32 %v1077, %v1582
        %v1611 = vmul.f32 %v1082, %v1582
        %v1612 = vmul.f32 %v1087, %v1582
        %v1613 = vmul.f32 %v1092, %v1582
        %v1614 = vmul.f32 %v1097, %v1582
        %v1615 = vmul.f32 %v1102, %v1582
        %v1616 = vmul.f32 %v1107, %v1582
        %v1617 = vmul.f32 %v1112, %v1582
        %v1618 = vmul.f32 %v1117, %v1582
        %v1619 = vmul.f32 %v1122, %v1582
        %v1620 = vmul.f32 %v1127, %v1582
        %v1621 = vmul.f32 %v1132, %v1582
        %v1622 = vmul.f32 %v1137, %v1582
        %v1623 = vmul.f32 %v1142, %v1582
        %v1624 = vmul.f32 %v1147, %v1582
        %v1625 = vmul.f32 %v1152, %v1582
        %v1626 = vmul.f32 %v1157, %v1582
        %v1627 = vmul.f32 %v1162, %v1582
        %v1628 = vmul.f32 %v1167, %v1582
        %v1629 = vmul.f32 %v1172, %v1582
        %v1630 = vmul.f32 %v1177, %v1582
        %v1631 = vmul.f32 %v1182, %v1582
        %v1632 = vmul.f32 %v1187, %v1582
        %v1633 = vmul.f32 %v1192, %v1582
        %v1634 = vmul.f32 %v1197, %v1582
        %v1635 = vmul.f32 %v1202, %v1582
        %v1636 = vmul.f32 %v1207, %v1582
        %v1637 = vmul.f32 %v1212, %v1582
        %v1638 = vmul.f32 %v1217, %v1582
        %v1639 = vmul.f32 %v1222, %v1582
        %v1640 = vmul.f32 %v1227, %v1582
        %v1641 = vmul.f32 %v1232, %v1582
        %v1642 = vmul.f32 %v1237, %v1582
        %v1643 = vmul.f32 %v1242, %v1582
        %v1644 = vmul.f32 %v1247, %v1582
        %v1645 = vmul.f32 %v1252, %v1582
        %v1646 = vmul.f32 %v1257, %v1582
        %v1647 = vmul.f32 %v1262, %v1582
        %v1648 = vmul.f32 %v1267, %v1582
        %v1649 = vmul.f32 %v1272, %v1582
        %v1650 = vmul.f32 %v1277, %v1582
        %v1651 = vmul.f32 %v1282, %v1582
        %v1652 = vmul.f32 %v1287, %v1582
        %v1653 = vmul.f32 %v1292, %v1582
        %v1654 = vmul.f32 %v1297, %v1582
        %v1655 = vmul.f32 %v1302, %v1582
        %v1656 = vmul.f32 %v1307, %v1582
        %v1657 = vmul.f32 %v1312, %v1582
        %v1658 = vmul.f32 %v1317, %v1582
        %v1659 = vmul.f32 %v1322, %v1582
        %v1660 = vmul.f32 %v1327, %v1582
        %v1661 = vmul.f32 %v1332, %v1582
        %v1662 = vmul.f32 %v1337, %v1582
        %v1663 = vmul.f32 %v1342, %v1582
        %v1664 = vmul.f32 %v1347, %v1582
        %v1665 = vmul.f32 %v1352, %v1582
        %v1666 = vmul.f32 %v1357, %v1582
        %v1667 = vmul.f32 %v1362, %v1582
        %v1668 = vmul.f32 %v1367, %v1582
        %v1669 = vmul.f32 %v1372, %v1582
        %v1670 = vmul.f32 %v1377, %v1582
        %v1671 = vmul.f32 %v1382, %v1582
        %v1672 = vmul.f32 %v1387, %v1582
        %v1673 = vmul.f32 %v1392, %v1582
        %v1674 = vmul.f32 %v1397, %v1582
        %v1675 = vmul.f32 %v1402, %v1582
        %v1676 = vmul.f32 %v1407, %v1582
        %v1677 = vmul.f32 %v1412, %v1582
        %v1678 = vmul.f32 %v1417, %v1582
        %v1679 = vmul.f32 %v1422, %v1582
        %v1680 = vmul.f32 %v1427, %v1582
        %v1681 = vmul.f32 %v1432, %v1582
        %v1682 = vmul.f32 %v1437, %v1582
        %v1683 = vmul.f32 %v1442, %v1582
        %v1684 = vmul.f32 %v1447, %v1582
        %v1685 = vmul.f32 %v1452, %v1582
        %v1686 = vmul.f32 %v1457, %v1582
        %v1687 = vmul.f32 %v1462, %v1582
        %v1688 = vmul.f32 %v1467, %v1582
        %v1689 = vmul.f32 %v1472, %v1582
        %v1690 = vmul.f32 %v1477, %v1582
        %v1691 = vmul.f32 %v1482, %v1582
        %v1692 = vmul.f32 %v1487, %v1582
        %v1693 = vmul.f32 %v1492, %v1582
        %v1694 = vmul.f32 %v1497, %v1582
        %v1695 = vmul.f32 %v1502, %v1582
        %v1696 = vmul.f32 %v1507, %v1582
        %v1697 = vmul.f32 %v1512, %v1582
        %v1698 = vmul.f32 %v1517, %v1582
        %v1699 = vmul.f32 %v1522, %v1582
        %v1700 = vmul.f32 %v1527, %v1582
        %v1701 = vmul.f32 %v1532, %v1582
        %v1702 = vmul.f32 %v1537, %v1582
        %v1703 = vmul.f32 %v1542, %v1582
        %v1704 = vmul.f32 %v1547, %v1582
        %v1705 = vmul.f32 %v1552, %v1582
        %v1706 = vmul.f32 %v1557, %v1582
        %v1707 = vmul.f32 %v1562, %v1582
        %v1708 = vmul.f32 %v1567, %v1582
        %v1709 = vmul.f32 %v1572, %v1582
        %v1710 = vmul.f32 %v1577, %v1582
        %1711 = vset.pattern.permute.xlu0 1
        %1712 = vperm.xlu0 %1711, %v809
        %v1713 = vpop.permute.xlu0 %1712
        %1715 = vset.pattern.permute.xlu0 1
        %1716 = vperm.xlu0 %1715, %v810
        %v1717 = vpop.permute.xlu0 %1716
        %1719 = vset.pattern.permute.xlu0 1
        %1720 = vperm.xlu0 %1719, %v811
        %v1721 = vpop.permute.xlu0 %1720
        %1723 = vset.pattern.permute.xlu0 1
        %1724 = vperm.xlu0 %1723, %v812
        %v1725 = vpop.permute.xlu0 %1724
        %1727 = vset.pattern.permute.xlu0 1
        %1728 = vperm.xlu0 %1727, %v813
        %v1729 = vpop.permute.xlu0 %1728
        %1731 = vset.pattern.permute.xlu0 1
        %1732 = vperm.xlu0 %1731, %v814
        %v1733 = vpop.permute.xlu0 %1732
        %1735 = vset.pattern.permute.xlu0 1
        %1736 = vperm.xlu0 %1735, %v815
        %v1737 = vpop.permute.xlu0 %1736
        %1739 = vset.pattern.permute.xlu0 1
        %1740 = vperm.xlu0 %1739, %v816
        %v1741 = vpop.permute.xlu0 %1740
        %1743 = vset.pattern.permute.xlu0 1
        %1744 = vperm.xlu0 %1743, %v817
        %v1745 = vpop.permute.xlu0 %1744
        %1747 = vset.pattern.permute.xlu0 1
        %1748 = vperm.xlu0 %1747, %v818
        %v1749 = vpop.permute.xlu0 %1748
        %1751 = vset.pattern.permute.xlu0 1
        %1752 = vperm.xlu0 %1751, %v819
        %v1753 = vpop.permute.xlu0 %1752
        %1755 = vset.pattern.permute.xlu0 1
        %1756 = vperm.xlu0 %1755, %v820
        %v1757 = vpop.permute.xlu0 %1756
        %1759 = vset.pattern.permute.xlu0 1
        %1760 = vperm.xlu0 %1759, %v821
        %v1761 = vpop.permute.xlu0 %1760
        %1763 = vset.pattern.permute.xlu0 1
        %1764 = vperm.xlu0 %1763, %v822
        %v1765 = vpop.permute.xlu0 %1764
        %1767 = vset.pattern.permute.xlu0 1
        %1768 = vperm.xlu0 %1767, %v823
        %v1769 = vpop.permute.xlu0 %1768
        %1771 = vset.pattern.permute.xlu0 1
        %1772 = vperm.xlu0 %1771, %v824
        %v1773 = vpop.permute.xlu0 %1772
        %1775 = vset.pattern.permute.xlu0 1
        %1776 = vperm.xlu0 %1775, %v825
        %v1777 = vpop.permute.xlu0 %1776
        %1779 = vset.pattern.permute.xlu0 1
        %1780 = vperm.xlu0 %1779, %v826
        %v1781 = vpop.permute.xlu0 %1780
        %1783 = vset.pattern.permute.xlu0 1
        %1784 = vperm.xlu0 %1783, %v827
        %v1785 = vpop.permute.xlu0 %1784
        %1787 = vset.pattern.permute.xlu0 1
        %1788 = vperm.xlu0 %1787, %v828
        %v1789 = vpop.permute.xlu0 %1788
        %1791 = vset.pattern.permute.xlu0 1
        %1792 = vperm.xlu0 %1791, %v829
        %v1793 = vpop.permute.xlu0 %1792
        %1795 = vset.pattern.permute.xlu0 1
        %1796 = vperm.xlu0 %1795, %v830
        %v1797 = vpop.permute.xlu0 %1796
        %1799 = vset.pattern.permute.xlu0 1
        %1800 = vperm.xlu0 %1799, %v831
        %v1801 = vpop.permute.xlu0 %1800
        %1803 = vset.pattern.permute.xlu0 1
        %1804 = vperm.xlu0 %1803, %v832
        %v1805 = vpop.permute.xlu0 %1804
        %1807 = vset.pattern.permute.xlu0 1
        %1808 = vperm.xlu0 %1807, %v833
        %v1809 = vpop.permute.xlu0 %1808
        %1811 = vset.pattern.permute.xlu0 1
        %1812 = vperm.xlu0 %1811, %v834
        %v1813 = vpop.permute.xlu0 %1812
        %1815 = vset.pattern.permute.xlu0 1
        %1816 = vperm.xlu0 %1815, %v835
        %v1817 = vpop.permute.xlu0 %1816
        %1819 = vset.pattern.permute.xlu0 1
        %1820 = vperm.xlu0 %1819, %v836
        %v1821 = vpop.permute.xlu0 %1820
        %1823 = vset.pattern.permute.xlu0 1
        %1824 = vperm.xlu0 %1823, %v837
        %v1825 = vpop.permute.xlu0 %1824
        %1827 = vset.pattern.permute.xlu0 1
        %1828 = vperm.xlu0 %1827, %v838
        %v1829 = vpop.permute.xlu0 %1828
        %1831 = vset.pattern.permute.xlu0 1
        %1832 = vperm.xlu0 %1831, %v839
        %v1833 = vpop.permute.xlu0 %1832
        %1835 = vset.pattern.permute.xlu0 1
        %1836 = vperm.xlu0 %1835, %v840
        %v1837 = vpop.permute.xlu0 %1836
        %1839 = vset.pattern.permute.xlu0 1
        %1840 = vperm.xlu0 %1839, %v841
        %v1841 = vpop.permute.xlu0 %1840
        %1843 = vset.pattern.permute.xlu0 1
        %1844 = vperm.xlu0 %1843, %v842
        %v1845 = vpop.permute.xlu0 %1844
        %1847 = vset.pattern.permute.xlu0 1
        %1848 = vperm.xlu0 %1847, %v843
        %v1849 = vpop.permute.xlu0 %1848
        %1851 = vset.pattern.permute.xlu0 1
        %1852 = vperm.xlu0 %1851, %v844
        %v1853 = vpop.permute.xlu0 %1852
        %1855 = vset.pattern.permute.xlu0 1
        %1856 = vperm.xlu0 %1855, %v845
        %v1857 = vpop.permute.xlu0 %1856
        %1859 = vset.pattern.permute.xlu0 1
        %1860 = vperm.xlu0 %1859, %v846
        %v1861 = vpop.permute.xlu0 %1860
        %1863 = vset.pattern.permute.xlu0 1
        %1864 = vperm.xlu0 %1863, %v847
        %v1865 = vpop.permute.xlu0 %1864
        %1867 = vset.pattern.permute.xlu0 1
        %1868 = vperm.xlu0 %1867, %v848
        %v1869 = vpop.permute.xlu0 %1868
        %1871 = vset.pattern.permute.xlu0 1
        %1872 = vperm.xlu0 %1871, %v849
        %v1873 = vpop.permute.xlu0 %1872
        %1875 = vset.pattern.permute.xlu0 1
        %1876 = vperm.xlu0 %1875, %v850
        %v1877 = vpop.permute.xlu0 %1876
        %1879 = vset.pattern.permute.xlu0 1
        %1880 = vperm.xlu0 %1879, %v851
        %v1881 = vpop.permute.xlu0 %1880
        %1883 = vset.pattern.permute.xlu0 1
        %1884 = vperm.xlu0 %1883, %v852
        %v1885 = vpop.permute.xlu0 %1884
        %1887 = vset.pattern.permute.xlu0 1
        %1888 = vperm.xlu0 %1887, %v853
        %v1889 = vpop.permute.xlu0 %1888
        %1891 = vset.pattern.permute.xlu0 1
        %1892 = vperm.xlu0 %1891, %v854
        %v1893 = vpop.permute.xlu0 %1892
        %1895 = vset.pattern.permute.xlu0 1
        %1896 = vperm.xlu0 %1895, %v855
        %v1897 = vpop.permute.xlu0 %1896
        %1899 = vset.pattern.permute.xlu0 1
        %1900 = vperm.xlu0 %1899, %v856
        %v1901 = vpop.permute.xlu0 %1900
        %1903 = vset.pattern.permute.xlu0 1
        %1904 = vperm.xlu0 %1903, %v857
        %v1905 = vpop.permute.xlu0 %1904
        %1907 = vset.pattern.permute.xlu0 1
        %1908 = vperm.xlu0 %1907, %v858
        %v1909 = vpop.permute.xlu0 %1908
        %1911 = vset.pattern.permute.xlu0 1
        %1912 = vperm.xlu0 %1911, %v859
        %v1913 = vpop.permute.xlu0 %1912
        %1915 = vset.pattern.permute.xlu0 1
        %1916 = vperm.xlu0 %1915, %v860
        %v1917 = vpop.permute.xlu0 %1916
        %1919 = vset.pattern.permute.xlu0 1
        %1920 = vperm.xlu0 %1919, %v861
        %v1921 = vpop.permute.xlu0 %1920
        %1923 = vset.pattern.permute.xlu0 1
        %1924 = vperm.xlu0 %1923, %v862
        %v1925 = vpop.permute.xlu0 %1924
        %1927 = vset.pattern.permute.xlu0 1
        %1928 = vperm.xlu0 %1927, %v863
        %v1929 = vpop.permute.xlu0 %1928
        %1931 = vset.pattern.permute.xlu0 1
        %1932 = vperm.xlu0 %1931, %v864
        %v1933 = vpop.permute.xlu0 %1932
        %1935 = vset.pattern.permute.xlu0 1
        %1936 = vperm.xlu0 %1935, %v865
        %v1937 = vpop.permute.xlu0 %1936
        %1939 = vset.pattern.permute.xlu0 1
        %1940 = vperm.xlu0 %1939, %v866
        %v1941 = vpop.permute.xlu0 %1940
        %1943 = vset.pattern.permute.xlu0 1
        %1944 = vperm.xlu0 %1943, %v867
        %v1945 = vpop.permute.xlu0 %1944
        %1947 = vset.pattern.permute.xlu0 1
        %1948 = vperm.xlu0 %1947, %v868
        %v1949 = vpop.permute.xlu0 %1948
        %1951 = vset.pattern.permute.xlu0 1
        %1952 = vperm.xlu0 %1951, %v869
        %v1953 = vpop.permute.xlu0 %1952
        %1955 = vset.pattern.permute.xlu0 1
        %1956 = vperm.xlu0 %1955, %v870
        %v1957 = vpop.permute.xlu0 %1956
        %1959 = vset.pattern.permute.xlu0 1
        %1960 = vperm.xlu0 %1959, %v871
        %v1961 = vpop.permute.xlu0 %1960
        %1963 = vset.pattern.permute.xlu0 1
        %1964 = vperm.xlu0 %1963, %v872
        %v1965 = vpop.permute.xlu0 %1964
        %1967 = vset.pattern.permute.xlu0 1
        %1968 = vperm.xlu0 %1967, %v873
        %v1969 = vpop.permute.xlu0 %1968
        %1971 = vset.pattern.permute.xlu0 1
        %1972 = vperm.xlu0 %1971, %v874
        %v1973 = vpop.permute.xlu0 %1972
        %1975 = vset.pattern.permute.xlu0 1
        %1976 = vperm.xlu0 %1975, %v875
        %v1977 = vpop.permute.xlu0 %1976
        %1979 = vset.pattern.permute.xlu0 1
        %1980 = vperm.xlu0 %1979, %v876
        %v1981 = vpop.permute.xlu0 %1980
        %1983 = vset.pattern.permute.xlu0 1
        %1984 = vperm.xlu0 %1983, %v877
        %v1985 = vpop.permute.xlu0 %1984
        %1987 = vset.pattern.permute.xlu0 1
        %1988 = vperm.xlu0 %1987, %v878
        %v1989 = vpop.permute.xlu0 %1988
        %1991 = vset.pattern.permute.xlu0 1
        %1992 = vperm.xlu0 %1991, %v879
        %v1993 = vpop.permute.xlu0 %1992
        %1995 = vset.pattern.permute.xlu0 1
        %1996 = vperm.xlu0 %1995, %v880
        %v1997 = vpop.permute.xlu0 %1996
        %1999 = vset.pattern.permute.xlu0 1
        %2000 = vperm.xlu0 %1999, %v881
        %v2001 = vpop.permute.xlu0 %2000
        %2003 = vset.pattern.permute.xlu0 1
        %2004 = vperm.xlu0 %2003, %v882
        %v2005 = vpop.permute.xlu0 %2004
        %2007 = vset.pattern.permute.xlu0 1
        %2008 = vperm.xlu0 %2007, %v883
        %v2009 = vpop.permute.xlu0 %2008
        %2011 = vset.pattern.permute.xlu0 1
        %2012 = vperm.xlu0 %2011, %v884
        %v2013 = vpop.permute.xlu0 %2012
        %2015 = vset.pattern.permute.xlu0 1
        %2016 = vperm.xlu0 %2015, %v885
        %v2017 = vpop.permute.xlu0 %2016
        %2019 = vset.pattern.permute.xlu0 1
        %2020 = vperm.xlu0 %2019, %v886
        %v2021 = vpop.permute.xlu0 %2020
        %2023 = vset.pattern.permute.xlu0 1
        %2024 = vperm.xlu0 %2023, %v887
        %v2025 = vpop.permute.xlu0 %2024
        %2027 = vset.pattern.permute.xlu0 1
        %2028 = vperm.xlu0 %2027, %v888
        %v2029 = vpop.permute.xlu0 %2028
        %2031 = vset.pattern.permute.xlu0 1
        %2032 = vperm.xlu0 %2031, %v889
        %v2033 = vpop.permute.xlu0 %2032
        %2035 = vset.pattern.permute.xlu0 1
        %2036 = vperm.xlu0 %2035, %v890
        %v2037 = vpop.permute.xlu0 %2036
        %2039 = vset.pattern.permute.xlu0 1
        %2040 = vperm.xlu0 %2039, %v891
        %v2041 = vpop.permute.xlu0 %2040
        %2043 = vset.pattern.permute.xlu0 1
        %2044 = vperm.xlu0 %2043, %v892
        %v2045 = vpop.permute.xlu0 %2044
        %2047 = vset.pattern.permute.xlu0 1
        %2048 = vperm.xlu0 %2047, %v893
        %v2049 = vpop.permute.xlu0 %2048
        %2051 = vset.pattern.permute.xlu0 1
        %2052 = vperm.xlu0 %2051, %v894
        %v2053 = vpop.permute.xlu0 %2052
        %2055 = vset.pattern.permute.xlu0 1
        %2056 = vperm.xlu0 %2055, %v895
        %v2057 = vpop.permute.xlu0 %2056
        %2059 = vset.pattern.permute.xlu0 1
        %2060 = vperm.xlu0 %2059, %v896
        %v2061 = vpop.permute.xlu0 %2060
        %2063 = vset.pattern.permute.xlu0 1
        %2064 = vperm.xlu0 %2063, %v897
        %v2065 = vpop.permute.xlu0 %2064
        %2067 = vset.pattern.permute.xlu0 1
        %2068 = vperm.xlu0 %2067, %v898
        %v2069 = vpop.permute.xlu0 %2068
        %2071 = vset.pattern.permute.xlu0 1
        %2072 = vperm.xlu0 %2071, %v899
        %v2073 = vpop.permute.xlu0 %2072
        %2075 = vset.pattern.permute.xlu0 1
        %2076 = vperm.xlu0 %2075, %v900
        %v2077 = vpop.permute.xlu0 %2076
        %2079 = vset.pattern.permute.xlu0 1
        %2080 = vperm.xlu0 %2079, %v901
        %v2081 = vpop.permute.xlu0 %2080
        %2083 = vset.pattern.permute.xlu0 1
        %2084 = vperm.xlu0 %2083, %v902
        %v2085 = vpop.permute.xlu0 %2084
        %2087 = vset.pattern.permute.xlu0 1
        %2088 = vperm.xlu0 %2087, %v903
        %v2089 = vpop.permute.xlu0 %2088
        %2091 = vset.pattern.permute.xlu0 1
        %2092 = vperm.xlu0 %2091, %v904
        %v2093 = vpop.permute.xlu0 %2092
        %2095 = vset.pattern.permute.xlu0 1
        %2096 = vperm.xlu0 %2095, %v905
        %v2097 = vpop.permute.xlu0 %2096
        %2099 = vset.pattern.permute.xlu0 1
        %2100 = vperm.xlu0 %2099, %v906
        %v2101 = vpop.permute.xlu0 %2100
        %2103 = vset.pattern.permute.xlu0 1
        %2104 = vperm.xlu0 %2103, %v907
        %v2105 = vpop.permute.xlu0 %2104
        %2107 = vset.pattern.permute.xlu0 1
        %2108 = vperm.xlu0 %2107, %v908
        %v2109 = vpop.permute.xlu0 %2108
        %2111 = vset.pattern.permute.xlu0 1
        %2112 = vperm.xlu0 %2111, %v909
        %v2113 = vpop.permute.xlu0 %2112
        %2115 = vset.pattern.permute.xlu0 1
        %2116 = vperm.xlu0 %2115, %v910
        %v2117 = vpop.permute.xlu0 %2116
        %2119 = vset.pattern.permute.xlu0 1
        %2120 = vperm.xlu0 %2119, %v911
        %v2121 = vpop.permute.xlu0 %2120
        %2123 = vset.pattern.permute.xlu0 1
        %2124 = vperm.xlu0 %2123, %v912
        %v2125 = vpop.permute.xlu0 %2124
        %2127 = vset.pattern.permute.xlu0 1
        %2128 = vperm.xlu0 %2127, %v913
        %v2129 = vpop.permute.xlu0 %2128
        %2131 = vset.pattern.permute.xlu0 1
        %2132 = vperm.xlu0 %2131, %v914
        %v2133 = vpop.permute.xlu0 %2132
        %2135 = vset.pattern.permute.xlu0 1
        %2136 = vperm.xlu0 %2135, %v915
        %v2137 = vpop.permute.xlu0 %2136
        %2139 = vset.pattern.permute.xlu0 1
        %2140 = vperm.xlu0 %2139, %v916
        %v2141 = vpop.permute.xlu0 %2140
        %2143 = vset.pattern.permute.xlu0 1
        %2144 = vperm.xlu0 %2143, %v917
        %v2145 = vpop.permute.xlu0 %2144
        %2147 = vset.pattern.permute.xlu0 1
        %2148 = vperm.xlu0 %2147, %v918
        %v2149 = vpop.permute.xlu0 %2148
        %2151 = vset.pattern.permute.xlu0 1
        %2152 = vperm.xlu0 %2151, %v919
        %v2153 = vpop.permute.xlu0 %2152
        %2155 = vset.pattern.permute.xlu0 1
        %2156 = vperm.xlu0 %2155, %v920
        %v2157 = vpop.permute.xlu0 %2156
        %2159 = vset.pattern.permute.xlu0 1
        %2160 = vperm.xlu0 %2159, %v921
        %v2161 = vpop.permute.xlu0 %2160
        %2163 = vset.pattern.permute.xlu0 1
        %2164 = vperm.xlu0 %2163, %v922
        %v2165 = vpop.permute.xlu0 %2164
        %2167 = vset.pattern.permute.xlu0 1
        %2168 = vperm.xlu0 %2167, %v923
        %v2169 = vpop.permute.xlu0 %2168
        %2171 = vset.pattern.permute.xlu0 1
        %2172 = vperm.xlu0 %2171, %v924
        %v2173 = vpop.permute.xlu0 %2172
        %2175 = vset.pattern.permute.xlu0 1
        %2176 = vperm.xlu0 %2175, %v925
        %v2177 = vpop.permute.xlu0 %2176
        %2179 = vset.pattern.permute.xlu0 1
        %2180 = vperm.xlu0 %2179, %v926
        %v2181 = vpop.permute.xlu0 %2180
        %2183 = vset.pattern.permute.xlu0 1
        %2184 = vperm.xlu0 %2183, %v927
        %v2185 = vpop.permute.xlu0 %2184
        %2187 = vset.pattern.permute.xlu0 1
        %2188 = vperm.xlu0 %2187, %v928
        %v2189 = vpop.permute.xlu0 %2188
        %2191 = vset.pattern.permute.xlu0 1
        %2192 = vperm.xlu0 %2191, %v929
        %v2193 = vpop.permute.xlu0 %2192
        %2195 = vset.pattern.permute.xlu0 1
        %2196 = vperm.xlu0 %2195, %v930
        %v2197 = vpop.permute.xlu0 %2196
        %2199 = vset.pattern.permute.xlu0 1
        %2200 = vperm.xlu0 %2199, %v931
        %v2201 = vpop.permute.xlu0 %2200
        %2203 = vset.pattern.permute.xlu0 1
        %2204 = vperm.xlu0 %2203, %v932
        %v2205 = vpop.permute.xlu0 %2204
        %2207 = vset.pattern.permute.xlu0 1
        %2208 = vperm.xlu0 %2207, %v933
        %v2209 = vpop.permute.xlu0 %2208
        %2211 = vset.pattern.permute.xlu0 1
        %2212 = vperm.xlu0 %2211, %v934
        %v2213 = vpop.permute.xlu0 %2212
        %2215 = vset.pattern.permute.xlu0 1
        %2216 = vperm.xlu0 %2215, %v935
        %v2217 = vpop.permute.xlu0 %2216
        %2219 = vset.pattern.permute.xlu0 1
        %2220 = vperm.xlu0 %2219, %v936
        %v2221 = vpop.permute.xlu0 %2220
        %v2223 = vlaneseq
        %v2224 = vshrl.u32 %v2223, 7
        %v2225 = vsub.s32 1, %v2224
        %v2226 = vrot.slane %v937, %v2225
        %v2227 = vmul.f32 %v1713, %v2226
        %v2228 = vmul.f32 %v1717, %v2226
        %v2229 = vmul.f32 %v1721, %v2226
        %v2230 = vmul.f32 %v1725, %v2226
        %v2231 = vmul.f32 %v1729, %v2226
        %v2232 = vmul.f32 %v1733, %v2226
        %v2233 = vmul.f32 %v1737, %v2226
        %v2234 = vmul.f32 %v1741, %v2226
        %v2235 = vmul.f32 %v1745, %v2226
        %v2236 = vmul.f32 %v1749, %v2226
        %v2237 = vmul.f32 %v1753, %v2226
        %v2238 = vmul.f32 %v1757, %v2226
        %v2239 = vmul.f32 %v1761, %v2226
        %v2240 = vmul.f32 %v1765, %v2226
        %v2241 = vmul.f32 %v1769, %v2226
        %v2242 = vmul.f32 %v1773, %v2226
        %v2243 = vmul.f32 %v1777, %v2226
        %v2244 = vmul.f32 %v1781, %v2226
        %v2245 = vmul.f32 %v1785, %v2226
        %v2246 = vmul.f32 %v1789, %v2226
        %v2247 = vmul.f32 %v1793, %v2226
        %v2248 = vmul.f32 %v1797, %v2226
        %v2249 = vmul.f32 %v1801, %v2226
        %v2250 = vmul.f32 %v1805, %v2226
        %v2251 = vmul.f32 %v1809, %v2226
        %v2252 = vmul.f32 %v1813, %v2226
        %v2253 = vmul.f32 %v1817, %v2226
        %v2254 = vmul.f32 %v1821, %v2226
        %v2255 = vmul.f32 %v1825, %v2226
        %v2256 = vmul.f32 %v1829, %v2226
        %v2257 = vmul.f32 %v1833, %v2226
        %v2258 = vmul.f32 %v1837, %v2226
        %v2259 = vmul.f32 %v1841, %v2226
        %v2260 = vmul.f32 %v1845, %v2226
        %v2261 = vmul.f32 %v1849, %v2226
        %v2262 = vmul.f32 %v1853, %v2226
        %v2263 = vmul.f32 %v1857, %v2226
        %v2264 = vmul.f32 %v1861, %v2226
        %v2265 = vmul.f32 %v1865, %v2226
        %v2266 = vmul.f32 %v1869, %v2226
        %v2267 = vmul.f32 %v1873, %v2226
        %v2268 = vmul.f32 %v1877, %v2226
        %v2269 = vmul.f32 %v1881, %v2226
        %v2270 = vmul.f32 %v1885, %v2226
        %v2271 = vmul.f32 %v1889, %v2226
        %v2272 = vmul.f32 %v1893, %v2226
        %v2273 = vmul.f32 %v1897, %v2226
        %v2274 = vmul.f32 %v1901, %v2226
        %v2275 = vmul.f32 %v1905, %v2226
        %v2276 = vmul.f32 %v1909, %v2226
        %v2277 = vmul.f32 %v1913, %v2226
        %v2278 = vmul.f32 %v1917, %v2226
        %v2279 = vmul.f32 %v1921, %v2226
        %v2280 = vmul.f32 %v1925, %v2226
        %v2281 = vmul.f32 %v1929, %v2226
        %v2282 = vmul.f32 %v1933, %v2226
        %v2283 = vmul.f32 %v1937, %v2226
        %v2284 = vmul.f32 %v1941, %v2226
        %v2285 = vmul.f32 %v1945, %v2226
        %v2286 = vmul.f32 %v1949, %v2226
        %v2287 = vmul.f32 %v1953, %v2226
        %v2288 = vmul.f32 %v1957, %v2226
        %v2289 = vmul.f32 %v1961, %v2226
        %v2290 = vmul.f32 %v1965, %v2226
        %v2291 = vmul.f32 %v1969, %v2226
        %v2292 = vmul.f32 %v1973, %v2226
        %v2293 = vmul.f32 %v1977, %v2226
        %v2294 = vmul.f32 %v1981, %v2226
        %v2295 = vmul.f32 %v1985, %v2226
        %v2296 = vmul.f32 %v1989, %v2226
        %v2297 = vmul.f32 %v1993, %v2226
        %v2298 = vmul.f32 %v1997, %v2226
        %v2299 = vmul.f32 %v2001, %v2226
        %v2300 = vmul.f32 %v2005, %v2226
        %v2301 = vmul.f32 %v2009, %v2226
        %v2302 = vmul.f32 %v2013, %v2226
        %v2303 = vmul.f32 %v2017, %v2226
        %v2304 = vmul.f32 %v2021, %v2226
        %v2305 = vmul.f32 %v2025, %v2226
        %v2306 = vmul.f32 %v2029, %v2226
        %v2307 = vmul.f32 %v2033, %v2226
        %v2308 = vmul.f32 %v2037, %v2226
        %v2309 = vmul.f32 %v2041, %v2226
        %v2310 = vmul.f32 %v2045, %v2226
        %v2311 = vmul.f32 %v2049, %v2226
        %v2312 = vmul.f32 %v2053, %v2226
        %v2313 = vmul.f32 %v2057, %v2226
        %v2314 = vmul.f32 %v2061, %v2226
        %v2315 = vmul.f32 %v2065, %v2226
        %v2316 = vmul.f32 %v2069, %v2226
        %v2317 = vmul.f32 %v2073, %v2226
        %v2318 = vmul.f32 %v2077, %v2226
        %v2319 = vmul.f32 %v2081, %v2226
        %v2320 = vmul.f32 %v2085, %v2226
        %v2321 = vmul.f32 %v2089, %v2226
        %v2322 = vmul.f32 %v2093, %v2226
        %v2323 = vmul.f32 %v2097, %v2226
        %v2324 = vmul.f32 %v2101, %v2226
        %v2325 = vmul.f32 %v2105, %v2226
        %v2326 = vmul.f32 %v2109, %v2226
        %v2327 = vmul.f32 %v2113, %v2226
        %v2328 = vmul.f32 %v2117, %v2226
        %v2329 = vmul.f32 %v2121, %v2226
        %v2330 = vmul.f32 %v2125, %v2226
        %v2331 = vmul.f32 %v2129, %v2226
        %v2332 = vmul.f32 %v2133, %v2226
        %v2333 = vmul.f32 %v2137, %v2226
        %v2334 = vmul.f32 %v2141, %v2226
        %v2335 = vmul.f32 %v2145, %v2226
        %v2336 = vmul.f32 %v2149, %v2226
        %v2337 = vmul.f32 %v2153, %v2226
        %v2338 = vmul.f32 %v2157, %v2226
        %v2339 = vmul.f32 %v2161, %v2226
        %v2340 = vmul.f32 %v2165, %v2226
        %v2341 = vmul.f32 %v2169, %v2226
        %v2342 = vmul.f32 %v2173, %v2226
        %v2343 = vmul.f32 %v2177, %v2226
        %v2344 = vmul.f32 %v2181, %v2226
        %v2345 = vmul.f32 %v2185, %v2226
        %v2346 = vmul.f32 %v2189, %v2226
        %v2347 = vmul.f32 %v2193, %v2226
        %v2348 = vmul.f32 %v2197, %v2226
        %v2349 = vmul.f32 %v2201, %v2226
        %v2350 = vmul.f32 %v2205, %v2226
        %v2351 = vmul.f32 %v2209, %v2226
        %v2352 = vmul.f32 %v2213, %v2226
        %v2353 = vmul.f32 %v2217, %v2226
        %v2354 = vmul.f32 %v2221, %v2226
        %v2355 = vadd.f32 %v1583, %v2227
        %v2356 = vadd.f32 %v1584, %v2228
        %v2357 = vadd.f32 %v1585, %v2229
        %v2358 = vadd.f32 %v1586, %v2230
        %v2359 = vadd.f32 %v1587, %v2231
        %v2360 = vadd.f32 %v1588, %v2232
        %v2361 = vadd.f32 %v1589, %v2233
        %v2362 = vadd.f32 %v1590, %v2234
        %v2363 = vadd.f32 %v1591, %v2235
        %v2364 = vadd.f32 %v1592, %v2236
        %v2365 = vadd.f32 %v1593, %v2237
        %v2366 = vadd.f32 %v1594, %v2238
        %v2367 = vadd.f32 %v1595, %v2239
        %v2368 = vadd.f32 %v1596, %v2240
        %v2369 = vadd.f32 %v1597, %v2241
        %v2370 = vadd.f32 %v1598, %v2242
        %v2371 = vadd.f32 %v1599, %v2243
        %v2372 = vadd.f32 %v1600, %v2244
        %v2373 = vadd.f32 %v1601, %v2245
        %v2374 = vadd.f32 %v1602, %v2246
        %v2375 = vadd.f32 %v1603, %v2247
        %v2376 = vadd.f32 %v1604, %v2248
        %v2377 = vadd.f32 %v1605, %v2249
        %v2378 = vadd.f32 %v1606, %v2250
        %v2379 = vadd.f32 %v1607, %v2251
        %v2380 = vadd.f32 %v1608, %v2252
        %v2381 = vadd.f32 %v1609, %v2253
        %v2382 = vadd.f32 %v1610, %v2254
        %v2383 = vadd.f32 %v1611, %v2255
        %v2384 = vadd.f32 %v1612, %v2256
        %v2385 = vadd.f32 %v1613, %v2257
        %v2386 = vadd.f32 %v1614, %v2258
        %v2387 = vadd.f32 %v1615, %v2259
        %v2388 = vadd.f32 %v1616, %v2260
        %v2389 = vadd.f32 %v1617, %v2261
        %v2390 = vadd.f32 %v1618, %v2262
        %v2391 = vadd.f32 %v1619, %v2263
        %v2392 = vadd.f32 %v1620, %v2264
        %v2393 = vadd.f32 %v1621, %v2265
        %v2394 = vadd.f32 %v1622, %v2266
        %v2395 = vadd.f32 %v1623, %v2267
        %v2396 = vadd.f32 %v1624, %v2268
        %v2397 = vadd.f32 %v1625, %v2269
        %v2398 = vadd.f32 %v1626, %v2270
        %v2399 = vadd.f32 %v1627, %v2271
        %v2400 = vadd.f32 %v1628, %v2272
        %v2401 = vadd.f32 %v1629, %v2273
        %v2402 = vadd.f32 %v1630, %v2274
        %v2403 = vadd.f32 %v1631, %v2275
        %v2404 = vadd.f32 %v1632, %v2276
        %v2405 = vadd.f32 %v1633, %v2277
        %v2406 = vadd.f32 %v1634, %v2278
        %v2407 = vadd.f32 %v1635, %v2279
        %v2408 = vadd.f32 %v1636, %v2280
        %v2409 = vadd.f32 %v1637, %v2281
        %v2410 = vadd.f32 %v1638, %v2282
        %v2411 = vadd.f32 %v1639, %v2283
        %v2412 = vadd.f32 %v1640, %v2284
        %v2413 = vadd.f32 %v1641, %v2285
        %v2414 = vadd.f32 %v1642, %v2286
        %v2415 = vadd.f32 %v1643, %v2287
        %v2416 = vadd.f32 %v1644, %v2288
        %v2417 = vadd.f32 %v1645, %v2289
        %v2418 = vadd.f32 %v1646, %v2290
        %v2419 = vadd.f32 %v1647, %v2291
        %v2420 = vadd.f32 %v1648, %v2292
        %v2421 = vadd.f32 %v1649, %v2293
        %v2422 = vadd.f32 %v1650, %v2294
        %v2423 = vadd.f32 %v1651, %v2295
        %v2424 = vadd.f32 %v1652, %v2296
        %v2425 = vadd.f32 %v1653, %v2297
        %v2426 = vadd.f32 %v1654, %v2298
        %v2427 = vadd.f32 %v1655, %v2299
        %v2428 = vadd.f32 %v1656, %v2300
        %v2429 = vadd.f32 %v1657, %v2301
        %v2430 = vadd.f32 %v1658, %v2302
        %v2431 = vadd.f32 %v1659, %v2303
        %v2432 = vadd.f32 %v1660, %v2304
        %v2433 = vadd.f32 %v1661, %v2305
        %v2434 = vadd.f32 %v1662, %v2306
        %v2435 = vadd.f32 %v1663, %v2307
        %v2436 = vadd.f32 %v1664, %v2308
        %v2437 = vadd.f32 %v1665, %v2309
        %v2438 = vadd.f32 %v1666, %v2310
        %v2439 = vadd.f32 %v1667, %v2311
        %v2440 = vadd.f32 %v1668, %v2312
        %v2441 = vadd.f32 %v1669, %v2313
        %v2442 = vadd.f32 %v1670, %v2314
        %v2443 = vadd.f32 %v1671, %v2315
        %v2444 = vadd.f32 %v1672, %v2316
        %v2445 = vadd.f32 %v1673, %v2317
        %v2446 = vadd.f32 %v1674, %v2318
        %v2447 = vadd.f32 %v1675, %v2319
        %v2448 = vadd.f32 %v1676, %v2320
        %v2449 = vadd.f32 %v1677, %v2321
        %v2450 = vadd.f32 %v1678, %v2322
        %v2451 = vadd.f32 %v1679, %v2323
        %v2452 = vadd.f32 %v1680, %v2324
        %v2453 = vadd.f32 %v1681, %v2325
        %v2454 = vadd.f32 %v1682, %v2326
        %v2455 = vadd.f32 %v1683, %v2327
        %v2456 = vadd.f32 %v1684, %v2328
        %v2457 = vadd.f32 %v1685, %v2329
        %v2458 = vadd.f32 %v1686, %v2330
        %v2459 = vadd.f32 %v1687, %v2331
        %v2460 = vadd.f32 %v1688, %v2332
        %v2461 = vadd.f32 %v1689, %v2333
        %v2462 = vadd.f32 %v1690, %v2334
        %v2463 = vadd.f32 %v1691, %v2335
        %v2464 = vadd.f32 %v1692, %v2336
        %v2465 = vadd.f32 %v1693, %v2337
        %v2466 = vadd.f32 %v1694, %v2338
        %v2467 = vadd.f32 %v1695, %v2339
        %v2468 = vadd.f32 %v1696, %v2340
        %v2469 = vadd.f32 %v1697, %v2341
        %v2470 = vadd.f32 %v1698, %v2342
        %v2471 = vadd.f32 %v1699, %v2343
        %v2472 = vadd.f32 %v1700, %v2344
        %v2473 = vadd.f32 %v1701, %v2345
        %v2474 = vadd.f32 %v1702, %v2346
        %v2475 = vadd.f32 %v1703, %v2347
        %v2476 = vadd.f32 %v1704, %v2348
        %v2477 = vadd.f32 %v1705, %v2349
        %v2478 = vadd.f32 %v1706, %v2350
        %v2479 = vadd.f32 %v1707, %v2351
        %v2480 = vadd.f32 %v1708, %v2352
        %v2481 = vadd.f32 %v1709, %v2353
        %v2482 = vadd.f32 %v1710, %v2354
        %2483 = vset.pattern.permute.xlu0 2
        %2484 = vperm.xlu0 %2483, %v809
        %v2485 = vpop.permute.xlu0 %2484
        %2487 = vset.pattern.permute.xlu0 2
        %2488 = vperm.xlu0 %2487, %v810
        %v2489 = vpop.permute.xlu0 %2488
        %2491 = vset.pattern.permute.xlu0 2
        %2492 = vperm.xlu0 %2491, %v811
        %v2493 = vpop.permute.xlu0 %2492
        %2495 = vset.pattern.permute.xlu0 2
        %2496 = vperm.xlu0 %2495, %v812
        %v2497 = vpop.permute.xlu0 %2496
        %2499 = vset.pattern.permute.xlu0 2
        %2500 = vperm.xlu0 %2499, %v813
        %v2501 = vpop.permute.xlu0 %2500
        %2503 = vset.pattern.permute.xlu0 2
        %2504 = vperm.xlu0 %2503, %v814
        %v2505 = vpop.permute.xlu0 %2504
        %2507 = vset.pattern.permute.xlu0 2
        %2508 = vperm.xlu0 %2507, %v815
        %v2509 = vpop.permute.xlu0 %2508
        %2511 = vset.pattern.permute.xlu0 2
        %2512 = vperm.xlu0 %2511, %v816
        %v2513 = vpop.permute.xlu0 %2512
        %2515 = vset.pattern.permute.xlu0 2
        %2516 = vperm.xlu0 %2515, %v817
        %v2517 = vpop.permute.xlu0 %2516
        %2519 = vset.pattern.permute.xlu0 2
        %2520 = vperm.xlu0 %2519, %v818
        %v2521 = vpop.permute.xlu0 %2520
        %2523 = vset.pattern.permute.xlu0 2
        %2524 = vperm.xlu0 %2523, %v819
        %v2525 = vpop.permute.xlu0 %2524
        %2527 = vset.pattern.permute.xlu0 2
        %2528 = vperm.xlu0 %2527, %v820
        %v2529 = vpop.permute.xlu0 %2528
        %2531 = vset.pattern.permute.xlu0 2
        %2532 = vperm.xlu0 %2531, %v821
        %v2533 = vpop.permute.xlu0 %2532
        %2535 = vset.pattern.permute.xlu0 2
        %2536 = vperm.xlu0 %2535, %v822
        %v2537 = vpop.permute.xlu0 %2536
        %2539 = vset.pattern.permute.xlu0 2
        %2540 = vperm.xlu0 %2539, %v823
        %v2541 = vpop.permute.xlu0 %2540
        %2543 = vset.pattern.permute.xlu0 2
        %2544 = vperm.xlu0 %2543, %v824
        %v2545 = vpop.permute.xlu0 %2544
        %2547 = vset.pattern.permute.xlu0 2
        %2548 = vperm.xlu0 %2547, %v825
        %v2549 = vpop.permute.xlu0 %2548
        %2551 = vset.pattern.permute.xlu0 2
        %2552 = vperm.xlu0 %2551, %v826
        %v2553 = vpop.permute.xlu0 %2552
        %2555 = vset.pattern.permute.xlu0 2
        %2556 = vperm.xlu0 %2555, %v827
        %v2557 = vpop.permute.xlu0 %2556
        %2559 = vset.pattern.permute.xlu0 2
        %2560 = vperm.xlu0 %2559, %v828
        %v2561 = vpop.permute.xlu0 %2560
        %2563 = vset.pattern.permute.xlu0 2
        %2564 = vperm.xlu0 %2563, %v829
        %v2565 = vpop.permute.xlu0 %2564
        %2567 = vset.pattern.permute.xlu0 2
        %2568 = vperm.xlu0 %2567, %v830
        %v2569 = vpop.permute.xlu0 %2568
        %2571 = vset.pattern.permute.xlu0 2
        %2572 = vperm.xlu0 %2571, %v831
        %v2573 = vpop.permute.xlu0 %2572
        %2575 = vset.pattern.permute.xlu0 2
        %2576 = vperm.xlu0 %2575, %v832
        %v2577 = vpop.permute.xlu0 %2576
        %2579 = vset.pattern.permute.xlu0 2
        %2580 = vperm.xlu0 %2579, %v833
        %v2581 = vpop.permute.xlu0 %2580
        %2583 = vset.pattern.permute.xlu0 2
        %2584 = vperm.xlu0 %2583, %v834
        %v2585 = vpop.permute.xlu0 %2584
        %2587 = vset.pattern.permute.xlu0 2
        %2588 = vperm.xlu0 %2587, %v835
        %v2589 = vpop.permute.xlu0 %2588
        %2591 = vset.pattern.permute.xlu0 2
        %2592 = vperm.xlu0 %2591, %v836
        %v2593 = vpop.permute.xlu0 %2592
        %2595 = vset.pattern.permute.xlu0 2
        %2596 = vperm.xlu0 %2595, %v837
        %v2597 = vpop.permute.xlu0 %2596
        %2599 = vset.pattern.permute.xlu0 2
        %2600 = vperm.xlu0 %2599, %v838
        %v2601 = vpop.permute.xlu0 %2600
        %2603 = vset.pattern.permute.xlu0 2
        %2604 = vperm.xlu0 %2603, %v839
        %v2605 = vpop.permute.xlu0 %2604
        %2607 = vset.pattern.permute.xlu0 2
        %2608 = vperm.xlu0 %2607, %v840
        %v2609 = vpop.permute.xlu0 %2608
        %2611 = vset.pattern.permute.xlu0 2
        %2612 = vperm.xlu0 %2611, %v841
        %v2613 = vpop.permute.xlu0 %2612
        %2615 = vset.pattern.permute.xlu0 2
        %2616 = vperm.xlu0 %2615, %v842
        %v2617 = vpop.permute.xlu0 %2616
        %2619 = vset.pattern.permute.xlu0 2
        %2620 = vperm.xlu0 %2619, %v843
        %v2621 = vpop.permute.xlu0 %2620
        %2623 = vset.pattern.permute.xlu0 2
        %2624 = vperm.xlu0 %2623, %v844
        %v2625 = vpop.permute.xlu0 %2624
        %2627 = vset.pattern.permute.xlu0 2
        %2628 = vperm.xlu0 %2627, %v845
        %v2629 = vpop.permute.xlu0 %2628
        %2631 = vset.pattern.permute.xlu0 2
        %2632 = vperm.xlu0 %2631, %v846
        %v2633 = vpop.permute.xlu0 %2632
        %2635 = vset.pattern.permute.xlu0 2
        %2636 = vperm.xlu0 %2635, %v847
        %v2637 = vpop.permute.xlu0 %2636
        %2639 = vset.pattern.permute.xlu0 2
        %2640 = vperm.xlu0 %2639, %v848
        %v2641 = vpop.permute.xlu0 %2640
        %2643 = vset.pattern.permute.xlu0 2
        %2644 = vperm.xlu0 %2643, %v849
        %v2645 = vpop.permute.xlu0 %2644
        %2647 = vset.pattern.permute.xlu0 2
        %2648 = vperm.xlu0 %2647, %v850
        %v2649 = vpop.permute.xlu0 %2648
        %2651 = vset.pattern.permute.xlu0 2
        %2652 = vperm.xlu0 %2651, %v851
        %v2653 = vpop.permute.xlu0 %2652
        %2655 = vset.pattern.permute.xlu0 2
        %2656 = vperm.xlu0 %2655, %v852
        %v2657 = vpop.permute.xlu0 %2656
        %2659 = vset.pattern.permute.xlu0 2
        %2660 = vperm.xlu0 %2659, %v853
        %v2661 = vpop.permute.xlu0 %2660
        %2663 = vset.pattern.permute.xlu0 2
        %2664 = vperm.xlu0 %2663, %v854
        %v2665 = vpop.permute.xlu0 %2664
        %2667 = vset.pattern.permute.xlu0 2
        %2668 = vperm.xlu0 %2667, %v855
        %v2669 = vpop.permute.xlu0 %2668
        %2671 = vset.pattern.permute.xlu0 2
        %2672 = vperm.xlu0 %2671, %v856
        %v2673 = vpop.permute.xlu0 %2672
        %2675 = vset.pattern.permute.xlu0 2
        %2676 = vperm.xlu0 %2675, %v857
        %v2677 = vpop.permute.xlu0 %2676
        %2679 = vset.pattern.permute.xlu0 2
        %2680 = vperm.xlu0 %2679, %v858
        %v2681 = vpop.permute.xlu0 %2680
        %2683 = vset.pattern.permute.xlu0 2
        %2684 = vperm.xlu0 %2683, %v859
        %v2685 = vpop.permute.xlu0 %2684
        %2687 = vset.pattern.permute.xlu0 2
        %2688 = vperm.xlu0 %2687, %v860
        %v2689 = vpop.permute.xlu0 %2688
        %2691 = vset.pattern.permute.xlu0 2
        %2692 = vperm.xlu0 %2691, %v861
        %v2693 = vpop.permute.xlu0 %2692
        %2695 = vset.pattern.permute.xlu0 2
        %2696 = vperm.xlu0 %2695, %v862
        %v2697 = vpop.permute.xlu0 %2696
        %2699 = vset.pattern.permute.xlu0 2
        %2700 = vperm.xlu0 %2699, %v863
        %v2701 = vpop.permute.xlu0 %2700
        %2703 = vset.pattern.permute.xlu0 2
        %2704 = vperm.xlu0 %2703, %v864
        %v2705 = vpop.permute.xlu0 %2704
        %2707 = vset.pattern.permute.xlu0 2
        %2708 = vperm.xlu0 %2707, %v865
        %v2709 = vpop.permute.xlu0 %2708
        %2711 = vset.pattern.permute.xlu0 2
        %2712 = vperm.xlu0 %2711, %v866
        %v2713 = vpop.permute.xlu0 %2712
        %2715 = vset.pattern.permute.xlu0 2
        %2716 = vperm.xlu0 %2715, %v867
        %v2717 = vpop.permute.xlu0 %2716
        %2719 = vset.pattern.permute.xlu0 2
        %2720 = vperm.xlu0 %2719, %v868
        %v2721 = vpop.permute.xlu0 %2720
        %2723 = vset.pattern.permute.xlu0 2
        %2724 = vperm.xlu0 %2723, %v869
        %v2725 = vpop.permute.xlu0 %2724
        %2727 = vset.pattern.permute.xlu0 2
        %2728 = vperm.xlu0 %2727, %v870
        %v2729 = vpop.permute.xlu0 %2728
        %2731 = vset.pattern.permute.xlu0 2
        %2732 = vperm.xlu0 %2731, %v871
        %v2733 = vpop.permute.xlu0 %2732
        %2735 = vset.pattern.permute.xlu0 2
        %2736 = vperm.xlu0 %2735, %v872
        %v2737 = vpop.permute.xlu0 %2736
        %2739 = vset.pattern.permute.xlu0 2
        %2740 = vperm.xlu0 %2739, %v873
        %v2741 = vpop.permute.xlu0 %2740
        %2743 = vset.pattern.permute.xlu0 2
        %2744 = vperm.xlu0 %2743, %v874
        %v2745 = vpop.permute.xlu0 %2744
        %2747 = vset.pattern.permute.xlu0 2
        %2748 = vperm.xlu0 %2747, %v875
        %v2749 = vpop.permute.xlu0 %2748
        %2751 = vset.pattern.permute.xlu0 2
        %2752 = vperm.xlu0 %2751, %v876
        %v2753 = vpop.permute.xlu0 %2752
        %2755 = vset.pattern.permute.xlu0 2
        %2756 = vperm.xlu0 %2755, %v877
        %v2757 = vpop.permute.xlu0 %2756
        %2759 = vset.pattern.permute.xlu0 2
        %2760 = vperm.xlu0 %2759, %v878
        %v2761 = vpop.permute.xlu0 %2760
        %2763 = vset.pattern.permute.xlu0 2
        %2764 = vperm.xlu0 %2763, %v879
        %v2765 = vpop.permute.xlu0 %2764
        %2767 = vset.pattern.permute.xlu0 2
        %2768 = vperm.xlu0 %2767, %v880
        %v2769 = vpop.permute.xlu0 %2768
        %2771 = vset.pattern.permute.xlu0 2
        %2772 = vperm.xlu0 %2771, %v881
        %v2773 = vpop.permute.xlu0 %2772
        %2775 = vset.pattern.permute.xlu0 2
        %2776 = vperm.xlu0 %2775, %v882
        %v2777 = vpop.permute.xlu0 %2776
        %2779 = vset.pattern.permute.xlu0 2
        %2780 = vperm.xlu0 %2779, %v883
        %v2781 = vpop.permute.xlu0 %2780
        %2783 = vset.pattern.permute.xlu0 2
        %2784 = vperm.xlu0 %2783, %v884
        %v2785 = vpop.permute.xlu0 %2784
        %2787 = vset.pattern.permute.xlu0 2
        %2788 = vperm.xlu0 %2787, %v885
        %v2789 = vpop.permute.xlu0 %2788
        %2791 = vset.pattern.permute.xlu0 2
        %2792 = vperm.xlu0 %2791, %v886
        %v2793 = vpop.permute.xlu0 %2792
        %2795 = vset.pattern.permute.xlu0 2
        %2796 = vperm.xlu0 %2795, %v887
        %v2797 = vpop.permute.xlu0 %2796
        %2799 = vset.pattern.permute.xlu0 2
        %2800 = vperm.xlu0 %2799, %v888
        %v2801 = vpop.permute.xlu0 %2800
        %2803 = vset.pattern.permute.xlu0 2
        %2804 = vperm.xlu0 %2803, %v889
        %v2805 = vpop.permute.xlu0 %2804
        %2807 = vset.pattern.permute.xlu0 2
        %2808 = vperm.xlu0 %2807, %v890
        %v2809 = vpop.permute.xlu0 %2808
        %2811 = vset.pattern.permute.xlu0 2
        %2812 = vperm.xlu0 %2811, %v891
        %v2813 = vpop.permute.xlu0 %2812
        %2815 = vset.pattern.permute.xlu0 2
        %2816 = vperm.xlu0 %2815, %v892
        %v2817 = vpop.permute.xlu0 %2816
        %2819 = vset.pattern.permute.xlu0 2
        %2820 = vperm.xlu0 %2819, %v893
        %v2821 = vpop.permute.xlu0 %2820
        %2823 = vset.pattern.permute.xlu0 2
        %2824 = vperm.xlu0 %2823, %v894
        %v2825 = vpop.permute.xlu0 %2824
        %2827 = vset.pattern.permute.xlu0 2
        %2828 = vperm.xlu0 %2827, %v895
        %v2829 = vpop.permute.xlu0 %2828
        %2831 = vset.pattern.permute.xlu0 2
        %2832 = vperm.xlu0 %2831, %v896
        %v2833 = vpop.permute.xlu0 %2832
        %2835 = vset.pattern.permute.xlu0 2
        %2836 = vperm.xlu0 %2835, %v897
        %v2837 = vpop.permute.xlu0 %2836
        %2839 = vset.pattern.permute.xlu0 2
        %2840 = vperm.xlu0 %2839, %v898
        %v2841 = vpop.permute.xlu0 %2840
        %2843 = vset.pattern.permute.xlu0 2
        %2844 = vperm.xlu0 %2843, %v899
        %v2845 = vpop.permute.xlu0 %2844
        %2847 = vset.pattern.permute.xlu0 2
        %2848 = vperm.xlu0 %2847, %v900
        %v2849 = vpop.permute.xlu0 %2848
        %2851 = vset.pattern.permute.xlu0 2
        %2852 = vperm.xlu0 %2851, %v901
        %v2853 = vpop.permute.xlu0 %2852
        %2855 = vset.pattern.permute.xlu0 2
        %2856 = vperm.xlu0 %2855, %v902
        %v2857 = vpop.permute.xlu0 %2856
        %2859 = vset.pattern.permute.xlu0 2
        %2860 = vperm.xlu0 %2859, %v903
        %v2861 = vpop.permute.xlu0 %2860
        %2863 = vset.pattern.permute.xlu0 2
        %2864 = vperm.xlu0 %2863, %v904
        %v2865 = vpop.permute.xlu0 %2864
        %2867 = vset.pattern.permute.xlu0 2
        %2868 = vperm.xlu0 %2867, %v905
        %v2869 = vpop.permute.xlu0 %2868
        %2871 = vset.pattern.permute.xlu0 2
        %2872 = vperm.xlu0 %2871, %v906
        %v2873 = vpop.permute.xlu0 %2872
        %2875 = vset.pattern.permute.xlu0 2
        %2876 = vperm.xlu0 %2875, %v907
        %v2877 = vpop.permute.xlu0 %2876
        %2879 = vset.pattern.permute.xlu0 2
        %2880 = vperm.xlu0 %2879, %v908
        %v2881 = vpop.permute.xlu0 %2880
        %2883 = vset.pattern.permute.xlu0 2
        %2884 = vperm.xlu0 %2883, %v909
        %v2885 = vpop.permute.xlu0 %2884
        %2887 = vset.pattern.permute.xlu0 2
        %2888 = vperm.xlu0 %2887, %v910
        %v2889 = vpop.permute.xlu0 %2888
        %2891 = vset.pattern.permute.xlu0 2
        %2892 = vperm.xlu0 %2891, %v911
        %v2893 = vpop.permute.xlu0 %2892
        %2895 = vset.pattern.permute.xlu0 2
        %2896 = vperm.xlu0 %2895, %v912
        %v2897 = vpop.permute.xlu0 %2896
        %2899 = vset.pattern.permute.xlu0 2
        %2900 = vperm.xlu0 %2899, %v913
        %v2901 = vpop.permute.xlu0 %2900
        %2903 = vset.pattern.permute.xlu0 2
        %2904 = vperm.xlu0 %2903, %v914
        %v2905 = vpop.permute.xlu0 %2904
        %2907 = vset.pattern.permute.xlu0 2
        %2908 = vperm.xlu0 %2907, %v915
        %v2909 = vpop.permute.xlu0 %2908
        %2911 = vset.pattern.permute.xlu0 2
        %2912 = vperm.xlu0 %2911, %v916
        %v2913 = vpop.permute.xlu0 %2912
        %2915 = vset.pattern.permute.xlu0 2
        %2916 = vperm.xlu0 %2915, %v917
        %v2917 = vpop.permute.xlu0 %2916
        %2919 = vset.pattern.permute.xlu0 2
        %2920 = vperm.xlu0 %2919, %v918
        %v2921 = vpop.permute.xlu0 %2920
        %2923 = vset.pattern.permute.xlu0 2
        %2924 = vperm.xlu0 %2923, %v919
        %v2925 = vpop.permute.xlu0 %2924
        %2927 = vset.pattern.permute.xlu0 2
        %2928 = vperm.xlu0 %2927, %v920
        %v2929 = vpop.permute.xlu0 %2928
        %2931 = vset.pattern.permute.xlu0 2
        %2932 = vperm.xlu0 %2931, %v921
        %v2933 = vpop.permute.xlu0 %2932
        %2935 = vset.pattern.permute.xlu0 2
        %2936 = vperm.xlu0 %2935, %v922
        %v2937 = vpop.permute.xlu0 %2936
        %2939 = vset.pattern.permute.xlu0 2
        %2940 = vperm.xlu0 %2939, %v923
        %v2941 = vpop.permute.xlu0 %2940
        %2943 = vset.pattern.permute.xlu0 2
        %2944 = vperm.xlu0 %2943, %v924
        %v2945 = vpop.permute.xlu0 %2944
        %2947 = vset.pattern.permute.xlu0 2
        %2948 = vperm.xlu0 %2947, %v925
        %v2949 = vpop.permute.xlu0 %2948
        %2951 = vset.pattern.permute.xlu0 2
        %2952 = vperm.xlu0 %2951, %v926
        %v2953 = vpop.permute.xlu0 %2952
        %2955 = vset.pattern.permute.xlu0 2
        %2956 = vperm.xlu0 %2955, %v927
        %v2957 = vpop.permute.xlu0 %2956
        %2959 = vset.pattern.permute.xlu0 2
        %2960 = vperm.xlu0 %2959, %v928
        %v2961 = vpop.permute.xlu0 %2960
        %2963 = vset.pattern.permute.xlu0 2
        %2964 = vperm.xlu0 %2963, %v929
        %v2965 = vpop.permute.xlu0 %2964
        %2967 = vset.pattern.permute.xlu0 2
        %2968 = vperm.xlu0 %2967, %v930
        %v2969 = vpop.permute.xlu0 %2968
        %2971 = vset.pattern.permute.xlu0 2
        %2972 = vperm.xlu0 %2971, %v931
        %v2973 = vpop.permute.xlu0 %2972
        %2975 = vset.pattern.permute.xlu0 2
        %2976 = vperm.xlu0 %2975, %v932
        %v2977 = vpop.permute.xlu0 %2976
        %2979 = vset.pattern.permute.xlu0 2
        %2980 = vperm.xlu0 %2979, %v933
        %v2981 = vpop.permute.xlu0 %2980
        %2983 = vset.pattern.permute.xlu0 2
        %2984 = vperm.xlu0 %2983, %v934
        %v2985 = vpop.permute.xlu0 %2984
        %2987 = vset.pattern.permute.xlu0 2
        %2988 = vperm.xlu0 %2987, %v935
        %v2989 = vpop.permute.xlu0 %2988
        %2991 = vset.pattern.permute.xlu0 2
        %2992 = vperm.xlu0 %2991, %v936
        %v2993 = vpop.permute.xlu0 %2992
        %v2995 = vlaneseq
        %v2996 = vshrl.u32 %v2995, 7
        %v2997 = vsub.s32 2, %v2996
        %v2998 = vrot.slane %v937, %v2997
        %v2999 = vmul.f32 %v2485, %v2998
        %v3000 = vmul.f32 %v2489, %v2998
        %v3001 = vmul.f32 %v2493, %v2998
        %v3002 = vmul.f32 %v2497, %v2998
        %v3003 = vmul.f32 %v2501, %v2998
        %v3004 = vmul.f32 %v2505, %v2998
        %v3005 = vmul.f32 %v2509, %v2998
        %v3006 = vmul.f32 %v2513, %v2998
        %v3007 = vmul.f32 %v2517, %v2998
        %v3008 = vmul.f32 %v2521, %v2998
        %v3009 = vmul.f32 %v2525, %v2998
        %v3010 = vmul.f32 %v2529, %v2998
        %v3011 = vmul.f32 %v2533, %v2998
        %v3012 = vmul.f32 %v2537, %v2998
        %v3013 = vmul.f32 %v2541, %v2998
        %v3014 = vmul.f32 %v2545, %v2998
        %v3015 = vmul.f32 %v2549, %v2998
        %v3016 = vmul.f32 %v2553, %v2998
        %v3017 = vmul.f32 %v2557, %v2998
        %v3018 = vmul.f32 %v2561, %v2998
        %v3019 = vmul.f32 %v2565, %v2998
        %v3020 = vmul.f32 %v2569, %v2998
        %v3021 = vmul.f32 %v2573, %v2998
        %v3022 = vmul.f32 %v2577, %v2998
        %v3023 = vmul.f32 %v2581, %v2998
        %v3024 = vmul.f32 %v2585, %v2998
        %v3025 = vmul.f32 %v2589, %v2998
        %v3026 = vmul.f32 %v2593, %v2998
        %v3027 = vmul.f32 %v2597, %v2998
        %v3028 = vmul.f32 %v2601, %v2998
        %v3029 = vmul.f32 %v2605, %v2998
        %v3030 = vmul.f32 %v2609, %v2998
        %v3031 = vmul.f32 %v2613, %v2998
        %v3032 = vmul.f32 %v2617, %v2998
        %v3033 = vmul.f32 %v2621, %v2998
        %v3034 = vmul.f32 %v2625, %v2998
        %v3035 = vmul.f32 %v2629, %v2998
        %v3036 = vmul.f32 %v2633, %v2998
        %v3037 = vmul.f32 %v2637, %v2998
        %v3038 = vmul.f32 %v2641, %v2998
        %v3039 = vmul.f32 %v2645, %v2998
        %v3040 = vmul.f32 %v2649, %v2998
        %v3041 = vmul.f32 %v2653, %v2998
        %v3042 = vmul.f32 %v2657, %v2998
        %v3043 = vmul.f32 %v2661, %v2998
        %v3044 = vmul.f32 %v2665, %v2998
        %v3045 = vmul.f32 %v2669, %v2998
        %v3046 = vmul.f32 %v2673, %v2998
        %v3047 = vmul.f32 %v2677, %v2998
        %v3048 = vmul.f32 %v2681, %v2998
        %v3049 = vmul.f32 %v2685, %v2998
        %v3050 = vmul.f32 %v2689, %v2998
        %v3051 = vmul.f32 %v2693, %v2998
        %v3052 = vmul.f32 %v2697, %v2998
        %v3053 = vmul.f32 %v2701, %v2998
        %v3054 = vmul.f32 %v2705, %v2998
        %v3055 = vmul.f32 %v2709, %v2998
        %v3056 = vmul.f32 %v2713, %v2998
        %v3057 = vmul.f32 %v2717, %v2998
        %v3058 = vmul.f32 %v2721, %v2998
        %v3059 = vmul.f32 %v2725, %v2998
        %v3060 = vmul.f32 %v2729, %v2998
        %v3061 = vmul.f32 %v2733, %v2998
        %v3062 = vmul.f32 %v2737, %v2998
        %v3063 = vmul.f32 %v2741, %v2998
        %v3064 = vmul.f32 %v2745, %v2998
        %v3065 = vmul.f32 %v2749, %v2998
        %v3066 = vmul.f32 %v2753, %v2998
        %v3067 = vmul.f32 %v2757, %v2998
        %v3068 = vmul.f32 %v2761, %v2998
        %v3069 = vmul.f32 %v2765, %v2998
        %v3070 = vmul.f32 %v2769, %v2998
        %v3071 = vmul.f32 %v2773, %v2998
        %v3072 = vmul.f32 %v2777, %v2998
        %v3073 = vmul.f32 %v2781, %v2998
        %v3074 = vmul.f32 %v2785, %v2998
        %v3075 = vmul.f32 %v2789, %v2998
        %v3076 = vmul.f32 %v2793, %v2998
        %v3077 = vmul.f32 %v2797, %v2998
        %v3078 = vmul.f32 %v2801, %v2998
        %v3079 = vmul.f32 %v2805, %v2998
        %v3080 = vmul.f32 %v2809, %v2998
        %v3081 = vmul.f32 %v2813, %v2998
        %v3082 = vmul.f32 %v2817, %v2998
        %v3083 = vmul.f32 %v2821, %v2998
        %v3084 = vmul.f32 %v2825, %v2998
        %v3085 = vmul.f32 %v2829, %v2998
        %v3086 = vmul.f32 %v2833, %v2998
        %v3087 = vmul.f32 %v2837, %v2998
        %v3088 = vmul.f32 %v2841, %v2998
        %v3089 = vmul.f32 %v2845, %v2998
        %v3090 = vmul.f32 %v2849, %v2998
        %v3091 = vmul.f32 %v2853, %v2998
        %v3092 = vmul.f32 %v2857, %v2998
        %v3093 = vmul.f32 %v2861, %v2998
        %v3094 = vmul.f32 %v2865, %v2998
        %v3095 = vmul.f32 %v2869, %v2998
        %v3096 = vmul.f32 %v2873, %v2998
        %v3097 = vmul.f32 %v2877, %v2998
        %v3098 = vmul.f32 %v2881, %v2998
        %v3099 = vmul.f32 %v2885, %v2998
        %v3100 = vmul.f32 %v2889, %v2998
        %v3101 = vmul.f32 %v2893, %v2998
        %v3102 = vmul.f32 %v2897, %v2998
        %v3103 = vmul.f32 %v2901, %v2998
        %v3104 = vmul.f32 %v2905, %v2998
        %v3105 = vmul.f32 %v2909, %v2998
        %v3106 = vmul.f32 %v2913, %v2998
        %v3107 = vmul.f32 %v2917, %v2998
        %v3108 = vmul.f32 %v2921, %v2998
        %v3109 = vmul.f32 %v2925, %v2998
        %v3110 = vmul.f32 %v2929, %v2998
        %v3111 = vmul.f32 %v2933, %v2998
        %v3112 = vmul.f32 %v2937, %v2998
        %v3113 = vmul.f32 %v2941, %v2998
        %v3114 = vmul.f32 %v2945, %v2998
        %v3115 = vmul.f32 %v2949, %v2998
        %v3116 = vmul.f32 %v2953, %v2998
        %v3117 = vmul.f32 %v2957, %v2998
        %v3118 = vmul.f32 %v2961, %v2998
        %v3119 = vmul.f32 %v2965, %v2998
        %v3120 = vmul.f32 %v2969, %v2998
        %v3121 = vmul.f32 %v2973, %v2998
        %v3122 = vmul.f32 %v2977, %v2998
        %v3123 = vmul.f32 %v2981, %v2998
        %v3124 = vmul.f32 %v2985, %v2998
        %v3125 = vmul.f32 %v2989, %v2998
        %v3126 = vmul.f32 %v2993, %v2998
        %v3127 = vadd.f32 %v2355, %v2999
        %v3128 = vadd.f32 %v2356, %v3000
        %v3129 = vadd.f32 %v2357, %v3001
        %v3130 = vadd.f32 %v2358, %v3002
        %v3131 = vadd.f32 %v2359, %v3003
        %v3132 = vadd.f32 %v2360, %v3004
        %v3133 = vadd.f32 %v2361, %v3005
        %v3134 = vadd.f32 %v2362, %v3006
        %v3135 = vadd.f32 %v2363, %v3007
        %v3136 = vadd.f32 %v2364, %v3008
        %v3137 = vadd.f32 %v2365, %v3009
        %v3138 = vadd.f32 %v2366, %v3010
        %v3139 = vadd.f32 %v2367, %v3011
        %v3140 = vadd.f32 %v2368, %v3012
        %v3141 = vadd.f32 %v2369, %v3013
        %v3142 = vadd.f32 %v2370, %v3014
        %v3143 = vadd.f32 %v2371, %v3015
        %v3144 = vadd.f32 %v2372, %v3016
        %v3145 = vadd.f32 %v2373, %v3017
        %v3146 = vadd.f32 %v2374, %v3018
        %v3147 = vadd.f32 %v2375, %v3019
        %v3148 = vadd.f32 %v2376, %v3020
        %v3149 = vadd.f32 %v2377, %v3021
        %v3150 = vadd.f32 %v2378, %v3022
        %v3151 = vadd.f32 %v2379, %v3023
        %v3152 = vadd.f32 %v2380, %v3024
        %v3153 = vadd.f32 %v2381, %v3025
        %v3154 = vadd.f32 %v2382, %v3026
        %v3155 = vadd.f32 %v2383, %v3027
        %v3156 = vadd.f32 %v2384, %v3028
        %v3157 = vadd.f32 %v2385, %v3029
        %v3158 = vadd.f32 %v2386, %v3030
        %v3159 = vadd.f32 %v2387, %v3031
        %v3160 = vadd.f32 %v2388, %v3032
        %v3161 = vadd.f32 %v2389, %v3033
        %v3162 = vadd.f32 %v2390, %v3034
        %v3163 = vadd.f32 %v2391, %v3035
        %v3164 = vadd.f32 %v2392, %v3036
        %v3165 = vadd.f32 %v2393, %v3037
        %v3166 = vadd.f32 %v2394, %v3038
        %v3167 = vadd.f32 %v2395, %v3039
        %v3168 = vadd.f32 %v2396, %v3040
        %v3169 = vadd.f32 %v2397, %v3041
        %v3170 = vadd.f32 %v2398, %v3042
        %v3171 = vadd.f32 %v2399, %v3043
        %v3172 = vadd.f32 %v2400, %v3044
        %v3173 = vadd.f32 %v2401, %v3045
        %v3174 = vadd.f32 %v2402, %v3046
        %v3175 = vadd.f32 %v2403, %v3047
        %v3176 = vadd.f32 %v2404, %v3048
        %v3177 = vadd.f32 %v2405, %v3049
        %v3178 = vadd.f32 %v2406, %v3050
        %v3179 = vadd.f32 %v2407, %v3051
        %v3180 = vadd.f32 %v2408, %v3052
        %v3181 = vadd.f32 %v2409, %v3053
        %v3182 = vadd.f32 %v2410, %v3054
        %v3183 = vadd.f32 %v2411, %v3055
        %v3184 = vadd.f32 %v2412, %v3056
        %v3185 = vadd.f32 %v2413, %v3057
        %v3186 = vadd.f32 %v2414, %v3058
        %v3187 = vadd.f32 %v2415, %v3059
        %v3188 = vadd.f32 %v2416, %v3060
        %v3189 = vadd.f32 %v2417, %v3061
        %v3190 = vadd.f32 %v2418, %v3062
        %v3191 = vadd.f32 %v2419, %v3063
        %v3192 = vadd.f32 %v2420, %v3064
        %v3193 = vadd.f32 %v2421, %v3065
        %v3194 = vadd.f32 %v2422, %v3066
        %v3195 = vadd.f32 %v2423, %v3067
        %v3196 = vadd.f32 %v2424, %v3068
        %v3197 = vadd.f32 %v2425, %v3069
        %v3198 = vadd.f32 %v2426, %v3070
        %v3199 = vadd.f32 %v2427, %v3071
        %v3200 = vadd.f32 %v2428, %v3072
        %v3201 = vadd.f32 %v2429, %v3073
        %v3202 = vadd.f32 %v2430, %v3074
        %v3203 = vadd.f32 %v2431, %v3075
        %v3204 = vadd.f32 %v2432, %v3076
        %v3205 = vadd.f32 %v2433, %v3077
        %v3206 = vadd.f32 %v2434, %v3078
        %v3207 = vadd.f32 %v2435, %v3079
        %v3208 = vadd.f32 %v2436, %v3080
        %v3209 = vadd.f32 %v2437, %v3081
        %v3210 = vadd.f32 %v2438, %v3082
        %v3211 = vadd.f32 %v2439, %v3083
        %v3212 = vadd.f32 %v2440, %v3084
        %v3213 = vadd.f32 %v2441, %v3085
        %v3214 = vadd.f32 %v2442, %v3086
        %v3215 = vadd.f32 %v2443, %v3087
        %v3216 = vadd.f32 %v2444, %v3088
        %v3217 = vadd.f32 %v2445, %v3089
        %v3218 = vadd.f32 %v2446, %v3090
        %v3219 = vadd.f32 %v2447, %v3091
        %v3220 = vadd.f32 %v2448, %v3092
        %v3221 = vadd.f32 %v2449, %v3093
        %v3222 = vadd.f32 %v2450, %v3094
        %v3223 = vadd.f32 %v2451, %v3095
        %v3224 = vadd.f32 %v2452, %v3096
        %v3225 = vadd.f32 %v2453, %v3097
        %v3226 = vadd.f32 %v2454, %v3098
        %v3227 = vadd.f32 %v2455, %v3099
        %v3228 = vadd.f32 %v2456, %v3100
        %v3229 = vadd.f32 %v2457, %v3101
        %v3230 = vadd.f32 %v2458, %v3102
        %v3231 = vadd.f32 %v2459, %v3103
        %v3232 = vadd.f32 %v2460, %v3104
        %v3233 = vadd.f32 %v2461, %v3105
        %v3234 = vadd.f32 %v2462, %v3106
        %v3235 = vadd.f32 %v2463, %v3107
        %v3236 = vadd.f32 %v2464, %v3108
        %v3237 = vadd.f32 %v2465, %v3109
        %v3238 = vadd.f32 %v2466, %v3110
        %v3239 = vadd.f32 %v2467, %v3111
        %v3240 = vadd.f32 %v2468, %v3112
        %v3241 = vadd.f32 %v2469, %v3113
        %v3242 = vadd.f32 %v2470, %v3114
        %v3243 = vadd.f32 %v2471, %v3115
        %v3244 = vadd.f32 %v2472, %v3116
        %v3245 = vadd.f32 %v2473, %v3117
        %v3246 = vadd.f32 %v2474, %v3118
        %v3247 = vadd.f32 %v2475, %v3119
        %v3248 = vadd.f32 %v2476, %v3120
        %v3249 = vadd.f32 %v2477, %v3121
        %v3250 = vadd.f32 %v2478, %v3122
        %v3251 = vadd.f32 %v2479, %v3123
        %v3252 = vadd.f32 %v2480, %v3124
        %v3253 = vadd.f32 %v2481, %v3125
        %v3254 = vadd.f32 %v2482, %v3126
        %v3255 = vlaneseq
        %v3256 = vshrl.u32 %v3255, 7
        %v3257 = vsub.s32 0, %v3256
        %v3258 = vrot.slane %v938, %v3257
        %v3259 = vadd.f32 %v3127, %v3258
        %v3260 = vadd.f32 %v3128, %v3258
        %v3261 = vadd.f32 %v3129, %v3258
        %v3262 = vadd.f32 %v3130, %v3258
        %v3263 = vadd.f32 %v3131, %v3258
        %v3264 = vadd.f32 %v3132, %v3258
        %v3265 = vadd.f32 %v3133, %v3258
        %v3266 = vadd.f32 %v3134, %v3258
        %v3267 = vadd.f32 %v3135, %v3258
        %v3268 = vadd.f32 %v3136, %v3258
        %v3269 = vadd.f32 %v3137, %v3258
        %v3270 = vadd.f32 %v3138, %v3258
        %v3271 = vadd.f32 %v3139, %v3258
        %v3272 = vadd.f32 %v3140, %v3258
        %v3273 = vadd.f32 %v3141, %v3258
        %v3274 = vadd.f32 %v3142, %v3258
        %v3275 = vadd.f32 %v3143, %v3258
        %v3276 = vadd.f32 %v3144, %v3258
        %v3277 = vadd.f32 %v3145, %v3258
        %v3278 = vadd.f32 %v3146, %v3258
        %v3279 = vadd.f32 %v3147, %v3258
        %v3280 = vadd.f32 %v3148, %v3258
        %v3281 = vadd.f32 %v3149, %v3258
        %v3282 = vadd.f32 %v3150, %v3258
        %v3283 = vadd.f32 %v3151, %v3258
        %v3284 = vadd.f32 %v3152, %v3258
        %v3285 = vadd.f32 %v3153, %v3258
        %v3286 = vadd.f32 %v3154, %v3258
        %v3287 = vadd.f32 %v3155, %v3258
        %v3288 = vadd.f32 %v3156, %v3258
        %v3289 = vadd.f32 %v3157, %v3258
        %v3290 = vadd.f32 %v3158, %v3258
        %v3291 = vadd.f32 %v3159, %v3258
        %v3292 = vadd.f32 %v3160, %v3258
        %v3293 = vadd.f32 %v3161, %v3258
        %v3294 = vadd.f32 %v3162, %v3258
        %v3295 = vadd.f32 %v3163, %v3258
        %v3296 = vadd.f32 %v3164, %v3258
        %v3297 = vadd.f32 %v3165, %v3258
        %v3298 = vadd.f32 %v3166, %v3258
        %v3299 = vadd.f32 %v3167, %v3258
        %v3300 = vadd.f32 %v3168, %v3258
        %v3301 = vadd.f32 %v3169, %v3258
        %v3302 = vadd.f32 %v3170, %v3258
        %v3303 = vadd.f32 %v3171, %v3258
        %v3304 = vadd.f32 %v3172, %v3258
        %v3305 = vadd.f32 %v3173, %v3258
        %v3306 = vadd.f32 %v3174, %v3258
        %v3307 = vadd.f32 %v3175, %v3258
        %v3308 = vadd.f32 %v3176, %v3258
        %v3309 = vadd.f32 %v3177, %v3258
        %v3310 = vadd.f32 %v3178, %v3258
        %v3311 = vadd.f32 %v3179, %v3258
        %v3312 = vadd.f32 %v3180, %v3258
        %v3313 = vadd.f32 %v3181, %v3258
        %v3314 = vadd.f32 %v3182, %v3258
        %v3315 = vadd.f32 %v3183, %v3258
        %v3316 = vadd.f32 %v3184, %v3258
        %v3317 = vadd.f32 %v3185, %v3258
        %v3318 = vadd.f32 %v3186, %v3258
        %v3319 = vadd.f32 %v3187, %v3258
        %v3320 = vadd.f32 %v3188, %v3258
        %v3321 = vadd.f32 %v3189, %v3258
        %v3322 = vadd.f32 %v3190, %v3258
        %v3323 = vadd.f32 %v3191, %v3258
        %v3324 = vadd.f32 %v3192, %v3258
        %v3325 = vadd.f32 %v3193, %v3258
        %v3326 = vadd.f32 %v3194, %v3258
        %v3327 = vadd.f32 %v3195, %v3258
        %v3328 = vadd.f32 %v3196, %v3258
        %v3329 = vadd.f32 %v3197, %v3258
        %v3330 = vadd.f32 %v3198, %v3258
        %v3331 = vadd.f32 %v3199, %v3258
        %v3332 = vadd.f32 %v3200, %v3258
        %v3333 = vadd.f32 %v3201, %v3258
        %v3334 = vadd.f32 %v3202, %v3258
        %v3335 = vadd.f32 %v3203, %v3258
        %v3336 = vadd.f32 %v3204, %v3258
        %v3337 = vadd.f32 %v3205, %v3258
        %v3338 = vadd.f32 %v3206, %v3258
        %v3339 = vadd.f32 %v3207, %v3258
        %v3340 = vadd.f32 %v3208, %v3258
        %v3341 = vadd.f32 %v3209, %v3258
        %v3342 = vadd.f32 %v3210, %v3258
        %v3343 = vadd.f32 %v3211, %v3258
        %v3344 = vadd.f32 %v3212, %v3258
        %v3345 = vadd.f32 %v3213, %v3258
        %v3346 = vadd.f32 %v3214, %v3258
        %v3347 = vadd.f32 %v3215, %v3258
        %v3348 = vadd.f32 %v3216, %v3258
        %v3349 = vadd.f32 %v3217, %v3258
        %v3350 = vadd.f32 %v3218, %v3258
        %v3351 = vadd.f32 %v3219, %v3258
        %v3352 = vadd.f32 %v3220, %v3258
        %v3353 = vadd.f32 %v3221, %v3258
        %v3354 = vadd.f32 %v3222, %v3258
        %v3355 = vadd.f32 %v3223, %v3258
        %v3356 = vadd.f32 %v3224, %v3258
        %v3357 = vadd.f32 %v3225, %v3258
        %v3358 = vadd.f32 %v3226, %v3258
        %v3359 = vadd.f32 %v3227, %v3258
        %v3360 = vadd.f32 %v3228, %v3258
        %v3361 = vadd.f32 %v3229, %v3258
        %v3362 = vadd.f32 %v3230, %v3258
        %v3363 = vadd.f32 %v3231, %v3258
        %v3364 = vadd.f32 %v3232, %v3258
        %v3365 = vadd.f32 %v3233, %v3258
        %v3366 = vadd.f32 %v3234, %v3258
        %v3367 = vadd.f32 %v3235, %v3258
        %v3368 = vadd.f32 %v3236, %v3258
        %v3369 = vadd.f32 %v3237, %v3258
        %v3370 = vadd.f32 %v3238, %v3258
        %v3371 = vadd.f32 %v3239, %v3258
        %v3372 = vadd.f32 %v3240, %v3258
        %v3373 = vadd.f32 %v3241, %v3258
        %v3374 = vadd.f32 %v3242, %v3258
        %v3375 = vadd.f32 %v3243, %v3258
        %v3376 = vadd.f32 %v3244, %v3258
        %v3377 = vadd.f32 %v3245, %v3258
        %v3378 = vadd.f32 %v3246, %v3258
        %v3379 = vadd.f32 %v3247, %v3258
        %v3380 = vadd.f32 %v3248, %v3258
        %v3381 = vadd.f32 %v3249, %v3258
        %v3382 = vadd.f32 %v3250, %v3258
        %v3383 = vadd.f32 %v3251, %v3258
        %v3384 = vadd.f32 %v3252, %v3258
        %v3385 = vadd.f32 %v3253, %v3258
        %v3386 = vadd.f32 %v3254, %v3258
        %v3387 = vmax.f32 %v3259, 0.0
        %v3388 = vmax.f32 %v3260, 0.0
        %v3389 = vmax.f32 %v3261, 0.0
        %v3390 = vmax.f32 %v3262, 0.0
        %v3391 = vmax.f32 %v3263, 0.0
        %v3392 = vmax.f32 %v3264, 0.0
        %v3393 = vmax.f32 %v3265, 0.0
        %v3394 = vmax.f32 %v3266, 0.0
        %v3395 = vmax.f32 %v3267, 0.0
        %v3396 = vmax.f32 %v3268, 0.0
        %v3397 = vmax.f32 %v3269, 0.0
        %v3398 = vmax.f32 %v3270, 0.0
        %v3399 = vmax.f32 %v3271, 0.0
        %v3400 = vmax.f32 %v3272, 0.0
        %v3401 = vmax.f32 %v3273, 0.0
        %v3402 = vmax.f32 %v3274, 0.0
        %v3403 = vmax.f32 %v3275, 0.0
        %v3404 = vmax.f32 %v3276, 0.0
        %v3405 = vmax.f32 %v3277, 0.0
        %v3406 = vmax.f32 %v3278, 0.0
        %v3407 = vmax.f32 %v3279, 0.0
        %v3408 = vmax.f32 %v3280, 0.0
        %v3409 = vmax.f32 %v3281, 0.0
        %v3410 = vmax.f32 %v3282, 0.0
        %v3411 = vmax.f32 %v3283, 0.0
        %v3412 = vmax.f32 %v3284, 0.0
        %v3413 = vmax.f32 %v3285, 0.0
        %v3414 = vmax.f32 %v3286, 0.0
        %v3415 = vmax.f32 %v3287, 0.0
        %v3416 = vmax.f32 %v3288, 0.0
        %v3417 = vmax.f32 %v3289, 0.0
        %v3418 = vmax.f32 %v3290, 0.0
        %v3419 = vmax.f32 %v3291, 0.0
        %v3420 = vmax.f32 %v3292, 0.0
        %v3421 = vmax.f32 %v3293, 0.0
        %v3422 = vmax.f32 %v3294, 0.0
        %v3423 = vmax.f32 %v3295, 0.0
        %v3424 = vmax.f32 %v3296, 0.0
        %v3425 = vmax.f32 %v3297, 0.0
        %v3426 = vmax.f32 %v3298, 0.0
        %v3427 = vmax.f32 %v3299, 0.0
        %v3428 = vmax.f32 %v3300, 0.0
        %v3429 = vmax.f32 %v3301, 0.0
        %v3430 = vmax.f32 %v3302, 0.0
        %v3431 = vmax.f32 %v3303, 0.0
        %v3432 = vmax.f32 %v3304, 0.0
        %v3433 = vmax.f32 %v3305, 0.0
        %v3434 = vmax.f32 %v3306, 0.0
        %v3435 = vmax.f32 %v3307, 0.0
        %v3436 = vmax.f32 %v3308, 0.0
        %v3437 = vmax.f32 %v3309, 0.0
        %v3438 = vmax.f32 %v3310, 0.0
        %v3439 = vmax.f32 %v3311, 0.0
        %v3440 = vmax.f32 %v3312, 0.0
        %v3441 = vmax.f32 %v3313, 0.0
        %v3442 = vmax.f32 %v3314, 0.0
        %v3443 = vmax.f32 %v3315, 0.0
        %v3444 = vmax.f32 %v3316, 0.0
        %v3445 = vmax.f32 %v3317, 0.0
        %v3446 = vmax.f32 %v3318, 0.0
        %v3447 = vmax.f32 %v3319, 0.0
        %v3448 = vmax.f32 %v3320, 0.0
        %v3449 = vmax.f32 %v3321, 0.0
        %v3450 = vmax.f32 %v3322, 0.0
        %v3451 = vmax.f32 %v3323, 0.0
        %v3452 = vmax.f32 %v3324, 0.0
        %v3453 = vmax.f32 %v3325, 0.0
        %v3454 = vmax.f32 %v3326, 0.0
        %v3455 = vmax.f32 %v3327, 0.0
        %v3456 = vmax.f32 %v3328, 0.0
        %v3457 = vmax.f32 %v3329, 0.0
        %v3458 = vmax.f32 %v3330, 0.0
        %v3459 = vmax.f32 %v3331, 0.0
        %v3460 = vmax.f32 %v3332, 0.0
        %v3461 = vmax.f32 %v3333, 0.0
        %v3462 = vmax.f32 %v3334, 0.0
        %v3463 = vmax.f32 %v3335, 0.0
        %v3464 = vmax.f32 %v3336, 0.0
        %v3465 = vmax.f32 %v3337, 0.0
        %v3466 = vmax.f32 %v3338, 0.0
        %v3467 = vmax.f32 %v3339, 0.0
        %v3468 = vmax.f32 %v3340, 0.0
        %v3469 = vmax.f32 %v3341, 0.0
        %v3470 = vmax.f32 %v3342, 0.0
        %v3471 = vmax.f32 %v3343, 0.0
        %v3472 = vmax.f32 %v3344, 0.0
        %v3473 = vmax.f32 %v3345, 0.0
        %v3474 = vmax.f32 %v3346, 0.0
        %v3475 = vmax.f32 %v3347, 0.0
        %v3476 = vmax.f32 %v3348, 0.0
        %v3477 = vmax.f32 %v3349, 0.0
        %v3478 = vmax.f32 %v3350, 0.0
        %v3479 = vmax.f32 %v3351, 0.0
        %v3480 = vmax.f32 %v3352, 0.0
        %v3481 = vmax.f32 %v3353, 0.0
        %v3482 = vmax.f32 %v3354, 0.0
        %v3483 = vmax.f32 %v3355, 0.0
        %v3484 = vmax.f32 %v3356, 0.0
        %v3485 = vmax.f32 %v3357, 0.0
        %v3486 = vmax.f32 %v3358, 0.0
        %v3487 = vmax.f32 %v3359, 0.0
        %v3488 = vmax.f32 %v3360, 0.0
        %v3489 = vmax.f32 %v3361, 0.0
        %v3490 = vmax.f32 %v3362, 0.0
        %v3491 = vmax.f32 %v3363, 0.0
        %v3492 = vmax.f32 %v3364, 0.0
        %v3493 = vmax.f32 %v3365, 0.0
        %v3494 = vmax.f32 %v3366, 0.0
        %v3495 = vmax.f32 %v3367, 0.0
        %v3496 = vmax.f32 %v3368, 0.0
        %v3497 = vmax.f32 %v3369, 0.0
        %v3498 = vmax.f32 %v3370, 0.0
        %v3499 = vmax.f32 %v3371, 0.0
        %v3500 = vmax.f32 %v3372, 0.0
        %v3501 = vmax.f32 %v3373, 0.0
        %v3502 = vmax.f32 %v3374, 0.0
        %v3503 = vmax.f32 %v3375, 0.0
        %v3504 = vmax.f32 %v3376, 0.0
        %v3505 = vmax.f32 %v3377, 0.0
        %v3506 = vmax.f32 %v3378, 0.0
        %v3507 = vmax.f32 %v3379, 0.0
        %v3508 = vmax.f32 %v3380, 0.0
        %v3509 = vmax.f32 %v3381, 0.0
        %v3510 = vmax.f32 %v3382, 0.0
        %v3511 = vmax.f32 %v3383, 0.0
        %v3512 = vmax.f32 %v3384, 0.0
        %v3513 = vmax.f32 %v3385, 0.0
        %v3514 = vmax.f32 %v3386, 0.0
        %v3515 = vpack.c.bf16 %v3388, %v3387
        %v3516 = vpack.c.bf16 %v3390, %v3389
        %v3517 = vpack.c.bf16 %v3392, %v3391
        %v3518 = vpack.c.bf16 %v3394, %v3393
        %v3519 = vpack.c.bf16 %v3396, %v3395
        %v3520 = vpack.c.bf16 %v3398, %v3397
        %v3521 = vpack.c.bf16 %v3400, %v3399
        %v3522 = vpack.c.bf16 %v3402, %v3401
        %v3523 = vpack.c.bf16 %v3404, %v3403
        %v3524 = vpack.c.bf16 %v3406, %v3405
        %v3525 = vpack.c.bf16 %v3408, %v3407
        %v3526 = vpack.c.bf16 %v3410, %v3409
        %v3527 = vpack.c.bf16 %v3412, %v3411
        %v3528 = vpack.c.bf16 %v3414, %v3413
        %v3529 = vpack.c.bf16 %v3416, %v3415
        %v3530 = vpack.c.bf16 %v3418, %v3417
        %v3531 = vpack.c.bf16 %v3420, %v3419
        %v3532 = vpack.c.bf16 %v3422, %v3421
        %v3533 = vpack.c.bf16 %v3424, %v3423
        %v3534 = vpack.c.bf16 %v3426, %v3425
        %v3535 = vpack.c.bf16 %v3428, %v3427
        %v3536 = vpack.c.bf16 %v3430, %v3429
        %v3537 = vpack.c.bf16 %v3432, %v3431
        %v3538 = vpack.c.bf16 %v3434, %v3433
        %v3539 = vpack.c.bf16 %v3436, %v3435
        %v3540 = vpack.c.bf16 %v3438, %v3437
        %v3541 = vpack.c.bf16 %v3440, %v3439
        %v3542 = vpack.c.bf16 %v3442, %v3441
        %v3543 = vpack.c.bf16 %v3444, %v3443
        %v3544 = vpack.c.bf16 %v3446, %v3445
        %v3545 = vpack.c.bf16 %v3448, %v3447
        %v3546 = vpack.c.bf16 %v3450, %v3449
        %v3547 = vpack.c.bf16 %v3452, %v3451
        %v3548 = vpack.c.bf16 %v3454, %v3453
        %v3549 = vpack.c.bf16 %v3456, %v3455
        %v3550 = vpack.c.bf16 %v3458, %v3457
        %v3551 = vpack.c.bf16 %v3460, %v3459
        %v3552 = vpack.c.bf16 %v3462, %v3461
        %v3553 = vpack.c.bf16 %v3464, %v3463
        %v3554 = vpack.c.bf16 %v3466, %v3465
        %v3555 = vpack.c.bf16 %v3468, %v3467
        %v3556 = vpack.c.bf16 %v3470, %v3469
        %v3557 = vpack.c.bf16 %v3472, %v3471
        %v3558 = vpack.c.bf16 %v3474, %v3473
        %v3559 = vpack.c.bf16 %v3476, %v3475
        %v3560 = vpack.c.bf16 %v3478, %v3477
        %v3561 = vpack.c.bf16 %v3480, %v3479
        %v3562 = vpack.c.bf16 %v3482, %v3481
        %v3563 = vpack.c.bf16 %v3484, %v3483
        %v3564 = vpack.c.bf16 %v3486, %v3485
        %v3565 = vpack.c.bf16 %v3488, %v3487
        %v3566 = vpack.c.bf16 %v3490, %v3489
        %v3567 = vpack.c.bf16 %v3492, %v3491
        %v3568 = vpack.c.bf16 %v3494, %v3493
        %v3569 = vpack.c.bf16 %v3496, %v3495
        %v3570 = vpack.c.bf16 %v3498, %v3497
        %v3571 = vpack.c.bf16 %v3500, %v3499
        %v3572 = vpack.c.bf16 %v3502, %v3501
        %v3573 = vpack.c.bf16 %v3504, %v3503
        %v3574 = vpack.c.bf16 %v3506, %v3505
        %v3575 = vpack.c.bf16 %v3508, %v3507
        %v3576 = vpack.c.bf16 %v3510, %v3509
        %v3577 = vpack.c.bf16 %v3512, %v3511
        %v3578 = vpack.c.bf16 %v3514, %v3513
        %s3579 = scalar_lea.vmem %s2, 64
        %v3580 = vld [vmem:[%s3579] sm:$0xf]
        %v3581 = vld [vmem:[%s3579 + $0x4] sm:$0xf]
        %v3582 = vld [vmem:[%s3579 + $0x8] sm:$0xf]
        %v3583 = vld [vmem:[%s3579 + $0xc] sm:$0xf]
        %v3584 = vld [vmem:[%s3579 + $0x10] sm:$0xf]
        %v3585 = vld [vmem:[%s3579 + $0x14] sm:$0xf]
        %v3586 = vld [vmem:[%s3579 + $0x18] sm:$0xf]
        %v3587 = vld [vmem:[%s3579 + $0x1c] sm:$0xf]
        %v3588 = vld [vmem:[%s3579 + $0x20] sm:$0xf]
        %v3589 = vld [vmem:[%s3579 + $0x24] sm:$0xf]
        %v3590 = vld [vmem:[%s3579 + $0x28] sm:$0xf]
        %v3591 = vld [vmem:[%s3579 + $0x2c] sm:$0xf]
        %v3592 = vld [vmem:[%s3579 + $0x30] sm:$0xf]
        %v3593 = vld [vmem:[%s3579 + $0x34] sm:$0xf]
        %v3594 = vld [vmem:[%s3579 + $0x38] sm:$0xf]
        %v3595 = vld [vmem:[%s3579 + $0x3c] sm:$0xf]
        %v3596 = vlaneseq
        %v3597 = vshrl.u32 %v3596, 7
        %v3598 = vsub.s32 1, %v3597
        %v3599 = vrot.slane %v938, %v3598
        %v3616 = vunpack.c.l.b16 %v3580
        %v3617 = vunpack.c.l.b16 %v3581
        %v3618 = vunpack.c.l.b16 %v3582
        %v3619 = vunpack.c.l.b16 %v3583
        %v3620 = vunpack.c.l.b16 %v3584
        %v3621 = vunpack.c.l.b16 %v3585
        %v3622 = vunpack.c.l.b16 %v3586
        %v3623 = vunpack.c.l.b16 %v3587
        %v3624 = vunpack.c.l.b16 %v3588
        %v3625 = vunpack.c.l.b16 %v3589
        %v3626 = vunpack.c.l.b16 %v3590
        %v3627 = vunpack.c.l.b16 %v3591
        %v3628 = vunpack.c.l.b16 %v3592
        %v3629 = vunpack.c.l.b16 %v3593
        %v3630 = vunpack.c.l.b16 %v3594
        %v3631 = vunpack.c.l.b16 %v3595
        %v3632 = vpack.c.b16 %v3617, %v3616
        %v3633 = vpack.c.b16 %v3619, %v3618
        %v3634 = vpack.c.b16 %v3621, %v3620
        %v3635 = vpack.c.b16 %v3623, %v3622
        %v3636 = vpack.c.b16 %v3625, %v3624
        %v3637 = vpack.c.b16 %v3627, %v3626
        %v3638 = vpack.c.b16 %v3629, %v3628
        %v3639 = vpack.c.b16 %v3631, %v3630
        %3648 = vmatprep.subr.bf16.mxu0 0
        %3649 = vmatpush1.bf16.msra.mxu0 %v3639
        %3650 = vmatprep.subr.bf16.mxu0 0
        %3651 = vmatpush1.bf16.msra.mxu0 %v3638
        %3652 = vmatprep.subr.bf16.mxu0 0
        %3653 = vmatpush1.bf16.msra.mxu0 %v3637
        %3654 = vmatprep.subr.bf16.mxu0 0
        %3655 = vmatpush1.bf16.msra.mxu0 %v3636
        %3656 = vmatprep.subr.bf16.mxu0 0
        %3657 = vmatpush1.bf16.msra.mxu0 %v3635
        %3658 = vmatprep.subr.bf16.mxu0 0
        %3659 = vmatpush1.bf16.msra.mxu0 %v3634
        %3660 = vmatprep.subr.bf16.mxu0 0
        %3661 = vmatpush1.bf16.msra.mxu0 %v3633
        %3662 = vmatprep.subr.bf16.mxu0 0
        %3663 = vmatpush1.bf16.msra.mxu0 %v3632
        %3664 = vmatprep.subr.bf16.mxu0 0
        %3665 = vmatpush2.bf16.msra.mxu0 0
        %3666 = vmatprep.subr.bf16.mxu0 0
        %3667 = vmatpush2.bf16.msra.mxu0 0
        %3668 = vmatprep.subr.bf16.mxu0 0
        %3669 = vmatpush2.bf16.msra.mxu0 0
        %3670 = vmatprep.subr.bf16.mxu0 0
        %3671 = vmatpush2.bf16.msra.mxu0 0
        %3672 = vmatprep.subr.bf16.mxu0 0
        %3673 = vmatpush2.bf16.msra.mxu0 0
        %3674 = vmatprep.subr.bf16.mxu0 0
        %3675 = vmatpush2.bf16.msra.mxu0 0
        %3676 = vmatprep.subr.bf16.mxu0 0
        %3677 = vmatpush2.bf16.msra.mxu0 0
        %3678 = vmatprep.subr.bf16.mxu0 0
        %3679 = vmatpush2.bf16.msra.mxu0 0
        %3680 = vmatprep.mubr.bf16.mxu0 0
        %3681 = vmatmul.mubr.bf16.gmra.mxu0 %v3515
        %v3682 = vpop.f32.mrf.mxu0
        %v3683 = vadd.f32 %v3599, %v3682
        %v3684 = vpop.f32.mrf.mxu0
        %v3685 = vpop.f32.mrf.mxu0
        %v3686 = vadd.f32 %v3599, %v3685
        %v3687 = vpop.f32.mrf.mxu0
        %3688 = vmatprep.mubr.bf16.mxu0 0
        %3689 = vmatmul.mubr.bf16.gmra.mxu0 %v3516
        %v3690 = vpop.f32.mrf.mxu0
        %v3691 = vadd.f32 %v3599, %v3690
        %v3692 = vpop.f32.mrf.mxu0
        %v3693 = vpop.f32.mrf.mxu0
        %v3694 = vadd.f32 %v3599, %v3693
        %v3695 = vpop.f32.mrf.mxu0
        %3696 = vmatprep.mubr.bf16.mxu0 0
        %3697 = vmatmul.mubr.bf16.gmra.mxu0 %v3517
        %v3698 = vpop.f32.mrf.mxu0
        %v3699 = vadd.f32 %v3599, %v3698
        %v3700 = vpop.f32.mrf.mxu0
        %v3701 = vpop.f32.mrf.mxu0
        %v3702 = vadd.f32 %v3599, %v3701
        %v3703 = vpop.f32.mrf.mxu0
        %3704 = vmatprep.mubr.bf16.mxu0 0
        %3705 = vmatmul.mubr.bf16.gmra.mxu0 %v3518
        %v3706 = vpop.f32.mrf.mxu0
        %v3707 = vadd.f32 %v3599, %v3706
        %v3708 = vpop.f32.mrf.mxu0
        %v3709 = vpop.f32.mrf.mxu0
        %v3710 = vadd.f32 %v3599, %v3709
        %v3711 = vpop.f32.mrf.mxu0
        %3712 = vmatprep.mubr.bf16.mxu0 0
        %3713 = vmatmul.mubr.bf16.gmra.mxu0 %v3519
        %v3714 = vpop.f32.mrf.mxu0
        %v3715 = vadd.f32 %v3599, %v3714
        %v3716 = vpop.f32.mrf.mxu0
        %v3717 = vpop.f32.mrf.mxu0
        %v3718 = vadd.f32 %v3599, %v3717
        %v3719 = vpop.f32.mrf.mxu0
        %3720 = vmatprep.mubr.bf16.mxu0 0
        %3721 = vmatmul.mubr.bf16.gmra.mxu0 %v3520
        %v3722 = vpop.f32.mrf.mxu0
        %v3723 = vadd.f32 %v3599, %v3722
        %v3724 = vpop.f32.mrf.mxu0
        %v3725 = vpop.f32.mrf.mxu0
        %v3726 = vadd.f32 %v3599, %v3725
        %v3727 = vpop.f32.mrf.mxu0
        %3728 = vmatprep.mubr.bf16.mxu0 0
        %3729 = vmatmul.mubr.bf16.gmra.mxu0 %v3521
        %v3730 = vpop.f32.mrf.mxu0
        %v3731 = vadd.f32 %v3599, %v3730
        %v3732 = vpop.f32.mrf.mxu0
        %v3733 = vpop.f32.mrf.mxu0
        %v3734 = vadd.f32 %v3599, %v3733
        %v3735 = vpop.f32.mrf.mxu0
        %3736 = vmatprep.mubr.bf16.mxu0 0
        %3737 = vmatmul.mubr.bf16.gmra.mxu0 %v3522
        %v3738 = vpop.f32.mrf.mxu0
        %v3739 = vadd.f32 %v3599, %v3738
        %v3740 = vpop.f32.mrf.mxu0
        %v3741 = vpop.f32.mrf.mxu0
        %v3742 = vadd.f32 %v3599, %v3741
        %v3743 = vpop.f32.mrf.mxu0
        %3744 = vmatprep.mubr.bf16.mxu0 0
        %3745 = vmatmul.mubr.bf16.gmra.mxu0 %v3523
        %v3746 = vpop.f32.mrf.mxu0
        %v3747 = vadd.f32 %v3599, %v3746
        %v3748 = vpop.f32.mrf.mxu0
        %v3749 = vpop.f32.mrf.mxu0
        %v3750 = vadd.f32 %v3599, %v3749
        %v3751 = vpop.f32.mrf.mxu0
        %3752 = vmatprep.mubr.bf16.mxu0 0
        %3753 = vmatmul.mubr.bf16.gmra.mxu0 %v3524
        %v3754 = vpop.f32.mrf.mxu0
        %v3755 = vadd.f32 %v3599, %v3754
        %v3756 = vpop.f32.mrf.mxu0
        %v3757 = vpop.f32.mrf.mxu0
        %v3758 = vadd.f32 %v3599, %v3757
        %v3759 = vpop.f32.mrf.mxu0
        %3760 = vmatprep.mubr.bf16.mxu0 0
        %3761 = vmatmul.mubr.bf16.gmra.mxu0 %v3525
        %v3762 = vpop.f32.mrf.mxu0
        %v3763 = vadd.f32 %v3599, %v3762
        %v3764 = vpop.f32.mrf.mxu0
        %v3765 = vpop.f32.mrf.mxu0
        %v3766 = vadd.f32 %v3599, %v3765
        %v3767 = vpop.f32.mrf.mxu0
        %3768 = vmatprep.mubr.bf16.mxu0 0
        %3769 = vmatmul.mubr.bf16.gmra.mxu0 %v3526
        %v3770 = vpop.f32.mrf.mxu0
        %v3771 = vadd.f32 %v3599, %v3770
        %v3772 = vpop.f32.mrf.mxu0
        %v3773 = vpop.f32.mrf.mxu0
        %v3774 = vadd.f32 %v3599, %v3773
        %v3775 = vpop.f32.mrf.mxu0
        %3776 = vmatprep.mubr.bf16.mxu0 0
        %3777 = vmatmul.mubr.bf16.gmra.mxu0 %v3527
        %v3778 = vpop.f32.mrf.mxu0
        %v3779 = vadd.f32 %v3599, %v3778
        %v3780 = vpop.f32.mrf.mxu0
        %v3781 = vpop.f32.mrf.mxu0
        %v3782 = vadd.f32 %v3599, %v3781
        %v3783 = vpop.f32.mrf.mxu0
        %3784 = vmatprep.mubr.bf16.mxu0 0
        %3785 = vmatmul.mubr.bf16.gmra.mxu0 %v3528
        %v3786 = vpop.f32.mrf.mxu0
        %v3787 = vadd.f32 %v3599, %v3786
        %v3788 = vpop.f32.mrf.mxu0
        %v3789 = vpop.f32.mrf.mxu0
        %v3790 = vadd.f32 %v3599, %v3789
        %v3791 = vpop.f32.mrf.mxu0
        %3792 = vmatprep.mubr.bf16.mxu0 0
        %3793 = vmatmul.mubr.bf16.gmra.mxu0 %v3529
        %v3794 = vpop.f32.mrf.mxu0
        %v3795 = vadd.f32 %v3599, %v3794
        %v3796 = vpop.f32.mrf.mxu0
        %v3797 = vpop.f32.mrf.mxu0
        %v3798 = vadd.f32 %v3599, %v3797
        %v3799 = vpop.f32.mrf.mxu0
        %3800 = vmatprep.mubr.bf16.mxu0 0
        %3801 = vmatmul.mubr.bf16.gmra.mxu0 %v3530
        %v3802 = vpop.f32.mrf.mxu0
        %v3803 = vadd.f32 %v3599, %v3802
        %v3804 = vpop.f32.mrf.mxu0
        %v3805 = vpop.f32.mrf.mxu0
        %v3806 = vadd.f32 %v3599, %v3805
        %v3807 = vpop.f32.mrf.mxu0
        %3808 = vmatprep.mubr.bf16.mxu0 0
        %3809 = vmatmul.mubr.bf16.gmra.mxu0 %v3531
        %v3810 = vpop.f32.mrf.mxu0
        %v3811 = vadd.f32 %v3599, %v3810
        %v3812 = vpop.f32.mrf.mxu0
        %v3813 = vpop.f32.mrf.mxu0
        %v3814 = vadd.f32 %v3599, %v3813
        %v3815 = vpop.f32.mrf.mxu0
        %3816 = vmatprep.mubr.bf16.mxu0 0
        %3817 = vmatmul.mubr.bf16.gmra.mxu0 %v3532
        %v3818 = vpop.f32.mrf.mxu0
        %v3819 = vadd.f32 %v3599, %v3818
        %v3820 = vpop.f32.mrf.mxu0
        %v3821 = vpop.f32.mrf.mxu0
        %v3822 = vadd.f32 %v3599, %v3821
        %v3823 = vpop.f32.mrf.mxu0
        %3824 = vmatprep.mubr.bf16.mxu0 0
        %3825 = vmatmul.mubr.bf16.gmra.mxu0 %v3533
        %v3826 = vpop.f32.mrf.mxu0
        %v3827 = vadd.f32 %v3599, %v3826
        %v3828 = vpop.f32.mrf.mxu0
        %v3829 = vpop.f32.mrf.mxu0
        %v3830 = vadd.f32 %v3599, %v3829
        %v3831 = vpop.f32.mrf.mxu0
        %3832 = vmatprep.mubr.bf16.mxu0 0
        %3833 = vmatmul.mubr.bf16.gmra.mxu0 %v3534
        %v3834 = vpop.f32.mrf.mxu0
        %v3835 = vadd.f32 %v3599, %v3834
        %v3836 = vpop.f32.mrf.mxu0
        %v3837 = vpop.f32.mrf.mxu0
        %v3838 = vadd.f32 %v3599, %v3837
        %v3839 = vpop.f32.mrf.mxu0
        %3840 = vmatprep.mubr.bf16.mxu0 0
        %3841 = vmatmul.mubr.bf16.gmra.mxu0 %v3535
        %v3842 = vpop.f32.mrf.mxu0
        %v3843 = vadd.f32 %v3599, %v3842
        %v3844 = vpop.f32.mrf.mxu0
        %v3845 = vpop.f32.mrf.mxu0
        %v3846 = vadd.f32 %v3599, %v3845
        %v3847 = vpop.f32.mrf.mxu0
        %3848 = vmatprep.mubr.bf16.mxu0 0
        %3849 = vmatmul.mubr.bf16.gmra.mxu0 %v3536
        %v3850 = vpop.f32.mrf.mxu0
        %v3851 = vadd.f32 %v3599, %v3850
        %v3852 = vpop.f32.mrf.mxu0
        %v3853 = vpop.f32.mrf.mxu0
        %v3854 = vadd.f32 %v3599, %v3853
        %v3855 = vpop.f32.mrf.mxu0
        %3856 = vmatprep.mubr.bf16.mxu0 0
        %3857 = vmatmul.mubr.bf16.gmra.mxu0 %v3537
        %v3858 = vpop.f32.mrf.mxu0
        %v3859 = vadd.f32 %v3599, %v3858
        %v3860 = vpop.f32.mrf.mxu0
        %v3861 = vpop.f32.mrf.mxu0
        %v3862 = vadd.f32 %v3599, %v3861
        %v3863 = vpop.f32.mrf.mxu0
        %3864 = vmatprep.mubr.bf16.mxu0 0
        %3865 = vmatmul.mubr.bf16.gmra.mxu0 %v3538
        %v3866 = vpop.f32.mrf.mxu0
        %v3867 = vadd.f32 %v3599, %v3866
        %v3868 = vpop.f32.mrf.mxu0
        %v3869 = vpop.f32.mrf.mxu0
        %v3870 = vadd.f32 %v3599, %v3869
        %v3871 = vpop.f32.mrf.mxu0
        %3872 = vmatprep.mubr.bf16.mxu0 0
        %3873 = vmatmul.mubr.bf16.gmra.mxu0 %v3539
        %v3874 = vpop.f32.mrf.mxu0
        %v3875 = vadd.f32 %v3599, %v3874
        %v3876 = vpop.f32.mrf.mxu0
        %v3877 = vpop.f32.mrf.mxu0
        %v3878 = vadd.f32 %v3599, %v3877
        %v3879 = vpop.f32.mrf.mxu0
        %3880 = vmatprep.mubr.bf16.mxu0 0
        %3881 = vmatmul.mubr.bf16.gmra.mxu0 %v3540
        %v3882 = vpop.f32.mrf.mxu0
        %v3883 = vadd.f32 %v3599, %v3882
        %v3884 = vpop.f32.mrf.mxu0
        %v3885 = vpop.f32.mrf.mxu0
        %v3886 = vadd.f32 %v3599, %v3885
        %v3887 = vpop.f32.mrf.mxu0
        %3888 = vmatprep.mubr.bf16.mxu0 0
        %3889 = vmatmul.mubr.bf16.gmra.mxu0 %v3541
        %v3890 = vpop.f32.mrf.mxu0
        %v3891 = vadd.f32 %v3599, %v3890
        %v3892 = vpop.f32.mrf.mxu0
        %v3893 = vpop.f32.mrf.mxu0
        %v3894 = vadd.f32 %v3599, %v3893
        %v3895 = vpop.f32.mrf.mxu0
        %3896 = vmatprep.mubr.bf16.mxu0 0
        %3897 = vmatmul.mubr.bf16.gmra.mxu0 %v3542
        %v3898 = vpop.f32.mrf.mxu0
        %v3899 = vadd.f32 %v3599, %v3898
        %v3900 = vpop.f32.mrf.mxu0
        %v3901 = vpop.f32.mrf.mxu0
        %v3902 = vadd.f32 %v3599, %v3901
        %v3903 = vpop.f32.mrf.mxu0
        %3904 = vmatprep.mubr.bf16.mxu0 0
        %3905 = vmatmul.mubr.bf16.gmra.mxu0 %v3543
        %v3906 = vpop.f32.mrf.mxu0
        %v3907 = vadd.f32 %v3599, %v3906
        %v3908 = vpop.f32.mrf.mxu0
        %v3909 = vpop.f32.mrf.mxu0
        %v3910 = vadd.f32 %v3599, %v3909
        %v3911 = vpop.f32.mrf.mxu0
        %3912 = vmatprep.mubr.bf16.mxu0 0
        %3913 = vmatmul.mubr.bf16.gmra.mxu0 %v3544
        %v3914 = vpop.f32.mrf.mxu0
        %v3915 = vadd.f32 %v3599, %v3914
        %v3916 = vpop.f32.mrf.mxu0
        %v3917 = vpop.f32.mrf.mxu0
        %v3918 = vadd.f32 %v3599, %v3917
        %v3919 = vpop.f32.mrf.mxu0
        %3920 = vmatprep.mubr.bf16.mxu0 0
        %3921 = vmatmul.mubr.bf16.gmra.mxu0 %v3545
        %v3922 = vpop.f32.mrf.mxu0
        %v3923 = vadd.f32 %v3599, %v3922
        %v3924 = vpop.f32.mrf.mxu0
        %v3925 = vpop.f32.mrf.mxu0
        %v3926 = vadd.f32 %v3599, %v3925
        %v3927 = vpop.f32.mrf.mxu0
        %3928 = vmatprep.mubr.bf16.mxu0 0
        %3929 = vmatmul.mubr.bf16.gmra.mxu0 %v3546
        %v3930 = vpop.f32.mrf.mxu0
        %v3931 = vadd.f32 %v3599, %v3930
        %v3932 = vpop.f32.mrf.mxu0
        %v3933 = vpop.f32.mrf.mxu0
        %v3934 = vadd.f32 %v3599, %v3933
        %v3935 = vpop.f32.mrf.mxu0
        %3936 = vmatprep.mubr.bf16.mxu0 0
        %3937 = vmatmul.mubr.bf16.gmra.mxu0 %v3547
        %v3938 = vpop.f32.mrf.mxu0
        %v3939 = vadd.f32 %v3599, %v3938
        %v3940 = vpop.f32.mrf.mxu0
        %v3941 = vpop.f32.mrf.mxu0
        %v3942 = vadd.f32 %v3599, %v3941
        %v3943 = vpop.f32.mrf.mxu0
        %3944 = vmatprep.mubr.bf16.mxu0 0
        %3945 = vmatmul.mubr.bf16.gmra.mxu0 %v3548
        %v3946 = vpop.f32.mrf.mxu0
        %v3947 = vadd.f32 %v3599, %v3946
        %v3948 = vpop.f32.mrf.mxu0
        %v3949 = vpop.f32.mrf.mxu0
        %v3950 = vadd.f32 %v3599, %v3949
        %v3951 = vpop.f32.mrf.mxu0
        %3952 = vmatprep.mubr.bf16.mxu0 0
        %3953 = vmatmul.mubr.bf16.gmra.mxu0 %v3549
        %v3954 = vpop.f32.mrf.mxu0
        %v3955 = vadd.f32 %v3599, %v3954
        %v3956 = vpop.f32.mrf.mxu0
        %v3957 = vpop.f32.mrf.mxu0
        %v3958 = vadd.f32 %v3599, %v3957
        %v3959 = vpop.f32.mrf.mxu0
        %3960 = vmatprep.mubr.bf16.mxu0 0
        %3961 = vmatmul.mubr.bf16.gmra.mxu0 %v3550
        %v3962 = vpop.f32.mrf.mxu0
        %v3963 = vadd.f32 %v3599, %v3962
        %v3964 = vpop.f32.mrf.mxu0
        %v3965 = vpop.f32.mrf.mxu0
        %v3966 = vadd.f32 %v3599, %v3965
        %v3967 = vpop.f32.mrf.mxu0
        %3968 = vmatprep.mubr.bf16.mxu0 0
        %3969 = vmatmul.mubr.bf16.gmra.mxu0 %v3551
        %v3970 = vpop.f32.mrf.mxu0
        %v3971 = vadd.f32 %v3599, %v3970
        %v3972 = vpop.f32.mrf.mxu0
        %v3973 = vpop.f32.mrf.mxu0
        %v3974 = vadd.f32 %v3599, %v3973
        %v3975 = vpop.f32.mrf.mxu0
        %3976 = vmatprep.mubr.bf16.mxu0 0
        %3977 = vmatmul.mubr.bf16.gmra.mxu0 %v3552
        %v3978 = vpop.f32.mrf.mxu0
        %v3979 = vadd.f32 %v3599, %v3978
        %v3980 = vpop.f32.mrf.mxu0
        %v3981 = vpop.f32.mrf.mxu0
        %v3982 = vadd.f32 %v3599, %v3981
        %v3983 = vpop.f32.mrf.mxu0
        %3984 = vmatprep.mubr.bf16.mxu0 0
        %3985 = vmatmul.mubr.bf16.gmra.mxu0 %v3553
        %v3986 = vpop.f32.mrf.mxu0
        %v3987 = vadd.f32 %v3599, %v3986
        %v3988 = vpop.f32.mrf.mxu0
        %v3989 = vpop.f32.mrf.mxu0
        %v3990 = vadd.f32 %v3599, %v3989
        %v3991 = vpop.f32.mrf.mxu0
        %3992 = vmatprep.mubr.bf16.mxu0 0
        %3993 = vmatmul.mubr.bf16.gmra.mxu0 %v3554
        %v3994 = vpop.f32.mrf.mxu0
        %v3995 = vadd.f32 %v3599, %v3994
        %v3996 = vpop.f32.mrf.mxu0
        %v3997 = vpop.f32.mrf.mxu0
        %v3998 = vadd.f32 %v3599, %v3997
        %v3999 = vpop.f32.mrf.mxu0
        %4000 = vmatprep.mubr.bf16.mxu0 0
        %4001 = vmatmul.mubr.bf16.gmra.mxu0 %v3555
        %v4002 = vpop.f32.mrf.mxu0
        %v4003 = vadd.f32 %v3599, %v4002
        %v4004 = vpop.f32.mrf.mxu0
        %v4005 = vpop.f32.mrf.mxu0
        %v4006 = vadd.f32 %v3599, %v4005
        %v4007 = vpop.f32.mrf.mxu0
        %4008 = vmatprep.mubr.bf16.mxu0 0
        %4009 = vmatmul.mubr.bf16.gmra.mxu0 %v3556
        %v4010 = vpop.f32.mrf.mxu0
        %v4011 = vadd.f32 %v3599, %v4010
        %v4012 = vpop.f32.mrf.mxu0
        %v4013 = vpop.f32.mrf.mxu0
        %v4014 = vadd.f32 %v3599, %v4013
        %v4015 = vpop.f32.mrf.mxu0
        %4016 = vmatprep.mubr.bf16.mxu0 0
        %4017 = vmatmul.mubr.bf16.gmra.mxu0 %v3557
        %v4018 = vpop.f32.mrf.mxu0
        %v4019 = vadd.f32 %v3599, %v4018
        %v4020 = vpop.f32.mrf.mxu0
        %v4021 = vpop.f32.mrf.mxu0
        %v4022 = vadd.f32 %v3599, %v4021
        %v4023 = vpop.f32.mrf.mxu0
        %4024 = vmatprep.mubr.bf16.mxu0 0
        %4025 = vmatmul.mubr.bf16.gmra.mxu0 %v3558
        %v4026 = vpop.f32.mrf.mxu0
        %v4027 = vadd.f32 %v3599, %v4026
        %v4028 = vpop.f32.mrf.mxu0
        %v4029 = vpop.f32.mrf.mxu0
        %v4030 = vadd.f32 %v3599, %v4029
        %v4031 = vpop.f32.mrf.mxu0
        %4032 = vmatprep.mubr.bf16.mxu0 0
        %4033 = vmatmul.mubr.bf16.gmra.mxu0 %v3559
        %v4034 = vpop.f32.mrf.mxu0
        %v4035 = vadd.f32 %v3599, %v4034
        %v4036 = vpop.f32.mrf.mxu0
        %v4037 = vpop.f32.mrf.mxu0
        %v4038 = vadd.f32 %v3599, %v4037
        %v4039 = vpop.f32.mrf.mxu0
        %4040 = vmatprep.mubr.bf16.mxu0 0
        %4041 = vmatmul.mubr.bf16.gmra.mxu0 %v3560
        %v4042 = vpop.f32.mrf.mxu0
        %v4043 = vadd.f32 %v3599, %v4042
        %v4044 = vpop.f32.mrf.mxu0
        %v4045 = vpop.f32.mrf.mxu0
        %v4046 = vadd.f32 %v3599, %v4045
        %v4047 = vpop.f32.mrf.mxu0
        %4048 = vmatprep.mubr.bf16.mxu0 0
        %4049 = vmatmul.mubr.bf16.gmra.mxu0 %v3561
        %v4050 = vpop.f32.mrf.mxu0
        %v4051 = vadd.f32 %v3599, %v4050
        %v4052 = vpop.f32.mrf.mxu0
        %v4053 = vpop.f32.mrf.mxu0
        %v4054 = vadd.f32 %v3599, %v4053
        %v4055 = vpop.f32.mrf.mxu0
        %4056 = vmatprep.mubr.bf16.mxu0 0
        %4057 = vmatmul.mubr.bf16.gmra.mxu0 %v3562
        %v4058 = vpop.f32.mrf.mxu0
        %v4059 = vadd.f32 %v3599, %v4058
        %v4060 = vpop.f32.mrf.mxu0
        %v4061 = vpop.f32.mrf.mxu0
        %v4062 = vadd.f32 %v3599, %v4061
        %v4063 = vpop.f32.mrf.mxu0
        %4064 = vmatprep.mubr.bf16.mxu0 0
        %4065 = vmatmul.mubr.bf16.gmra.mxu0 %v3563
        %v4066 = vpop.f32.mrf.mxu0
        %v4067 = vadd.f32 %v3599, %v4066
        %v4068 = vpop.f32.mrf.mxu0
        %v4069 = vpop.f32.mrf.mxu0
        %v4070 = vadd.f32 %v3599, %v4069
        %v4071 = vpop.f32.mrf.mxu0
        %4072 = vmatprep.mubr.bf16.mxu0 0
        %4073 = vmatmul.mubr.bf16.gmra.mxu0 %v3564
        %v4074 = vpop.f32.mrf.mxu0
        %v4075 = vadd.f32 %v3599, %v4074
        %v4076 = vpop.f32.mrf.mxu0
        %v4077 = vpop.f32.mrf.mxu0
        %v4078 = vadd.f32 %v3599, %v4077
        %v4079 = vpop.f32.mrf.mxu0
        %4080 = vmatprep.mubr.bf16.mxu0 0
        %4081 = vmatmul.mubr.bf16.gmra.mxu0 %v3565
        %v4082 = vpop.f32.mrf.mxu0
        %v4083 = vadd.f32 %v3599, %v4082
        %v4084 = vpop.f32.mrf.mxu0
        %v4085 = vpop.f32.mrf.mxu0
        %v4086 = vadd.f32 %v3599, %v4085
        %v4087 = vpop.f32.mrf.mxu0
        %4088 = vmatprep.mubr.bf16.mxu0 0
        %4089 = vmatmul.mubr.bf16.gmra.mxu0 %v3566
        %v4090 = vpop.f32.mrf.mxu0
        %v4091 = vadd.f32 %v3599, %v4090
        %v4092 = vpop.f32.mrf.mxu0
        %v4093 = vpop.f32.mrf.mxu0
        %v4094 = vadd.f32 %v3599, %v4093
        %v4095 = vpop.f32.mrf.mxu0
        %4096 = vmatprep.mubr.bf16.mxu0 0
        %4097 = vmatmul.mubr.bf16.gmra.mxu0 %v3567
        %v4098 = vpop.f32.mrf.mxu0
        %v4099 = vadd.f32 %v3599, %v4098
        %v4100 = vpop.f32.mrf.mxu0
        %v4101 = vpop.f32.mrf.mxu0
        %v4102 = vadd.f32 %v3599, %v4101
        %v4103 = vpop.f32.mrf.mxu0
        %4104 = vmatprep.mubr.bf16.mxu0 0
        %4105 = vmatmul.mubr.bf16.gmra.mxu0 %v3568
        %v4106 = vpop.f32.mrf.mxu0
        %v4107 = vadd.f32 %v3599, %v4106
        %v4108 = vpop.f32.mrf.mxu0
        %v4109 = vpop.f32.mrf.mxu0
        %v4110 = vadd.f32 %v3599, %v4109
        %v4111 = vpop.f32.mrf.mxu0
        %4112 = vmatprep.mubr.bf16.mxu0 0
        %4113 = vmatmul.mubr.bf16.gmra.mxu0 %v3569
        %v4114 = vpop.f32.mrf.mxu0
        %v4115 = vadd.f32 %v3599, %v4114
        %v4116 = vpop.f32.mrf.mxu0
        %v4117 = vpop.f32.mrf.mxu0
        %v4118 = vadd.f32 %v3599, %v4117
        %v4119 = vpop.f32.mrf.mxu0
        %4120 = vmatprep.mubr.bf16.mxu0 0
        %4121 = vmatmul.mubr.bf16.gmra.mxu0 %v3570
        %v4122 = vpop.f32.mrf.mxu0
        %v4123 = vadd.f32 %v3599, %v4122
        %v4124 = vpop.f32.mrf.mxu0
        %v4125 = vpop.f32.mrf.mxu0
        %v4126 = vadd.f32 %v3599, %v4125
        %v4127 = vpop.f32.mrf.mxu0
        %4128 = vmatprep.mubr.bf16.mxu0 0
        %4129 = vmatmul.mubr.bf16.gmra.mxu0 %v3571
        %v4130 = vpop.f32.mrf.mxu0
        %v4131 = vadd.f32 %v3599, %v4130
        %v4132 = vpop.f32.mrf.mxu0
        %v4133 = vpop.f32.mrf.mxu0
        %v4134 = vadd.f32 %v3599, %v4133
        %v4135 = vpop.f32.mrf.mxu0
        %4136 = vmatprep.mubr.bf16.mxu0 0
        %4137 = vmatmul.mubr.bf16.gmra.mxu0 %v3572
        %v4138 = vpop.f32.mrf.mxu0
        %v4139 = vadd.f32 %v3599, %v4138
        %v4140 = vpop.f32.mrf.mxu0
        %v4141 = vpop.f32.mrf.mxu0
        %v4142 = vadd.f32 %v3599, %v4141
        %v4143 = vpop.f32.mrf.mxu0
        %4144 = vmatprep.mubr.bf16.mxu0 0
        %4145 = vmatmul.mubr.bf16.gmra.mxu0 %v3573
        %v4146 = vpop.f32.mrf.mxu0
        %v4147 = vadd.f32 %v3599, %v4146
        %v4148 = vpop.f32.mrf.mxu0
        %v4149 = vpop.f32.mrf.mxu0
        %v4150 = vadd.f32 %v3599, %v4149
        %v4151 = vpop.f32.mrf.mxu0
        %4152 = vmatprep.mubr.bf16.mxu0 0
        %4153 = vmatmul.mubr.bf16.gmra.mxu0 %v3574
        %v4154 = vpop.f32.mrf.mxu0
        %v4155 = vadd.f32 %v3599, %v4154
        %v4156 = vpop.f32.mrf.mxu0
        %v4157 = vpop.f32.mrf.mxu0
        %v4158 = vadd.f32 %v3599, %v4157
        %v4159 = vpop.f32.mrf.mxu0
        %4160 = vmatprep.mubr.bf16.mxu0 0
        %4161 = vmatmul.mubr.bf16.gmra.mxu0 %v3575
        %v4162 = vpop.f32.mrf.mxu0
        %v4163 = vadd.f32 %v3599, %v4162
        %v4164 = vpop.f32.mrf.mxu0
        %v4165 = vpop.f32.mrf.mxu0
        %v4166 = vadd.f32 %v3599, %v4165
        %v4167 = vpop.f32.mrf.mxu0
        %4168 = vmatprep.mubr.bf16.mxu0 0
        %4169 = vmatmul.mubr.bf16.gmra.mxu0 %v3576
        %v4170 = vpop.f32.mrf.mxu0
        %v4171 = vadd.f32 %v3599, %v4170
        %v4172 = vpop.f32.mrf.mxu0
        %v4173 = vpop.f32.mrf.mxu0
        %v4174 = vadd.f32 %v3599, %v4173
        %v4175 = vpop.f32.mrf.mxu0
        %4176 = vmatprep.mubr.bf16.mxu0 0
        %4177 = vmatmul.mubr.bf16.gmra.mxu0 %v3577
        %v4178 = vpop.f32.mrf.mxu0
        %v4179 = vadd.f32 %v3599, %v4178
        %v4180 = vpop.f32.mrf.mxu0
        %v4181 = vpop.f32.mrf.mxu0
        %v4182 = vadd.f32 %v3599, %v4181
        %v4183 = vpop.f32.mrf.mxu0
        %4184 = vmatprep.mubr.bf16.mxu0 0
        %4185 = vmatmul.mubr.bf16.gmra.mxu0 %v3578
        %v4186 = vpop.f32.mrf.mxu0
        %v4187 = vadd.f32 %v3599, %v4186
        %v4188 = vpop.f32.mrf.mxu0
        %v4189 = vpop.f32.mrf.mxu0
        %v4190 = vadd.f32 %v3599, %v4189
        %v4191 = vpop.f32.mrf.mxu0
        %4192 = vdwg.mxu0
        %v4193 = vmax.f32 %v3683, 0.0
        %v4194 = vmax.f32 %v3686, 0.0
        %v4195 = vmax.f32 %v3691, 0.0
        %v4196 = vmax.f32 %v3694, 0.0
        %v4197 = vmax.f32 %v3699, 0.0
        %v4198 = vmax.f32 %v3702, 0.0
        %v4199 = vmax.f32 %v3707, 0.0
        %v4200 = vmax.f32 %v3710, 0.0
        %v4201 = vmax.f32 %v3715, 0.0
        %v4202 = vmax.f32 %v3718, 0.0
        %v4203 = vmax.f32 %v3723, 0.0
        %v4204 = vmax.f32 %v3726, 0.0
        %v4205 = vmax.f32 %v3731, 0.0
        %v4206 = vmax.f32 %v3734, 0.0
        %v4207 = vmax.f32 %v3739, 0.0
        %v4208 = vmax.f32 %v3742, 0.0
        %v4209 = vmax.f32 %v3747, 0.0
        %v4210 = vmax.f32 %v3750, 0.0
        %v4211 = vmax.f32 %v3755, 0.0
        %v4212 = vmax.f32 %v3758, 0.0
        %v4213 = vmax.f32 %v3763, 0.0
        %v4214 = vmax.f32 %v3766, 0.0
        %v4215 = vmax.f32 %v3771, 0.0
        %v4216 = vmax.f32 %v3774, 0.0
        %v4217 = vmax.f32 %v3779, 0.0
        %v4218 = vmax.f32 %v3782, 0.0
        %v4219 = vmax.f32 %v3787, 0.0
        %v4220 = vmax.f32 %v3790, 0.0
        %v4221 = vmax.f32 %v3795, 0.0
        %v4222 = vmax.f32 %v3798, 0.0
        %v4223 = vmax.f32 %v3803, 0.0
        %v4224 = vmax.f32 %v3806, 0.0
        %v4225 = vmax.f32 %v3811, 0.0
        %v4226 = vmax.f32 %v3814, 0.0
        %v4227 = vmax.f32 %v3819, 0.0
        %v4228 = vmax.f32 %v3822, 0.0
        %v4229 = vmax.f32 %v3827, 0.0
        %v4230 = vmax.f32 %v3830, 0.0
        %v4231 = vmax.f32 %v3835, 0.0
        %v4232 = vmax.f32 %v3838, 0.0
        %v4233 = vmax.f32 %v3843, 0.0
        %v4234 = vmax.f32 %v3846, 0.0
        %v4235 = vmax.f32 %v3851, 0.0
        %v4236 = vmax.f32 %v3854, 0.0
        %v4237 = vmax.f32 %v3859, 0.0
        %v4238 = vmax.f32 %v3862, 0.0
        %v4239 = vmax.f32 %v3867, 0.0
        %v4240 = vmax.f32 %v3870, 0.0
        %v4241 = vmax.f32 %v3875, 0.0
        %v4242 = vmax.f32 %v3878, 0.0
        %v4243 = vmax.f32 %v3883, 0.0
        %v4244 = vmax.f32 %v3886, 0.0
        %v4245 = vmax.f32 %v3891, 0.0
        %v4246 = vmax.f32 %v3894, 0.0
        %v4247 = vmax.f32 %v3899, 0.0
        %v4248 = vmax.f32 %v3902, 0.0
        %v4249 = vmax.f32 %v3907, 0.0
        %v4250 = vmax.f32 %v3910, 0.0
        %v4251 = vmax.f32 %v3915, 0.0
        %v4252 = vmax.f32 %v3918, 0.0
        %v4253 = vmax.f32 %v3923, 0.0
        %v4254 = vmax.f32 %v3926, 0.0
        %v4255 = vmax.f32 %v3931, 0.0
        %v4256 = vmax.f32 %v3934, 0.0
        %v4257 = vmax.f32 %v3939, 0.0
        %v4258 = vmax.f32 %v3942, 0.0
        %v4259 = vmax.f32 %v3947, 0.0
        %v4260 = vmax.f32 %v3950, 0.0
        %v4261 = vmax.f32 %v3955, 0.0
        %v4262 = vmax.f32 %v3958, 0.0
        %v4263 = vmax.f32 %v3963, 0.0
        %v4264 = vmax.f32 %v3966, 0.0
        %v4265 = vmax.f32 %v3971, 0.0
        %v4266 = vmax.f32 %v3974, 0.0
        %v4267 = vmax.f32 %v3979, 0.0
        %v4268 = vmax.f32 %v3982, 0.0
        %v4269 = vmax.f32 %v3987, 0.0
        %v4270 = vmax.f32 %v3990, 0.0
        %v4271 = vmax.f32 %v3995, 0.0
        %v4272 = vmax.f32 %v3998, 0.0
        %v4273 = vmax.f32 %v4003, 0.0
        %v4274 = vmax.f32 %v4006, 0.0
        %v4275 = vmax.f32 %v4011, 0.0
        %v4276 = vmax.f32 %v4014, 0.0
        %v4277 = vmax.f32 %v4019, 0.0
        %v4278 = vmax.f32 %v4022, 0.0
        %v4279 = vmax.f32 %v4027, 0.0
        %v4280 = vmax.f32 %v4030, 0.0
        %v4281 = vmax.f32 %v4035, 0.0
        %v4282 = vmax.f32 %v4038, 0.0
        %v4283 = vmax.f32 %v4043, 0.0
        %v4284 = vmax.f32 %v4046, 0.0
        %v4285 = vmax.f32 %v4051, 0.0
        %v4286 = vmax.f32 %v4054, 0.0
        %v4287 = vmax.f32 %v4059, 0.0
        %v4288 = vmax.f32 %v4062, 0.0
        %v4289 = vmax.f32 %v4067, 0.0
        %v4290 = vmax.f32 %v4070, 0.0
        %v4291 = vmax.f32 %v4075, 0.0
        %v4292 = vmax.f32 %v4078, 0.0
        %v4293 = vmax.f32 %v4083, 0.0
        %v4294 = vmax.f32 %v4086, 0.0
        %v4295 = vmax.f32 %v4091, 0.0
        %v4296 = vmax.f32 %v4094, 0.0
        %v4297 = vmax.f32 %v4099, 0.0
        %v4298 = vmax.f32 %v4102, 0.0
        %v4299 = vmax.f32 %v4107, 0.0
        %v4300 = vmax.f32 %v4110, 0.0
        %v4301 = vmax.f32 %v4115, 0.0
        %v4302 = vmax.f32 %v4118, 0.0
        %v4303 = vmax.f32 %v4123, 0.0
        %v4304 = vmax.f32 %v4126, 0.0
        %v4305 = vmax.f32 %v4131, 0.0
        %v4306 = vmax.f32 %v4134, 0.0
        %v4307 = vmax.f32 %v4139, 0.0
        %v4308 = vmax.f32 %v4142, 0.0
        %v4309 = vmax.f32 %v4147, 0.0
        %v4310 = vmax.f32 %v4150, 0.0
        %v4311 = vmax.f32 %v4155, 0.0
        %v4312 = vmax.f32 %v4158, 0.0
        %v4313 = vmax.f32 %v4163, 0.0
        %v4314 = vmax.f32 %v4166, 0.0
        %v4315 = vmax.f32 %v4171, 0.0
        %v4316 = vmax.f32 %v4174, 0.0
        %v4317 = vmax.f32 %v4179, 0.0
        %v4318 = vmax.f32 %v4182, 0.0
        %v4319 = vmax.f32 %v4187, 0.0
        %v4320 = vmax.f32 %v4190, 0.0
        %v4321 = vpack.c.bf16 %v4194, %v4193
        %v4322 = vpack.c.bf16 %v4196, %v4195
        %v4323 = vpack.c.bf16 %v4198, %v4197
        %v4324 = vpack.c.bf16 %v4200, %v4199
        %v4325 = vpack.c.bf16 %v4202, %v4201
        %v4326 = vpack.c.bf16 %v4204, %v4203
        %v4327 = vpack.c.bf16 %v4206, %v4205
        %v4328 = vpack.c.bf16 %v4208, %v4207
        %v4329 = vpack.c.bf16 %v4210, %v4209
        %v4330 = vpack.c.bf16 %v4212, %v4211
        %v4331 = vpack.c.bf16 %v4214, %v4213
        %v4332 = vpack.c.bf16 %v4216, %v4215
        %v4333 = vpack.c.bf16 %v4218, %v4217
        %v4334 = vpack.c.bf16 %v4220, %v4219
        %v4335 = vpack.c.bf16 %v4222, %v4221
        %v4336 = vpack.c.bf16 %v4224, %v4223
        %v4337 = vpack.c.bf16 %v4226, %v4225
        %v4338 = vpack.c.bf16 %v4228, %v4227
        %v4339 = vpack.c.bf16 %v4230, %v4229
        %v4340 = vpack.c.bf16 %v4232, %v4231
        %v4341 = vpack.c.bf16 %v4234, %v4233
        %v4342 = vpack.c.bf16 %v4236, %v4235
        %v4343 = vpack.c.bf16 %v4238, %v4237
        %v4344 = vpack.c.bf16 %v4240, %v4239
        %v4345 = vpack.c.bf16 %v4242, %v4241
        %v4346 = vpack.c.bf16 %v4244, %v4243
        %v4347 = vpack.c.bf16 %v4246, %v4245
        %v4348 = vpack.c.bf16 %v4248, %v4247
        %v4349 = vpack.c.bf16 %v4250, %v4249
        %v4350 = vpack.c.bf16 %v4252, %v4251
        %v4351 = vpack.c.bf16 %v4254, %v4253
        %v4352 = vpack.c.bf16 %v4256, %v4255
        %v4353 = vpack.c.bf16 %v4258, %v4257
        %v4354 = vpack.c.bf16 %v4260, %v4259
        %v4355 = vpack.c.bf16 %v4262, %v4261
        %v4356 = vpack.c.bf16 %v4264, %v4263
        %v4357 = vpack.c.bf16 %v4266, %v4265
        %v4358 = vpack.c.bf16 %v4268, %v4267
        %v4359 = vpack.c.bf16 %v4270, %v4269
        %v4360 = vpack.c.bf16 %v4272, %v4271
        %v4361 = vpack.c.bf16 %v4274, %v4273
        %v4362 = vpack.c.bf16 %v4276, %v4275
        %v4363 = vpack.c.bf16 %v4278, %v4277
        %v4364 = vpack.c.bf16 %v4280, %v4279
        %v4365 = vpack.c.bf16 %v4282, %v4281
        %v4366 = vpack.c.bf16 %v4284, %v4283
        %v4367 = vpack.c.bf16 %v4286, %v4285
        %v4368 = vpack.c.bf16 %v4288, %v4287
        %v4369 = vpack.c.bf16 %v4290, %v4289
        %v4370 = vpack.c.bf16 %v4292, %v4291
        %v4371 = vpack.c.bf16 %v4294, %v4293
        %v4372 = vpack.c.bf16 %v4296, %v4295
        %v4373 = vpack.c.bf16 %v4298, %v4297
        %v4374 = vpack.c.bf16 %v4300, %v4299
        %v4375 = vpack.c.bf16 %v4302, %v4301
        %v4376 = vpack.c.bf16 %v4304, %v4303
        %v4377 = vpack.c.bf16 %v4306, %v4305
        %v4378 = vpack.c.bf16 %v4308, %v4307
        %v4379 = vpack.c.bf16 %v4310, %v4309
        %v4380 = vpack.c.bf16 %v4312, %v4311
        %v4381 = vpack.c.bf16 %v4314, %v4313
        %v4382 = vpack.c.bf16 %v4316, %v4315
        %v4383 = vpack.c.bf16 %v4318, %v4317
        %v4384 = vpack.c.bf16 %v4320, %v4319
        %s4385 = scalar_lea.vmem %s2, 128
        %v4386 = vld [vmem:[%s4385] sm:$0xf]
        %v4387 = vld [vmem:[%s4385 + $0x4] sm:$0xf]
        %v4388 = vld [vmem:[%s4385 + $0x8] sm:$0xf]
        %v4389 = vld [vmem:[%s4385 + $0xc] sm:$0xf]
        %v4390 = vld [vmem:[%s4385 + $0x10] sm:$0xf]
        %v4391 = vld [vmem:[%s4385 + $0x14] sm:$0xf]
        %v4392 = vld [vmem:[%s4385 + $0x18] sm:$0xf]
        %v4393 = vld [vmem:[%s4385 + $0x1c] sm:$0xf]
        %v4394 = vld [vmem:[%s4385 + $0x20] sm:$0xf]
        %v4395 = vld [vmem:[%s4385 + $0x24] sm:$0xf]
        %v4396 = vld [vmem:[%s4385 + $0x28] sm:$0xf]
        %v4397 = vld [vmem:[%s4385 + $0x2c] sm:$0xf]
        %v4398 = vld [vmem:[%s4385 + $0x30] sm:$0xf]
        %v4399 = vld [vmem:[%s4385 + $0x34] sm:$0xf]
        %v4400 = vld [vmem:[%s4385 + $0x38] sm:$0xf]
        %v4401 = vld [vmem:[%s4385 + $0x3c] sm:$0xf]
        %v4402 = vlaneseq
        %v4403 = vshrl.u32 %v4402, 7
        %v4404 = vsub.s32 2, %v4403
        %v4405 = vrot.slane %v938, %v4404
        %v4422 = vunpack.c.l.b16 %v4386
        %v4423 = vunpack.c.l.b16 %v4387
        %v4424 = vunpack.c.l.b16 %v4388
        %v4425 = vunpack.c.l.b16 %v4389
        %v4426 = vunpack.c.l.b16 %v4390
        %v4427 = vunpack.c.l.b16 %v4391
        %v4428 = vunpack.c.l.b16 %v4392
        %v4429 = vunpack.c.l.b16 %v4393
        %v4430 = vunpack.c.l.b16 %v4394
        %v4431 = vunpack.c.l.b16 %v4395
        %v4432 = vunpack.c.l.b16 %v4396
        %v4433 = vunpack.c.l.b16 %v4397
        %v4434 = vunpack.c.l.b16 %v4398
        %v4435 = vunpack.c.l.b16 %v4399
        %v4436 = vunpack.c.l.b16 %v4400
        %v4437 = vunpack.c.l.b16 %v4401
        %v4438 = vpack.c.b16 %v4423, %v4422
        %v4439 = vpack.c.b16 %v4425, %v4424
        %v4440 = vpack.c.b16 %v4427, %v4426
        %v4441 = vpack.c.b16 %v4429, %v4428
        %v4442 = vpack.c.b16 %v4431, %v4430
        %v4443 = vpack.c.b16 %v4433, %v4432
        %v4444 = vpack.c.b16 %v4435, %v4434
        %v4445 = vpack.c.b16 %v4437, %v4436
        %4454 = vmatprep.subr.bf16.mxu0 0
        %4455 = vmatpush1.bf16.msra.mxu0 %v4445
        %4456 = vmatprep.subr.bf16.mxu0 0
        %4457 = vmatpush1.bf16.msra.mxu0 %v4444
        %4458 = vmatprep.subr.bf16.mxu0 0
        %4459 = vmatpush1.bf16.msra.mxu0 %v4443
        %4460 = vmatprep.subr.bf16.mxu0 0
        %4461 = vmatpush1.bf16.msra.mxu0 %v4442
        %4462 = vmatprep.subr.bf16.mxu0 0
        %4463 = vmatpush1.bf16.msra.mxu0 %v4441
        %4464 = vmatprep.subr.bf16.mxu0 0
        %4465 = vmatpush1.bf16.msra.mxu0 %v4440
        %4466 = vmatprep.subr.bf16.mxu0 0
        %4467 = vmatpush1.bf16.msra.mxu0 %v4439
        %4468 = vmatprep.subr.bf16.mxu0 0
        %4469 = vmatpush1.bf16.msra.mxu0 %v4438
        %4470 = vmatprep.subr.bf16.mxu0 0
        %4471 = vmatpush2.bf16.msra.mxu0 0
        %4472 = vmatprep.subr.bf16.mxu0 0
        %4473 = vmatpush2.bf16.msra.mxu0 0
        %4474 = vmatprep.subr.bf16.mxu0 0
        %4475 = vmatpush2.bf16.msra.mxu0 0
        %4476 = vmatprep.subr.bf16.mxu0 0
        %4477 = vmatpush2.bf16.msra.mxu0 0
        %4478 = vmatprep.subr.bf16.mxu0 0
        %4479 = vmatpush2.bf16.msra.mxu0 0
        %4480 = vmatprep.subr.bf16.mxu0 0
        %4481 = vmatpush2.bf16.msra.mxu0 0
        %4482 = vmatprep.subr.bf16.mxu0 0
        %4483 = vmatpush2.bf16.msra.mxu0 0
        %4484 = vmatprep.subr.bf16.mxu0 0
        %4485 = vmatpush2.bf16.msra.mxu0 0
        %4486 = vmatprep.mubr.bf16.mxu0 0
        %4487 = vmatmul.mubr.bf16.gmra.mxu0 %v4321
        %v4488 = vpop.f32.mrf.mxu0
        %v4489 = vadd.f32 %v4405, %v4488
        %v4490 = vpop.f32.mrf.mxu0
        %v4491 = vpop.f32.mrf.mxu0
        %v4492 = vadd.f32 %v4405, %v4491
        %v4493 = vpop.f32.mrf.mxu0
        %4494 = vmatprep.mubr.bf16.mxu0 0
        %4495 = vmatmul.mubr.bf16.gmra.mxu0 %v4322
        %v4496 = vpop.f32.mrf.mxu0
        %v4497 = vadd.f32 %v4405, %v4496
        %v4498 = vpop.f32.mrf.mxu0
        %v4499 = vpop.f32.mrf.mxu0
        %v4500 = vadd.f32 %v4405, %v4499
        %v4501 = vpop.f32.mrf.mxu0
        %4502 = vmatprep.mubr.bf16.mxu0 0
        %4503 = vmatmul.mubr.bf16.gmra.mxu0 %v4323
        %v4504 = vpop.f32.mrf.mxu0
        %v4505 = vadd.f32 %v4405, %v4504
        %v4506 = vpop.f32.mrf.mxu0
        %v4507 = vpop.f32.mrf.mxu0
        %v4508 = vadd.f32 %v4405, %v4507
        %v4509 = vpop.f32.mrf.mxu0
        %4510 = vmatprep.mubr.bf16.mxu0 0
        %4511 = vmatmul.mubr.bf16.gmra.mxu0 %v4324
        %v4512 = vpop.f32.mrf.mxu0
        %v4513 = vadd.f32 %v4405, %v4512
        %v4514 = vpop.f32.mrf.mxu0
        %v4515 = vpop.f32.mrf.mxu0
        %v4516 = vadd.f32 %v4405, %v4515
        %v4517 = vpop.f32.mrf.mxu0
        %4518 = vmatprep.mubr.bf16.mxu0 0
        %4519 = vmatmul.mubr.bf16.gmra.mxu0 %v4325
        %v4520 = vpop.f32.mrf.mxu0
        %v4521 = vadd.f32 %v4405, %v4520
        %v4522 = vpop.f32.mrf.mxu0
        %v4523 = vpop.f32.mrf.mxu0
        %v4524 = vadd.f32 %v4405, %v4523
        %v4525 = vpop.f32.mrf.mxu0
        %4526 = vmatprep.mubr.bf16.mxu0 0
        %4527 = vmatmul.mubr.bf16.gmra.mxu0 %v4326
        %v4528 = vpop.f32.mrf.mxu0
        %v4529 = vadd.f32 %v4405, %v4528
        %v4530 = vpop.f32.mrf.mxu0
        %v4531 = vpop.f32.mrf.mxu0
        %v4532 = vadd.f32 %v4405, %v4531
        %v4533 = vpop.f32.mrf.mxu0
        %4534 = vmatprep.mubr.bf16.mxu0 0
        %4535 = vmatmul.mubr.bf16.gmra.mxu0 %v4327
        %v4536 = vpop.f32.mrf.mxu0
        %v4537 = vadd.f32 %v4405, %v4536
        %v4538 = vpop.f32.mrf.mxu0
        %v4539 = vpop.f32.mrf.mxu0
        %v4540 = vadd.f32 %v4405, %v4539
        %v4541 = vpop.f32.mrf.mxu0
        %4542 = vmatprep.mubr.bf16.mxu0 0
        %4543 = vmatmul.mubr.bf16.gmra.mxu0 %v4328
        %v4544 = vpop.f32.mrf.mxu0
        %v4545 = vadd.f32 %v4405, %v4544
        %v4546 = vpop.f32.mrf.mxu0
        %v4547 = vpop.f32.mrf.mxu0
        %v4548 = vadd.f32 %v4405, %v4547
        %v4549 = vpop.f32.mrf.mxu0
        %4550 = vmatprep.mubr.bf16.mxu0 0
        %4551 = vmatmul.mubr.bf16.gmra.mxu0 %v4329
        %v4552 = vpop.f32.mrf.mxu0
        %v4553 = vadd.f32 %v4405, %v4552
        %v4554 = vpop.f32.mrf.mxu0
        %v4555 = vpop.f32.mrf.mxu0
        %v4556 = vadd.f32 %v4405, %v4555
        %v4557 = vpop.f32.mrf.mxu0
        %4558 = vmatprep.mubr.bf16.mxu0 0
        %4559 = vmatmul.mubr.bf16.gmra.mxu0 %v4330
        %v4560 = vpop.f32.mrf.mxu0
        %v4561 = vadd.f32 %v4405, %v4560
        %v4562 = vpop.f32.mrf.mxu0
        %v4563 = vpop.f32.mrf.mxu0
        %v4564 = vadd.f32 %v4405, %v4563
        %v4565 = vpop.f32.mrf.mxu0
        %4566 = vmatprep.mubr.bf16.mxu0 0
        %4567 = vmatmul.mubr.bf16.gmra.mxu0 %v4331
        %v4568 = vpop.f32.mrf.mxu0
        %v4569 = vadd.f32 %v4405, %v4568
        %v4570 = vpop.f32.mrf.mxu0
        %v4571 = vpop.f32.mrf.mxu0
        %v4572 = vadd.f32 %v4405, %v4571
        %v4573 = vpop.f32.mrf.mxu0
        %4574 = vmatprep.mubr.bf16.mxu0 0
        %4575 = vmatmul.mubr.bf16.gmra.mxu0 %v4332
        %v4576 = vpop.f32.mrf.mxu0
        %v4577 = vadd.f32 %v4405, %v4576
        %v4578 = vpop.f32.mrf.mxu0
        %v4579 = vpop.f32.mrf.mxu0
        %v4580 = vadd.f32 %v4405, %v4579
        %v4581 = vpop.f32.mrf.mxu0
        %4582 = vmatprep.mubr.bf16.mxu0 0
        %4583 = vmatmul.mubr.bf16.gmra.mxu0 %v4333
        %v4584 = vpop.f32.mrf.mxu0
        %v4585 = vadd.f32 %v4405, %v4584
        %v4586 = vpop.f32.mrf.mxu0
        %v4587 = vpop.f32.mrf.mxu0
        %v4588 = vadd.f32 %v4405, %v4587
        %v4589 = vpop.f32.mrf.mxu0
        %4590 = vmatprep.mubr.bf16.mxu0 0
        %4591 = vmatmul.mubr.bf16.gmra.mxu0 %v4334
        %v4592 = vpop.f32.mrf.mxu0
        %v4593 = vadd.f32 %v4405, %v4592
        %v4594 = vpop.f32.mrf.mxu0
        %v4595 = vpop.f32.mrf.mxu0
        %v4596 = vadd.f32 %v4405, %v4595
        %v4597 = vpop.f32.mrf.mxu0
        %4598 = vmatprep.mubr.bf16.mxu0 0
        %4599 = vmatmul.mubr.bf16.gmra.mxu0 %v4335
        %v4600 = vpop.f32.mrf.mxu0
        %v4601 = vadd.f32 %v4405, %v4600
        %v4602 = vpop.f32.mrf.mxu0
        %v4603 = vpop.f32.mrf.mxu0
        %v4604 = vadd.f32 %v4405, %v4603
        %v4605 = vpop.f32.mrf.mxu0
        %4606 = vmatprep.mubr.bf16.mxu0 0
        %4607 = vmatmul.mubr.bf16.gmra.mxu0 %v4336
        %v4608 = vpop.f32.mrf.mxu0
        %v4609 = vadd.f32 %v4405, %v4608
        %v4610 = vpop.f32.mrf.mxu0
        %v4611 = vpop.f32.mrf.mxu0
        %v4612 = vadd.f32 %v4405, %v4611
        %v4613 = vpop.f32.mrf.mxu0
        %4614 = vmatprep.mubr.bf16.mxu0 0
        %4615 = vmatmul.mubr.bf16.gmra.mxu0 %v4337
        %v4616 = vpop.f32.mrf.mxu0
        %v4617 = vadd.f32 %v4405, %v4616
        %v4618 = vpop.f32.mrf.mxu0
        %v4619 = vpop.f32.mrf.mxu0
        %v4620 = vadd.f32 %v4405, %v4619
        %v4621 = vpop.f32.mrf.mxu0
        %4622 = vmatprep.mubr.bf16.mxu0 0
        %4623 = vmatmul.mubr.bf16.gmra.mxu0 %v4338
        %v4624 = vpop.f32.mrf.mxu0
        %v4625 = vadd.f32 %v4405, %v4624
        %v4626 = vpop.f32.mrf.mxu0
        %v4627 = vpop.f32.mrf.mxu0
        %v4628 = vadd.f32 %v4405, %v4627
        %v4629 = vpop.f32.mrf.mxu0
        %4630 = vmatprep.mubr.bf16.mxu0 0
        %4631 = vmatmul.mubr.bf16.gmra.mxu0 %v4339
        %v4632 = vpop.f32.mrf.mxu0
        %v4633 = vadd.f32 %v4405, %v4632
        %v4634 = vpop.f32.mrf.mxu0
        %v4635 = vpop.f32.mrf.mxu0
        %v4636 = vadd.f32 %v4405, %v4635
        %v4637 = vpop.f32.mrf.mxu0
        %4638 = vmatprep.mubr.bf16.mxu0 0
        %4639 = vmatmul.mubr.bf16.gmra.mxu0 %v4340
        %v4640 = vpop.f32.mrf.mxu0
        %v4641 = vadd.f32 %v4405, %v4640
        %v4642 = vpop.f32.mrf.mxu0
        %v4643 = vpop.f32.mrf.mxu0
        %v4644 = vadd.f32 %v4405, %v4643
        %v4645 = vpop.f32.mrf.mxu0
        %4646 = vmatprep.mubr.bf16.mxu0 0
        %4647 = vmatmul.mubr.bf16.gmra.mxu0 %v4341
        %v4648 = vpop.f32.mrf.mxu0
        %v4649 = vadd.f32 %v4405, %v4648
        %v4650 = vpop.f32.mrf.mxu0
        %v4651 = vpop.f32.mrf.mxu0
        %v4652 = vadd.f32 %v4405, %v4651
        %v4653 = vpop.f32.mrf.mxu0
        %4654 = vmatprep.mubr.bf16.mxu0 0
        %4655 = vmatmul.mubr.bf16.gmra.mxu0 %v4342
        %v4656 = vpop.f32.mrf.mxu0
        %v4657 = vadd.f32 %v4405, %v4656
        %v4658 = vpop.f32.mrf.mxu0
        %v4659 = vpop.f32.mrf.mxu0
        %v4660 = vadd.f32 %v4405, %v4659
        %v4661 = vpop.f32.mrf.mxu0
        %4662 = vmatprep.mubr.bf16.mxu0 0
        %4663 = vmatmul.mubr.bf16.gmra.mxu0 %v4343
        %v4664 = vpop.f32.mrf.mxu0
        %v4665 = vadd.f32 %v4405, %v4664
        %v4666 = vpop.f32.mrf.mxu0
        %v4667 = vpop.f32.mrf.mxu0
        %v4668 = vadd.f32 %v4405, %v4667
        %v4669 = vpop.f32.mrf.mxu0
        %4670 = vmatprep.mubr.bf16.mxu0 0
        %4671 = vmatmul.mubr.bf16.gmra.mxu0 %v4344
        %v4672 = vpop.f32.mrf.mxu0
        %v4673 = vadd.f32 %v4405, %v4672
        %v4674 = vpop.f32.mrf.mxu0
        %v4675 = vpop.f32.mrf.mxu0
        %v4676 = vadd.f32 %v4405, %v4675
        %v4677 = vpop.f32.mrf.mxu0
        %4678 = vmatprep.mubr.bf16.mxu0 0
        %4679 = vmatmul.mubr.bf16.gmra.mxu0 %v4345
        %v4680 = vpop.f32.mrf.mxu0
        %v4681 = vadd.f32 %v4405, %v4680
        %v4682 = vpop.f32.mrf.mxu0
        %v4683 = vpop.f32.mrf.mxu0
        %v4684 = vadd.f32 %v4405, %v4683
        %v4685 = vpop.f32.mrf.mxu0
        %4686 = vmatprep.mubr.bf16.mxu0 0
        %4687 = vmatmul.mubr.bf16.gmra.mxu0 %v4346
        %v4688 = vpop.f32.mrf.mxu0
        %v4689 = vadd.f32 %v4405, %v4688
        %v4690 = vpop.f32.mrf.mxu0
        %v4691 = vpop.f32.mrf.mxu0
        %v4692 = vadd.f32 %v4405, %v4691
        %v4693 = vpop.f32.mrf.mxu0
        %4694 = vmatprep.mubr.bf16.mxu0 0
        %4695 = vmatmul.mubr.bf16.gmra.mxu0 %v4347
        %v4696 = vpop.f32.mrf.mxu0
        %v4697 = vadd.f32 %v4405, %v4696
        %v4698 = vpop.f32.mrf.mxu0
        %v4699 = vpop.f32.mrf.mxu0
        %v4700 = vadd.f32 %v4405, %v4699
        %v4701 = vpop.f32.mrf.mxu0
        %4702 = vmatprep.mubr.bf16.mxu0 0
        %4703 = vmatmul.mubr.bf16.gmra.mxu0 %v4348
        %v4704 = vpop.f32.mrf.mxu0
        %v4705 = vadd.f32 %v4405, %v4704
        %v4706 = vpop.f32.mrf.mxu0
        %v4707 = vpop.f32.mrf.mxu0
        %v4708 = vadd.f32 %v4405, %v4707
        %v4709 = vpop.f32.mrf.mxu0
        %4710 = vmatprep.mubr.bf16.mxu0 0
        %4711 = vmatmul.mubr.bf16.gmra.mxu0 %v4349
        %v4712 = vpop.f32.mrf.mxu0
        %v4713 = vadd.f32 %v4405, %v4712
        %v4714 = vpop.f32.mrf.mxu0
        %v4715 = vpop.f32.mrf.mxu0
        %v4716 = vadd.f32 %v4405, %v4715
        %v4717 = vpop.f32.mrf.mxu0
        %4718 = vmatprep.mubr.bf16.mxu0 0
        %4719 = vmatmul.mubr.bf16.gmra.mxu0 %v4350
        %v4720 = vpop.f32.mrf.mxu0
        %v4721 = vadd.f32 %v4405, %v4720
        %v4722 = vpop.f32.mrf.mxu0
        %v4723 = vpop.f32.mrf.mxu0
        %v4724 = vadd.f32 %v4405, %v4723
        %v4725 = vpop.f32.mrf.mxu0
        %4726 = vmatprep.mubr.bf16.mxu0 0
        %4727 = vmatmul.mubr.bf16.gmra.mxu0 %v4351
        %v4728 = vpop.f32.mrf.mxu0
        %v4729 = vadd.f32 %v4405, %v4728
        %v4730 = vpop.f32.mrf.mxu0
        %v4731 = vpop.f32.mrf.mxu0
        %v4732 = vadd.f32 %v4405, %v4731
        %v4733 = vpop.f32.mrf.mxu0
        %4734 = vmatprep.mubr.bf16.mxu0 0
        %4735 = vmatmul.mubr.bf16.gmra.mxu0 %v4352
        %v4736 = vpop.f32.mrf.mxu0
        %v4737 = vadd.f32 %v4405, %v4736
        %v4738 = vpop.f32.mrf.mxu0
        %v4739 = vpop.f32.mrf.mxu0
        %v4740 = vadd.f32 %v4405, %v4739
        %v4741 = vpop.f32.mrf.mxu0
        %4742 = vmatprep.mubr.bf16.mxu0 0
        %4743 = vmatmul.mubr.bf16.gmra.mxu0 %v4353
        %v4744 = vpop.f32.mrf.mxu0
        %v4745 = vadd.f32 %v4405, %v4744
        %v4746 = vpop.f32.mrf.mxu0
        %v4747 = vpop.f32.mrf.mxu0
        %v4748 = vadd.f32 %v4405, %v4747
        %v4749 = vpop.f32.mrf.mxu0
        %4750 = vmatprep.mubr.bf16.mxu0 0
        %4751 = vmatmul.mubr.bf16.gmra.mxu0 %v4354
        %v4752 = vpop.f32.mrf.mxu0
        %v4753 = vadd.f32 %v4405, %v4752
        %v4754 = vpop.f32.mrf.mxu0
        %v4755 = vpop.f32.mrf.mxu0
        %v4756 = vadd.f32 %v4405, %v4755
        %v4757 = vpop.f32.mrf.mxu0
        %4758 = vmatprep.mubr.bf16.mxu0 0
        %4759 = vmatmul.mubr.bf16.gmra.mxu0 %v4355
        %v4760 = vpop.f32.mrf.mxu0
        %v4761 = vadd.f32 %v4405, %v4760
        %v4762 = vpop.f32.mrf.mxu0
        %v4763 = vpop.f32.mrf.mxu0
        %v4764 = vadd.f32 %v4405, %v4763
        %v4765 = vpop.f32.mrf.mxu0
        %4766 = vmatprep.mubr.bf16.mxu0 0
        %4767 = vmatmul.mubr.bf16.gmra.mxu0 %v4356
        %v4768 = vpop.f32.mrf.mxu0
        %v4769 = vadd.f32 %v4405, %v4768
        %v4770 = vpop.f32.mrf.mxu0
        %v4771 = vpop.f32.mrf.mxu0
        %v4772 = vadd.f32 %v4405, %v4771
        %v4773 = vpop.f32.mrf.mxu0
        %4774 = vmatprep.mubr.bf16.mxu0 0
        %4775 = vmatmul.mubr.bf16.gmra.mxu0 %v4357
        %v4776 = vpop.f32.mrf.mxu0
        %v4777 = vadd.f32 %v4405, %v4776
        %v4778 = vpop.f32.mrf.mxu0
        %v4779 = vpop.f32.mrf.mxu0
        %v4780 = vadd.f32 %v4405, %v4779
        %v4781 = vpop.f32.mrf.mxu0
        %4782 = vmatprep.mubr.bf16.mxu0 0
        %4783 = vmatmul.mubr.bf16.gmra.mxu0 %v4358
        %v4784 = vpop.f32.mrf.mxu0
        %v4785 = vadd.f32 %v4405, %v4784
        %v4786 = vpop.f32.mrf.mxu0
        %v4787 = vpop.f32.mrf.mxu0
        %v4788 = vadd.f32 %v4405, %v4787
        %v4789 = vpop.f32.mrf.mxu0
        %4790 = vmatprep.mubr.bf16.mxu0 0
        %4791 = vmatmul.mubr.bf16.gmra.mxu0 %v4359
        %v4792 = vpop.f32.mrf.mxu0
        %v4793 = vadd.f32 %v4405, %v4792
        %v4794 = vpop.f32.mrf.mxu0
        %v4795 = vpop.f32.mrf.mxu0
        %v4796 = vadd.f32 %v4405, %v4795
        %v4797 = vpop.f32.mrf.mxu0
        %4798 = vmatprep.mubr.bf16.mxu0 0
        %4799 = vmatmul.mubr.bf16.gmra.mxu0 %v4360
        %v4800 = vpop.f32.mrf.mxu0
        %v4801 = vadd.f32 %v4405, %v4800
        %v4802 = vpop.f32.mrf.mxu0
        %v4803 = vpop.f32.mrf.mxu0
        %v4804 = vadd.f32 %v4405, %v4803
        %v4805 = vpop.f32.mrf.mxu0
        %4806 = vmatprep.mubr.bf16.mxu0 0
        %4807 = vmatmul.mubr.bf16.gmra.mxu0 %v4361
        %v4808 = vpop.f32.mrf.mxu0
        %v4809 = vadd.f32 %v4405, %v4808
        %v4810 = vpop.f32.mrf.mxu0
        %v4811 = vpop.f32.mrf.mxu0
        %v4812 = vadd.f32 %v4405, %v4811
        %v4813 = vpop.f32.mrf.mxu0
        %4814 = vmatprep.mubr.bf16.mxu0 0
        %4815 = vmatmul.mubr.bf16.gmra.mxu0 %v4362
        %v4816 = vpop.f32.mrf.mxu0
        %v4817 = vadd.f32 %v4405, %v4816
        %v4818 = vpop.f32.mrf.mxu0
        %v4819 = vpop.f32.mrf.mxu0
        %v4820 = vadd.f32 %v4405, %v4819
        %v4821 = vpop.f32.mrf.mxu0
        %4822 = vmatprep.mubr.bf16.mxu0 0
        %4823 = vmatmul.mubr.bf16.gmra.mxu0 %v4363
        %v4824 = vpop.f32.mrf.mxu0
        %v4825 = vadd.f32 %v4405, %v4824
        %v4826 = vpop.f32.mrf.mxu0
        %v4827 = vpop.f32.mrf.mxu0
        %v4828 = vadd.f32 %v4405, %v4827
        %v4829 = vpop.f32.mrf.mxu0
        %4830 = vmatprep.mubr.bf16.mxu0 0
        %4831 = vmatmul.mubr.bf16.gmra.mxu0 %v4364
        %v4832 = vpop.f32.mrf.mxu0
        %v4833 = vadd.f32 %v4405, %v4832
        %v4834 = vpop.f32.mrf.mxu0
        %v4835 = vpop.f32.mrf.mxu0
        %v4836 = vadd.f32 %v4405, %v4835
        %v4837 = vpop.f32.mrf.mxu0
        %4838 = vmatprep.mubr.bf16.mxu0 0
        %4839 = vmatmul.mubr.bf16.gmra.mxu0 %v4365
        %v4840 = vpop.f32.mrf.mxu0
        %v4841 = vadd.f32 %v4405, %v4840
        %v4842 = vpop.f32.mrf.mxu0
        %v4843 = vpop.f32.mrf.mxu0
        %v4844 = vadd.f32 %v4405, %v4843
        %v4845 = vpop.f32.mrf.mxu0
        %4846 = vmatprep.mubr.bf16.mxu0 0
        %4847 = vmatmul.mubr.bf16.gmra.mxu0 %v4366
        %v4848 = vpop.f32.mrf.mxu0
        %v4849 = vadd.f32 %v4405, %v4848
        %v4850 = vpop.f32.mrf.mxu0
        %v4851 = vpop.f32.mrf.mxu0
        %v4852 = vadd.f32 %v4405, %v4851
        %v4853 = vpop.f32.mrf.mxu0
        %4854 = vmatprep.mubr.bf16.mxu0 0
        %4855 = vmatmul.mubr.bf16.gmra.mxu0 %v4367
        %v4856 = vpop.f32.mrf.mxu0
        %v4857 = vadd.f32 %v4405, %v4856
        %v4858 = vpop.f32.mrf.mxu0
        %v4859 = vpop.f32.mrf.mxu0
        %v4860 = vadd.f32 %v4405, %v4859
        %v4861 = vpop.f32.mrf.mxu0
        %4862 = vmatprep.mubr.bf16.mxu0 0
        %4863 = vmatmul.mubr.bf16.gmra.mxu0 %v4368
        %v4864 = vpop.f32.mrf.mxu0
        %v4865 = vadd.f32 %v4405, %v4864
        %v4866 = vpop.f32.mrf.mxu0
        %v4867 = vpop.f32.mrf.mxu0
        %v4868 = vadd.f32 %v4405, %v4867
        %v4869 = vpop.f32.mrf.mxu0
        %4870 = vmatprep.mubr.bf16.mxu0 0
        %4871 = vmatmul.mubr.bf16.gmra.mxu0 %v4369
        %v4872 = vpop.f32.mrf.mxu0
        %v4873 = vadd.f32 %v4405, %v4872
        %v4874 = vpop.f32.mrf.mxu0
        %v4875 = vpop.f32.mrf.mxu0
        %v4876 = vadd.f32 %v4405, %v4875
        %v4877 = vpop.f32.mrf.mxu0
        %4878 = vmatprep.mubr.bf16.mxu0 0
        %4879 = vmatmul.mubr.bf16.gmra.mxu0 %v4370
        %v4880 = vpop.f32.mrf.mxu0
        %v4881 = vadd.f32 %v4405, %v4880
        %v4882 = vpop.f32.mrf.mxu0
        %v4883 = vpop.f32.mrf.mxu0
        %v4884 = vadd.f32 %v4405, %v4883
        %v4885 = vpop.f32.mrf.mxu0
        %4886 = vmatprep.mubr.bf16.mxu0 0
        %4887 = vmatmul.mubr.bf16.gmra.mxu0 %v4371
        %v4888 = vpop.f32.mrf.mxu0
        %v4889 = vadd.f32 %v4405, %v4888
        %v4890 = vpop.f32.mrf.mxu0
        %v4891 = vpop.f32.mrf.mxu0
        %v4892 = vadd.f32 %v4405, %v4891
        %v4893 = vpop.f32.mrf.mxu0
        %4894 = vmatprep.mubr.bf16.mxu0 0
        %4895 = vmatmul.mubr.bf16.gmra.mxu0 %v4372
        %v4896 = vpop.f32.mrf.mxu0
        %v4897 = vadd.f32 %v4405, %v4896
        %v4898 = vpop.f32.mrf.mxu0
        %v4899 = vpop.f32.mrf.mxu0
        %v4900 = vadd.f32 %v4405, %v4899
        %v4901 = vpop.f32.mrf.mxu0
        %4902 = vmatprep.mubr.bf16.mxu0 0
        %4903 = vmatmul.mubr.bf16.gmra.mxu0 %v4373
        %v4904 = vpop.f32.mrf.mxu0
        %v4905 = vadd.f32 %v4405, %v4904
        %v4906 = vpop.f32.mrf.mxu0
        %v4907 = vpop.f32.mrf.mxu0
        %v4908 = vadd.f32 %v4405, %v4907
        %v4909 = vpop.f32.mrf.mxu0
        %4910 = vmatprep.mubr.bf16.mxu0 0
        %4911 = vmatmul.mubr.bf16.gmra.mxu0 %v4374
        %v4912 = vpop.f32.mrf.mxu0
        %v4913 = vadd.f32 %v4405, %v4912
        %v4914 = vpop.f32.mrf.mxu0
        %v4915 = vpop.f32.mrf.mxu0
        %v4916 = vadd.f32 %v4405, %v4915
        %v4917 = vpop.f32.mrf.mxu0
        %4918 = vmatprep.mubr.bf16.mxu0 0
        %4919 = vmatmul.mubr.bf16.gmra.mxu0 %v4375
        %v4920 = vpop.f32.mrf.mxu0
        %v4921 = vadd.f32 %v4405, %v4920
        %v4922 = vpop.f32.mrf.mxu0
        %v4923 = vpop.f32.mrf.mxu0
        %v4924 = vadd.f32 %v4405, %v4923
        %v4925 = vpop.f32.mrf.mxu0
        %4926 = vmatprep.mubr.bf16.mxu0 0
        %4927 = vmatmul.mubr.bf16.gmra.mxu0 %v4376
        %v4928 = vpop.f32.mrf.mxu0
        %v4929 = vadd.f32 %v4405, %v4928
        %v4930 = vpop.f32.mrf.mxu0
        %v4931 = vpop.f32.mrf.mxu0
        %v4932 = vadd.f32 %v4405, %v4931
        %v4933 = vpop.f32.mrf.mxu0
        %4934 = vmatprep.mubr.bf16.mxu0 0
        %4935 = vmatmul.mubr.bf16.gmra.mxu0 %v4377
        %v4936 = vpop.f32.mrf.mxu0
        %v4937 = vadd.f32 %v4405, %v4936
        %v4938 = vpop.f32.mrf.mxu0
        %v4939 = vpop.f32.mrf.mxu0
        %v4940 = vadd.f32 %v4405, %v4939
        %v4941 = vpop.f32.mrf.mxu0
        %4942 = vmatprep.mubr.bf16.mxu0 0
        %4943 = vmatmul.mubr.bf16.gmra.mxu0 %v4378
        %v4944 = vpop.f32.mrf.mxu0
        %v4945 = vadd.f32 %v4405, %v4944
        %v4946 = vpop.f32.mrf.mxu0
        %v4947 = vpop.f32.mrf.mxu0
        %v4948 = vadd.f32 %v4405, %v4947
        %v4949 = vpop.f32.mrf.mxu0
        %4950 = vmatprep.mubr.bf16.mxu0 0
        %4951 = vmatmul.mubr.bf16.gmra.mxu0 %v4379
        %v4952 = vpop.f32.mrf.mxu0
        %v4953 = vadd.f32 %v4405, %v4952
        %v4954 = vpop.f32.mrf.mxu0
        %v4955 = vpop.f32.mrf.mxu0
        %v4956 = vadd.f32 %v4405, %v4955
        %v4957 = vpop.f32.mrf.mxu0
        %4958 = vmatprep.mubr.bf16.mxu0 0
        %4959 = vmatmul.mubr.bf16.gmra.mxu0 %v4380
        %v4960 = vpop.f32.mrf.mxu0
        %v4961 = vadd.f32 %v4405, %v4960
        %v4962 = vpop.f32.mrf.mxu0
        %v4963 = vpop.f32.mrf.mxu0
        %v4964 = vadd.f32 %v4405, %v4963
        %v4965 = vpop.f32.mrf.mxu0
        %4966 = vmatprep.mubr.bf16.mxu0 0
        %4967 = vmatmul.mubr.bf16.gmra.mxu0 %v4381
        %v4968 = vpop.f32.mrf.mxu0
        %v4969 = vadd.f32 %v4405, %v4968
        %v4970 = vpop.f32.mrf.mxu0
        %v4971 = vpop.f32.mrf.mxu0
        %v4972 = vadd.f32 %v4405, %v4971
        %v4973 = vpop.f32.mrf.mxu0
        %4974 = vmatprep.mubr.bf16.mxu0 0
        %4975 = vmatmul.mubr.bf16.gmra.mxu0 %v4382
        %v4976 = vpop.f32.mrf.mxu0
        %v4977 = vadd.f32 %v4405, %v4976
        %v4978 = vpop.f32.mrf.mxu0
        %v4979 = vpop.f32.mrf.mxu0
        %v4980 = vadd.f32 %v4405, %v4979
        %v4981 = vpop.f32.mrf.mxu0
        %4982 = vmatprep.mubr.bf16.mxu0 0
        %4983 = vmatmul.mubr.bf16.gmra.mxu0 %v4383
        %v4984 = vpop.f32.mrf.mxu0
        %v4985 = vadd.f32 %v4405, %v4984
        %v4986 = vpop.f32.mrf.mxu0
        %v4987 = vpop.f32.mrf.mxu0
        %v4988 = vadd.f32 %v4405, %v4987
        %v4989 = vpop.f32.mrf.mxu0
        %4990 = vmatprep.mubr.bf16.mxu0 0
        %4991 = vmatmul.mubr.bf16.gmra.mxu0 %v4384
        %v4992 = vpop.f32.mrf.mxu0
        %v4993 = vadd.f32 %v4405, %v4992
        %v4994 = vpop.f32.mrf.mxu0
        %v4995 = vpop.f32.mrf.mxu0
        %v4996 = vadd.f32 %v4405, %v4995
        %v4997 = vpop.f32.mrf.mxu0
        %4998 = vdwg.mxu0
        %v4999 = vmax.f32 %v4489, 0.0
        %v5000 = vmax.f32 %v4492, 0.0
        %v5001 = vmax.f32 %v4497, 0.0
        %v5002 = vmax.f32 %v4500, 0.0
        %v5003 = vmax.f32 %v4505, 0.0
        %v5004 = vmax.f32 %v4508, 0.0
        %v5005 = vmax.f32 %v4513, 0.0
        %v5006 = vmax.f32 %v4516, 0.0
        %v5007 = vmax.f32 %v4521, 0.0
        %v5008 = vmax.f32 %v4524, 0.0
        %v5009 = vmax.f32 %v4529, 0.0
        %v5010 = vmax.f32 %v4532, 0.0
        %v5011 = vmax.f32 %v4537, 0.0
        %v5012 = vmax.f32 %v4540, 0.0
        %v5013 = vmax.f32 %v4545, 0.0
        %v5014 = vmax.f32 %v4548, 0.0
        %v5015 = vmax.f32 %v4553, 0.0
        %v5016 = vmax.f32 %v4556, 0.0
        %v5017 = vmax.f32 %v4561, 0.0
        %v5018 = vmax.f32 %v4564, 0.0
        %v5019 = vmax.f32 %v4569, 0.0
        %v5020 = vmax.f32 %v4572, 0.0
        %v5021 = vmax.f32 %v4577, 0.0
        %v5022 = vmax.f32 %v4580, 0.0
        %v5023 = vmax.f32 %v4585, 0.0
        %v5024 = vmax.f32 %v4588, 0.0
        %v5025 = vmax.f32 %v4593, 0.0
        %v5026 = vmax.f32 %v4596, 0.0
        %v5027 = vmax.f32 %v4601, 0.0
        %v5028 = vmax.f32 %v4604, 0.0
        %v5029 = vmax.f32 %v4609, 0.0
        %v5030 = vmax.f32 %v4612, 0.0
        %v5031 = vmax.f32 %v4617, 0.0
        %v5032 = vmax.f32 %v4620, 0.0
        %v5033 = vmax.f32 %v4625, 0.0
        %v5034 = vmax.f32 %v4628, 0.0
        %v5035 = vmax.f32 %v4633, 0.0
        %v5036 = vmax.f32 %v4636, 0.0
        %v5037 = vmax.f32 %v4641, 0.0
        %v5038 = vmax.f32 %v4644, 0.0
        %v5039 = vmax.f32 %v4649, 0.0
        %v5040 = vmax.f32 %v4652, 0.0
        %v5041 = vmax.f32 %v4657, 0.0
        %v5042 = vmax.f32 %v4660, 0.0
        %v5043 = vmax.f32 %v4665, 0.0
        %v5044 = vmax.f32 %v4668, 0.0
        %v5045 = vmax.f32 %v4673, 0.0
        %v5046 = vmax.f32 %v4676, 0.0
        %v5047 = vmax.f32 %v4681, 0.0
        %v5048 = vmax.f32 %v4684, 0.0
        %v5049 = vmax.f32 %v4689, 0.0
        %v5050 = vmax.f32 %v4692, 0.0
        %v5051 = vmax.f32 %v4697, 0.0
        %v5052 = vmax.f32 %v4700, 0.0
        %v5053 = vmax.f32 %v4705, 0.0
        %v5054 = vmax.f32 %v4708, 0.0
        %v5055 = vmax.f32 %v4713, 0.0
        %v5056 = vmax.f32 %v4716, 0.0
        %v5057 = vmax.f32 %v4721, 0.0
        %v5058 = vmax.f32 %v4724, 0.0
        %v5059 = vmax.f32 %v4729, 0.0
        %v5060 = vmax.f32 %v4732, 0.0
        %v5061 = vmax.f32 %v4737, 0.0
        %v5062 = vmax.f32 %v4740, 0.0
        %v5063 = vmax.f32 %v4745, 0.0
        %v5064 = vmax.f32 %v4748, 0.0
        %v5065 = vmax.f32 %v4753, 0.0
        %v5066 = vmax.f32 %v4756, 0.0
        %v5067 = vmax.f32 %v4761, 0.0
        %v5068 = vmax.f32 %v4764, 0.0
        %v5069 = vmax.f32 %v4769, 0.0
        %v5070 = vmax.f32 %v4772, 0.0
        %v5071 = vmax.f32 %v4777, 0.0
        %v5072 = vmax.f32 %v4780, 0.0
        %v5073 = vmax.f32 %v4785, 0.0
        %v5074 = vmax.f32 %v4788, 0.0
        %v5075 = vmax.f32 %v4793, 0.0
        %v5076 = vmax.f32 %v4796, 0.0
        %v5077 = vmax.f32 %v4801, 0.0
        %v5078 = vmax.f32 %v4804, 0.0
        %v5079 = vmax.f32 %v4809, 0.0
        %v5080 = vmax.f32 %v4812, 0.0
        %v5081 = vmax.f32 %v4817, 0.0
        %v5082 = vmax.f32 %v4820, 0.0
        %v5083 = vmax.f32 %v4825, 0.0
        %v5084 = vmax.f32 %v4828, 0.0
        %v5085 = vmax.f32 %v4833, 0.0
        %v5086 = vmax.f32 %v4836, 0.0
        %v5087 = vmax.f32 %v4841, 0.0
        %v5088 = vmax.f32 %v4844, 0.0
        %v5089 = vmax.f32 %v4849, 0.0
        %v5090 = vmax.f32 %v4852, 0.0
        %v5091 = vmax.f32 %v4857, 0.0
        %v5092 = vmax.f32 %v4860, 0.0
        %v5093 = vmax.f32 %v4865, 0.0
        %v5094 = vmax.f32 %v4868, 0.0
        %v5095 = vmax.f32 %v4873, 0.0
        %v5096 = vmax.f32 %v4876, 0.0
        %v5097 = vmax.f32 %v4881, 0.0
        %v5098 = vmax.f32 %v4884, 0.0
        %v5099 = vmax.f32 %v4889, 0.0
        %v5100 = vmax.f32 %v4892, 0.0
        %v5101 = vmax.f32 %v4897, 0.0
        %v5102 = vmax.f32 %v4900, 0.0
        %v5103 = vmax.f32 %v4905, 0.0
        %v5104 = vmax.f32 %v4908, 0.0
        %v5105 = vmax.f32 %v4913, 0.0
        %v5106 = vmax.f32 %v4916, 0.0
        %v5107 = vmax.f32 %v4921, 0.0
        %v5108 = vmax.f32 %v4924, 0.0
        %v5109 = vmax.f32 %v4929, 0.0
        %v5110 = vmax.f32 %v4932, 0.0
        %v5111 = vmax.f32 %v4937, 0.0
        %v5112 = vmax.f32 %v4940, 0.0
        %v5113 = vmax.f32 %v4945, 0.0
        %v5114 = vmax.f32 %v4948, 0.0
        %v5115 = vmax.f32 %v4953, 0.0
        %v5116 = vmax.f32 %v4956, 0.0
        %v5117 = vmax.f32 %v4961, 0.0
        %v5118 = vmax.f32 %v4964, 0.0
        %v5119 = vmax.f32 %v4969, 0.0
        %v5120 = vmax.f32 %v4972, 0.0
        %v5121 = vmax.f32 %v4977, 0.0
        %v5122 = vmax.f32 %v4980, 0.0
        %v5123 = vmax.f32 %v4985, 0.0
        %v5124 = vmax.f32 %v4988, 0.0
        %v5125 = vmax.f32 %v4993, 0.0
        %v5126 = vmax.f32 %v4996, 0.0
        %v5127 = vpack.c.bf16 %v5000, %v4999
        %v5128 = vpack.c.bf16 %v5002, %v5001
        %v5129 = vpack.c.bf16 %v5004, %v5003
        %v5130 = vpack.c.bf16 %v5006, %v5005
        %v5131 = vpack.c.bf16 %v5008, %v5007
        %v5132 = vpack.c.bf16 %v5010, %v5009
        %v5133 = vpack.c.bf16 %v5012, %v5011
        %v5134 = vpack.c.bf16 %v5014, %v5013
        %v5135 = vpack.c.bf16 %v5016, %v5015
        %v5136 = vpack.c.bf16 %v5018, %v5017
        %v5137 = vpack.c.bf16 %v5020, %v5019
        %v5138 = vpack.c.bf16 %v5022, %v5021
        %v5139 = vpack.c.bf16 %v5024, %v5023
        %v5140 = vpack.c.bf16 %v5026, %v5025
        %v5141 = vpack.c.bf16 %v5028, %v5027
        %v5142 = vpack.c.bf16 %v5030, %v5029
        %v5143 = vpack.c.bf16 %v5032, %v5031
        %v5144 = vpack.c.bf16 %v5034, %v5033
        %v5145 = vpack.c.bf16 %v5036, %v5035
        %v5146 = vpack.c.bf16 %v5038, %v5037
        %v5147 = vpack.c.bf16 %v5040, %v5039
        %v5148 = vpack.c.bf16 %v5042, %v5041
        %v5149 = vpack.c.bf16 %v5044, %v5043
        %v5150 = vpack.c.bf16 %v5046, %v5045
        %v5151 = vpack.c.bf16 %v5048, %v5047
        %v5152 = vpack.c.bf16 %v5050, %v5049
        %v5153 = vpack.c.bf16 %v5052, %v5051
        %v5154 = vpack.c.bf16 %v5054, %v5053
        %v5155 = vpack.c.bf16 %v5056, %v5055
        %v5156 = vpack.c.bf16 %v5058, %v5057
        %v5157 = vpack.c.bf16 %v5060, %v5059
        %v5158 = vpack.c.bf16 %v5062, %v5061
        %v5159 = vpack.c.bf16 %v5064, %v5063
        %v5160 = vpack.c.bf16 %v5066, %v5065
        %v5161 = vpack.c.bf16 %v5068, %v5067
        %v5162 = vpack.c.bf16 %v5070, %v5069
        %v5163 = vpack.c.bf16 %v5072, %v5071
        %v5164 = vpack.c.bf16 %v5074, %v5073
        %v5165 = vpack.c.bf16 %v5076, %v5075
        %v5166 = vpack.c.bf16 %v5078, %v5077
        %v5167 = vpack.c.bf16 %v5080, %v5079
        %v5168 = vpack.c.bf16 %v5082, %v5081
        %v5169 = vpack.c.bf16 %v5084, %v5083
        %v5170 = vpack.c.bf16 %v5086, %v5085
        %v5171 = vpack.c.bf16 %v5088, %v5087
        %v5172 = vpack.c.bf16 %v5090, %v5089
        %v5173 = vpack.c.bf16 %v5092, %v5091
        %v5174 = vpack.c.bf16 %v5094, %v5093
        %v5175 = vpack.c.bf16 %v5096, %v5095
        %v5176 = vpack.c.bf16 %v5098, %v5097
        %v5177 = vpack.c.bf16 %v5100, %v5099
        %v5178 = vpack.c.bf16 %v5102, %v5101
        %v5179 = vpack.c.bf16 %v5104, %v5103
        %v5180 = vpack.c.bf16 %v5106, %v5105
        %v5181 = vpack.c.bf16 %v5108, %v5107
        %v5182 = vpack.c.bf16 %v5110, %v5109
        %v5183 = vpack.c.bf16 %v5112, %v5111
        %v5184 = vpack.c.bf16 %v5114, %v5113
        %v5185 = vpack.c.bf16 %v5116, %v5115
        %v5186 = vpack.c.bf16 %v5118, %v5117
        %v5187 = vpack.c.bf16 %v5120, %v5119
        %v5188 = vpack.c.bf16 %v5122, %v5121
        %v5189 = vpack.c.bf16 %v5124, %v5123
        %v5190 = vpack.c.bf16 %v5126, %v5125
        %s5191 = scalar_lea.vmem %s2, 192
        %v5192 = vld [vmem:[%s5191] sm:$0xf]
        %v5193 = vld [vmem:[%s5191 + $0x4] sm:$0xf]
        %v5194 = vld [vmem:[%s5191 + $0x8] sm:$0xf]
        %v5195 = vld [vmem:[%s5191 + $0xc] sm:$0xf]
        %v5196 = vld [vmem:[%s5191 + $0x10] sm:$0xf]
        %v5197 = vld [vmem:[%s5191 + $0x14] sm:$0xf]
        %v5198 = vld [vmem:[%s5191 + $0x18] sm:$0xf]
        %v5199 = vld [vmem:[%s5191 + $0x1c] sm:$0xf]
        %v5200 = vld [vmem:[%s5191 + $0x20] sm:$0xf]
        %v5201 = vld [vmem:[%s5191 + $0x24] sm:$0xf]
        %v5202 = vld [vmem:[%s5191 + $0x28] sm:$0xf]
        %v5203 = vld [vmem:[%s5191 + $0x2c] sm:$0xf]
        %v5204 = vld [vmem:[%s5191 + $0x30] sm:$0xf]
        %v5205 = vld [vmem:[%s5191 + $0x34] sm:$0xf]
        %v5206 = vld [vmem:[%s5191 + $0x38] sm:$0xf]
        %v5207 = vld [vmem:[%s5191 + $0x3c] sm:$0xf]
        %v5208 = vlaneseq
        %v5209 = vshrl.u32 %v5208, 7
        %v5210 = vsub.s32 3, %v5209
        %v5211 = vrot.slane %v938, %v5210
        %v5228 = vunpack.c.l.b16 %v5192
        %v5229 = vunpack.c.l.b16 %v5193
        %v5230 = vunpack.c.l.b16 %v5194
        %v5231 = vunpack.c.l.b16 %v5195
        %v5232 = vunpack.c.l.b16 %v5196
        %v5233 = vunpack.c.l.b16 %v5197
        %v5234 = vunpack.c.l.b16 %v5198
        %v5235 = vunpack.c.l.b16 %v5199
        %v5236 = vunpack.c.l.b16 %v5200
        %v5237 = vunpack.c.l.b16 %v5201
        %v5238 = vunpack.c.l.b16 %v5202
        %v5239 = vunpack.c.l.b16 %v5203
        %v5240 = vunpack.c.l.b16 %v5204
        %v5241 = vunpack.c.l.b16 %v5205
        %v5242 = vunpack.c.l.b16 %v5206
        %v5243 = vunpack.c.l.b16 %v5207
        %v5244 = vpack.c.b16 %v5229, %v5228
        %v5245 = vpack.c.b16 %v5231, %v5230
        %v5246 = vpack.c.b16 %v5233, %v5232
        %v5247 = vpack.c.b16 %v5235, %v5234
        %v5248 = vpack.c.b16 %v5237, %v5236
        %v5249 = vpack.c.b16 %v5239, %v5238
        %v5250 = vpack.c.b16 %v5241, %v5240
        %v5251 = vpack.c.b16 %v5243, %v5242
        %5260 = vmatprep.subr.bf16.mxu0 0
        %5261 = vmatpush1.bf16.msra.mxu0 %v5251
        %5262 = vmatprep.subr.bf16.mxu0 0
        %5263 = vmatpush1.bf16.msra.mxu0 %v5250
        %5264 = vmatprep.subr.bf16.mxu0 0
        %5265 = vmatpush1.bf16.msra.mxu0 %v5249
        %5266 = vmatprep.subr.bf16.mxu0 0
        %5267 = vmatpush1.bf16.msra.mxu0 %v5248
        %5268 = vmatprep.subr.bf16.mxu0 0
        %5269 = vmatpush1.bf16.msra.mxu0 %v5247
        %5270 = vmatprep.subr.bf16.mxu0 0
        %5271 = vmatpush1.bf16.msra.mxu0 %v5246
        %5272 = vmatprep.subr.bf16.mxu0 0
        %5273 = vmatpush1.bf16.msra.mxu0 %v5245
        %5274 = vmatprep.subr.bf16.mxu0 0
        %5275 = vmatpush1.bf16.msra.mxu0 %v5244
        %5276 = vmatprep.subr.bf16.mxu0 0
        %5277 = vmatpush2.bf16.msra.mxu0 0
        %5278 = vmatprep.subr.bf16.mxu0 0
        %5279 = vmatpush2.bf16.msra.mxu0 0
        %5280 = vmatprep.subr.bf16.mxu0 0
        %5281 = vmatpush2.bf16.msra.mxu0 0
        %5282 = vmatprep.subr.bf16.mxu0 0
        %5283 = vmatpush2.bf16.msra.mxu0 0
        %5284 = vmatprep.subr.bf16.mxu0 0
        %5285 = vmatpush2.bf16.msra.mxu0 0
        %5286 = vmatprep.subr.bf16.mxu0 0
        %5287 = vmatpush2.bf16.msra.mxu0 0
        %5288 = vmatprep.subr.bf16.mxu0 0
        %5289 = vmatpush2.bf16.msra.mxu0 0
        %5290 = vmatprep.subr.bf16.mxu0 0
        %5291 = vmatpush2.bf16.msra.mxu0 0
        %5292 = vmatprep.mubr.bf16.mxu0 0
        %5293 = vmatmul.mubr.bf16.gmra.mxu0 %v5127
        %v5294 = vpop.f32.mrf.mxu0
        %v5295 = vadd.f32 %v5211, %v5294
        %v5296 = vpop.f32.mrf.mxu0
        %v5297 = vpop.f32.mrf.mxu0
        %v5298 = vadd.f32 %v5211, %v5297
        %v5299 = vpop.f32.mrf.mxu0
        %5300 = vmatprep.mubr.bf16.mxu0 0
        %5301 = vmatmul.mubr.bf16.gmra.mxu0 %v5128
        %v5302 = vpop.f32.mrf.mxu0
        %v5303 = vadd.f32 %v5211, %v5302
        %v5304 = vpop.f32.mrf.mxu0
        %v5305 = vpop.f32.mrf.mxu0
        %v5306 = vadd.f32 %v5211, %v5305
        %v5307 = vpop.f32.mrf.mxu0
        %5308 = vmatprep.mubr.bf16.mxu0 0
        %5309 = vmatmul.mubr.bf16.gmra.mxu0 %v5129
        %v5310 = vpop.f32.mrf.mxu0
        %v5311 = vadd.f32 %v5211, %v5310
        %v5312 = vpop.f32.mrf.mxu0
        %v5313 = vpop.f32.mrf.mxu0
        %v5314 = vadd.f32 %v5211, %v5313
        %v5315 = vpop.f32.mrf.mxu0
        %5316 = vmatprep.mubr.bf16.mxu0 0
        %5317 = vmatmul.mubr.bf16.gmra.mxu0 %v5130
        %v5318 = vpop.f32.mrf.mxu0
        %v5319 = vadd.f32 %v5211, %v5318
        %v5320 = vpop.f32.mrf.mxu0
        %v5321 = vpop.f32.mrf.mxu0
        %v5322 = vadd.f32 %v5211, %v5321
        %v5323 = vpop.f32.mrf.mxu0
        %5324 = vmatprep.mubr.bf16.mxu0 0
        %5325 = vmatmul.mubr.bf16.gmra.mxu0 %v5131
        %v5326 = vpop.f32.mrf.mxu0
        %v5327 = vadd.f32 %v5211, %v5326
        %v5328 = vpop.f32.mrf.mxu0
        %v5329 = vpop.f32.mrf.mxu0
        %v5330 = vadd.f32 %v5211, %v5329
        %v5331 = vpop.f32.mrf.mxu0
        %5332 = vmatprep.mubr.bf16.mxu0 0
        %5333 = vmatmul.mubr.bf16.gmra.mxu0 %v5132
        %v5334 = vpop.f32.mrf.mxu0
        %v5335 = vadd.f32 %v5211, %v5334
        %v5336 = vpop.f32.mrf.mxu0
        %v5337 = vpop.f32.mrf.mxu0
        %v5338 = vadd.f32 %v5211, %v5337
        %v5339 = vpop.f32.mrf.mxu0
        %5340 = vmatprep.mubr.bf16.mxu0 0
        %5341 = vmatmul.mubr.bf16.gmra.mxu0 %v5133
        %v5342 = vpop.f32.mrf.mxu0
        %v5343 = vadd.f32 %v5211, %v5342
        %v5344 = vpop.f32.mrf.mxu0
        %v5345 = vpop.f32.mrf.mxu0
        %v5346 = vadd.f32 %v5211, %v5345
        %v5347 = vpop.f32.mrf.mxu0
        %5348 = vmatprep.mubr.bf16.mxu0 0
        %5349 = vmatmul.mubr.bf16.gmra.mxu0 %v5134
        %v5350 = vpop.f32.mrf.mxu0
        %v5351 = vadd.f32 %v5211, %v5350
        %v5352 = vpop.f32.mrf.mxu0
        %v5353 = vpop.f32.mrf.mxu0
        %v5354 = vadd.f32 %v5211, %v5353
        %v5355 = vpop.f32.mrf.mxu0
        %5356 = vmatprep.mubr.bf16.mxu0 0
        %5357 = vmatmul.mubr.bf16.gmra.mxu0 %v5135
        %v5358 = vpop.f32.mrf.mxu0
        %v5359 = vadd.f32 %v5211, %v5358
        %v5360 = vpop.f32.mrf.mxu0
        %v5361 = vpop.f32.mrf.mxu0
        %v5362 = vadd.f32 %v5211, %v5361
        %v5363 = vpop.f32.mrf.mxu0
        %5364 = vmatprep.mubr.bf16.mxu0 0
        %5365 = vmatmul.mubr.bf16.gmra.mxu0 %v5136
        %v5366 = vpop.f32.mrf.mxu0
        %v5367 = vadd.f32 %v5211, %v5366
        %v5368 = vpop.f32.mrf.mxu0
        %v5369 = vpop.f32.mrf.mxu0
        %v5370 = vadd.f32 %v5211, %v5369
        %v5371 = vpop.f32.mrf.mxu0
        %5372 = vmatprep.mubr.bf16.mxu0 0
        %5373 = vmatmul.mubr.bf16.gmra.mxu0 %v5137
        %v5374 = vpop.f32.mrf.mxu0
        %v5375 = vadd.f32 %v5211, %v5374
        %v5376 = vpop.f32.mrf.mxu0
        %v5377 = vpop.f32.mrf.mxu0
        %v5378 = vadd.f32 %v5211, %v5377
        %v5379 = vpop.f32.mrf.mxu0
        %5380 = vmatprep.mubr.bf16.mxu0 0
        %5381 = vmatmul.mubr.bf16.gmra.mxu0 %v5138
        %v5382 = vpop.f32.mrf.mxu0
        %v5383 = vadd.f32 %v5211, %v5382
        %v5384 = vpop.f32.mrf.mxu0
        %v5385 = vpop.f32.mrf.mxu0
        %v5386 = vadd.f32 %v5211, %v5385
        %v5387 = vpop.f32.mrf.mxu0
        %5388 = vmatprep.mubr.bf16.mxu0 0
        %5389 = vmatmul.mubr.bf16.gmra.mxu0 %v5139
        %v5390 = vpop.f32.mrf.mxu0
        %v5391 = vadd.f32 %v5211, %v5390
        %v5392 = vpop.f32.mrf.mxu0
        %v5393 = vpop.f32.mrf.mxu0
        %v5394 = vadd.f32 %v5211, %v5393
        %v5395 = vpop.f32.mrf.mxu0
        %5396 = vmatprep.mubr.bf16.mxu0 0
        %5397 = vmatmul.mubr.bf16.gmra.mxu0 %v5140
        %v5398 = vpop.f32.mrf.mxu0
        %v5399 = vadd.f32 %v5211, %v5398
        %v5400 = vpop.f32.mrf.mxu0
        %v5401 = vpop.f32.mrf.mxu0
        %v5402 = vadd.f32 %v5211, %v5401
        %v5403 = vpop.f32.mrf.mxu0
        %5404 = vmatprep.mubr.bf16.mxu0 0
        %5405 = vmatmul.mubr.bf16.gmra.mxu0 %v5141
        %v5406 = vpop.f32.mrf.mxu0
        %v5407 = vadd.f32 %v5211, %v5406
        %v5408 = vpop.f32.mrf.mxu0
        %v5409 = vpop.f32.mrf.mxu0
        %v5410 = vadd.f32 %v5211, %v5409
        %v5411 = vpop.f32.mrf.mxu0
        %5412 = vmatprep.mubr.bf16.mxu0 0
        %5413 = vmatmul.mubr.bf16.gmra.mxu0 %v5142
        %v5414 = vpop.f32.mrf.mxu0
        %v5415 = vadd.f32 %v5211, %v5414
        %v5416 = vpop.f32.mrf.mxu0
        %v5417 = vpop.f32.mrf.mxu0
        %v5418 = vadd.f32 %v5211, %v5417
        %v5419 = vpop.f32.mrf.mxu0
        %5420 = vmatprep.mubr.bf16.mxu0 0
        %5421 = vmatmul.mubr.bf16.gmra.mxu0 %v5143
        %v5422 = vpop.f32.mrf.mxu0
        %v5423 = vadd.f32 %v5211, %v5422
        %v5424 = vpop.f32.mrf.mxu0
        %v5425 = vpop.f32.mrf.mxu0
        %v5426 = vadd.f32 %v5211, %v5425
        %v5427 = vpop.f32.mrf.mxu0
        %5428 = vmatprep.mubr.bf16.mxu0 0
        %5429 = vmatmul.mubr.bf16.gmra.mxu0 %v5144
        %v5430 = vpop.f32.mrf.mxu0
        %v5431 = vadd.f32 %v5211, %v5430
        %v5432 = vpop.f32.mrf.mxu0
        %v5433 = vpop.f32.mrf.mxu0
        %v5434 = vadd.f32 %v5211, %v5433
        %v5435 = vpop.f32.mrf.mxu0
        %5436 = vmatprep.mubr.bf16.mxu0 0
        %5437 = vmatmul.mubr.bf16.gmra.mxu0 %v5145
        %v5438 = vpop.f32.mrf.mxu0
        %v5439 = vadd.f32 %v5211, %v5438
        %v5440 = vpop.f32.mrf.mxu0
        %v5441 = vpop.f32.mrf.mxu0
        %v5442 = vadd.f32 %v5211, %v5441
        %v5443 = vpop.f32.mrf.mxu0
        %5444 = vmatprep.mubr.bf16.mxu0 0
        %5445 = vmatmul.mubr.bf16.gmra.mxu0 %v5146
        %v5446 = vpop.f32.mrf.mxu0
        %v5447 = vadd.f32 %v5211, %v5446
        %v5448 = vpop.f32.mrf.mxu0
        %v5449 = vpop.f32.mrf.mxu0
        %v5450 = vadd.f32 %v5211, %v5449
        %v5451 = vpop.f32.mrf.mxu0
        %5452 = vmatprep.mubr.bf16.mxu0 0
        %5453 = vmatmul.mubr.bf16.gmra.mxu0 %v5147
        %v5454 = vpop.f32.mrf.mxu0
        %v5455 = vadd.f32 %v5211, %v5454
        %v5456 = vpop.f32.mrf.mxu0
        %v5457 = vpop.f32.mrf.mxu0
        %v5458 = vadd.f32 %v5211, %v5457
        %v5459 = vpop.f32.mrf.mxu0
        %5460 = vmatprep.mubr.bf16.mxu0 0
        %5461 = vmatmul.mubr.bf16.gmra.mxu0 %v5148
        %v5462 = vpop.f32.mrf.mxu0
        %v5463 = vadd.f32 %v5211, %v5462
        %v5464 = vpop.f32.mrf.mxu0
        %v5465 = vpop.f32.mrf.mxu0
        %v5466 = vadd.f32 %v5211, %v5465
        %v5467 = vpop.f32.mrf.mxu0
        %5468 = vmatprep.mubr.bf16.mxu0 0
        %5469 = vmatmul.mubr.bf16.gmra.mxu0 %v5149
        %v5470 = vpop.f32.mrf.mxu0
        %v5471 = vadd.f32 %v5211, %v5470
        %v5472 = vpop.f32.mrf.mxu0
        %v5473 = vpop.f32.mrf.mxu0
        %v5474 = vadd.f32 %v5211, %v5473
        %v5475 = vpop.f32.mrf.mxu0
        %5476 = vmatprep.mubr.bf16.mxu0 0
        %5477 = vmatmul.mubr.bf16.gmra.mxu0 %v5150
        %v5478 = vpop.f32.mrf.mxu0
        %v5479 = vadd.f32 %v5211, %v5478
        %v5480 = vpop.f32.mrf.mxu0
        %v5481 = vpop.f32.mrf.mxu0
        %v5482 = vadd.f32 %v5211, %v5481
        %v5483 = vpop.f32.mrf.mxu0
        %5484 = vmatprep.mubr.bf16.mxu0 0
        %5485 = vmatmul.mubr.bf16.gmra.mxu0 %v5151
        %v5486 = vpop.f32.mrf.mxu0
        %v5487 = vadd.f32 %v5211, %v5486
        %v5488 = vpop.f32.mrf.mxu0
        %v5489 = vpop.f32.mrf.mxu0
        %v5490 = vadd.f32 %v5211, %v5489
        %v5491 = vpop.f32.mrf.mxu0
        %5492 = vmatprep.mubr.bf16.mxu0 0
        %5493 = vmatmul.mubr.bf16.gmra.mxu0 %v5152
        %v5494 = vpop.f32.mrf.mxu0
        %v5495 = vadd.f32 %v5211, %v5494
        %v5496 = vpop.f32.mrf.mxu0
        %v5497 = vpop.f32.mrf.mxu0
        %v5498 = vadd.f32 %v5211, %v5497
        %v5499 = vpop.f32.mrf.mxu0
        %5500 = vmatprep.mubr.bf16.mxu0 0
        %5501 = vmatmul.mubr.bf16.gmra.mxu0 %v5153
        %v5502 = vpop.f32.mrf.mxu0
        %v5503 = vadd.f32 %v5211, %v5502
        %v5504 = vpop.f32.mrf.mxu0
        %v5505 = vpop.f32.mrf.mxu0
        %v5506 = vadd.f32 %v5211, %v5505
        %v5507 = vpop.f32.mrf.mxu0
        %5508 = vmatprep.mubr.bf16.mxu0 0
        %5509 = vmatmul.mubr.bf16.gmra.mxu0 %v5154
        %v5510 = vpop.f32.mrf.mxu0
        %v5511 = vadd.f32 %v5211, %v5510
        %v5512 = vpop.f32.mrf.mxu0
        %v5513 = vpop.f32.mrf.mxu0
        %v5514 = vadd.f32 %v5211, %v5513
        %v5515 = vpop.f32.mrf.mxu0
        %5516 = vmatprep.mubr.bf16.mxu0 0
        %5517 = vmatmul.mubr.bf16.gmra.mxu0 %v5155
        %v5518 = vpop.f32.mrf.mxu0
        %v5519 = vadd.f32 %v5211, %v5518
        %v5520 = vpop.f32.mrf.mxu0
        %v5521 = vpop.f32.mrf.mxu0
        %v5522 = vadd.f32 %v5211, %v5521
        %v5523 = vpop.f32.mrf.mxu0
        %5524 = vmatprep.mubr.bf16.mxu0 0
        %5525 = vmatmul.mubr.bf16.gmra.mxu0 %v5156
        %v5526 = vpop.f32.mrf.mxu0
        %v5527 = vadd.f32 %v5211, %v5526
        %v5528 = vpop.f32.mrf.mxu0
        %v5529 = vpop.f32.mrf.mxu0
        %v5530 = vadd.f32 %v5211, %v5529
        %v5531 = vpop.f32.mrf.mxu0
        %5532 = vmatprep.mubr.bf16.mxu0 0
        %5533 = vmatmul.mubr.bf16.gmra.mxu0 %v5157
        %v5534 = vpop.f32.mrf.mxu0
        %v5535 = vadd.f32 %v5211, %v5534
        %v5536 = vpop.f32.mrf.mxu0
        %v5537 = vpop.f32.mrf.mxu0
        %v5538 = vadd.f32 %v5211, %v5537
        %v5539 = vpop.f32.mrf.mxu0
        %5540 = vmatprep.mubr.bf16.mxu0 0
        %5541 = vmatmul.mubr.bf16.gmra.mxu0 %v5158
        %v5542 = vpop.f32.mrf.mxu0
        %v5543 = vadd.f32 %v5211, %v5542
        %v5544 = vpop.f32.mrf.mxu0
        %v5545 = vpop.f32.mrf.mxu0
        %v5546 = vadd.f32 %v5211, %v5545
        %v5547 = vpop.f32.mrf.mxu0
        %5548 = vmatprep.mubr.bf16.mxu0 0
        %5549 = vmatmul.mubr.bf16.gmra.mxu0 %v5159
        %v5550 = vpop.f32.mrf.mxu0
        %v5551 = vadd.f32 %v5211, %v5550
        %v5552 = vpop.f32.mrf.mxu0
        %v5553 = vpop.f32.mrf.mxu0
        %v5554 = vadd.f32 %v5211, %v5553
        %v5555 = vpop.f32.mrf.mxu0
        %5556 = vmatprep.mubr.bf16.mxu0 0
        %5557 = vmatmul.mubr.bf16.gmra.mxu0 %v5160
        %v5558 = vpop.f32.mrf.mxu0
        %v5559 = vadd.f32 %v5211, %v5558
        %v5560 = vpop.f32.mrf.mxu0
        %v5561 = vpop.f32.mrf.mxu0
        %v5562 = vadd.f32 %v5211, %v5561
        %v5563 = vpop.f32.mrf.mxu0
        %5564 = vmatprep.mubr.bf16.mxu0 0
        %5565 = vmatmul.mubr.bf16.gmra.mxu0 %v5161
        %v5566 = vpop.f32.mrf.mxu0
        %v5567 = vadd.f32 %v5211, %v5566
        %v5568 = vpop.f32.mrf.mxu0
        %v5569 = vpop.f32.mrf.mxu0
        %v5570 = vadd.f32 %v5211, %v5569
        %v5571 = vpop.f32.mrf.mxu0
        %5572 = vmatprep.mubr.bf16.mxu0 0
        %5573 = vmatmul.mubr.bf16.gmra.mxu0 %v5162
        %v5574 = vpop.f32.mrf.mxu0
        %v5575 = vadd.f32 %v5211, %v5574
        %v5576 = vpop.f32.mrf.mxu0
        %v5577 = vpop.f32.mrf.mxu0
        %v5578 = vadd.f32 %v5211, %v5577
        %v5579 = vpop.f32.mrf.mxu0
        %5580 = vmatprep.mubr.bf16.mxu0 0
        %5581 = vmatmul.mubr.bf16.gmra.mxu0 %v5163
        %v5582 = vpop.f32.mrf.mxu0
        %v5583 = vadd.f32 %v5211, %v5582
        %v5584 = vpop.f32.mrf.mxu0
        %v5585 = vpop.f32.mrf.mxu0
        %v5586 = vadd.f32 %v5211, %v5585
        %v5587 = vpop.f32.mrf.mxu0
        %5588 = vmatprep.mubr.bf16.mxu0 0
        %5589 = vmatmul.mubr.bf16.gmra.mxu0 %v5164
        %v5590 = vpop.f32.mrf.mxu0
        %v5591 = vadd.f32 %v5211, %v5590
        %v5592 = vpop.f32.mrf.mxu0
        %v5593 = vpop.f32.mrf.mxu0
        %v5594 = vadd.f32 %v5211, %v5593
        %v5595 = vpop.f32.mrf.mxu0
        %5596 = vmatprep.mubr.bf16.mxu0 0
        %5597 = vmatmul.mubr.bf16.gmra.mxu0 %v5165
        %v5598 = vpop.f32.mrf.mxu0
        %v5599 = vadd.f32 %v5211, %v5598
        %v5600 = vpop.f32.mrf.mxu0
        %v5601 = vpop.f32.mrf.mxu0
        %v5602 = vadd.f32 %v5211, %v5601
        %v5603 = vpop.f32.mrf.mxu0
        %5604 = vmatprep.mubr.bf16.mxu0 0
        %5605 = vmatmul.mubr.bf16.gmra.mxu0 %v5166
        %v5606 = vpop.f32.mrf.mxu0
        %v5607 = vadd.f32 %v5211, %v5606
        %v5608 = vpop.f32.mrf.mxu0
        %v5609 = vpop.f32.mrf.mxu0
        %v5610 = vadd.f32 %v5211, %v5609
        %v5611 = vpop.f32.mrf.mxu0
        %5612 = vmatprep.mubr.bf16.mxu0 0
        %5613 = vmatmul.mubr.bf16.gmra.mxu0 %v5167
        %v5614 = vpop.f32.mrf.mxu0
        %v5615 = vadd.f32 %v5211, %v5614
        %v5616 = vpop.f32.mrf.mxu0
        %v5617 = vpop.f32.mrf.mxu0
        %v5618 = vadd.f32 %v5211, %v5617
        %v5619 = vpop.f32.mrf.mxu0
        %5620 = vmatprep.mubr.bf16.mxu0 0
        %5621 = vmatmul.mubr.bf16.gmra.mxu0 %v5168
        %v5622 = vpop.f32.mrf.mxu0
        %v5623 = vadd.f32 %v5211, %v5622
        %v5624 = vpop.f32.mrf.mxu0
        %v5625 = vpop.f32.mrf.mxu0
        %v5626 = vadd.f32 %v5211, %v5625
        %v5627 = vpop.f32.mrf.mxu0
        %5628 = vmatprep.mubr.bf16.mxu0 0
        %5629 = vmatmul.mubr.bf16.gmra.mxu0 %v5169
        %v5630 = vpop.f32.mrf.mxu0
        %v5631 = vadd.f32 %v5211, %v5630
        %v5632 = vpop.f32.mrf.mxu0
        %v5633 = vpop.f32.mrf.mxu0
        %v5634 = vadd.f32 %v5211, %v5633
        %v5635 = vpop.f32.mrf.mxu0
        %5636 = vmatprep.mubr.bf16.mxu0 0
        %5637 = vmatmul.mubr.bf16.gmra.mxu0 %v5170
        %v5638 = vpop.f32.mrf.mxu0
        %v5639 = vadd.f32 %v5211, %v5638
        %v5640 = vpop.f32.mrf.mxu0
        %v5641 = vpop.f32.mrf.mxu0
        %v5642 = vadd.f32 %v5211, %v5641
        %v5643 = vpop.f32.mrf.mxu0
        %5644 = vmatprep.mubr.bf16.mxu0 0
        %5645 = vmatmul.mubr.bf16.gmra.mxu0 %v5171
        %v5646 = vpop.f32.mrf.mxu0
        %v5647 = vadd.f32 %v5211, %v5646
        %v5648 = vpop.f32.mrf.mxu0
        %v5649 = vpop.f32.mrf.mxu0
        %v5650 = vadd.f32 %v5211, %v5649
        %v5651 = vpop.f32.mrf.mxu0
        %5652 = vmatprep.mubr.bf16.mxu0 0
        %5653 = vmatmul.mubr.bf16.gmra.mxu0 %v5172
        %v5654 = vpop.f32.mrf.mxu0
        %v5655 = vadd.f32 %v5211, %v5654
        %v5656 = vpop.f32.mrf.mxu0
        %v5657 = vpop.f32.mrf.mxu0
        %v5658 = vadd.f32 %v5211, %v5657
        %v5659 = vpop.f32.mrf.mxu0
        %5660 = vmatprep.mubr.bf16.mxu0 0
        %5661 = vmatmul.mubr.bf16.gmra.mxu0 %v5173
        %v5662 = vpop.f32.mrf.mxu0
        %v5663 = vadd.f32 %v5211, %v5662
        %v5664 = vpop.f32.mrf.mxu0
        %v5665 = vpop.f32.mrf.mxu0
        %v5666 = vadd.f32 %v5211, %v5665
        %v5667 = vpop.f32.mrf.mxu0
        %5668 = vmatprep.mubr.bf16.mxu0 0
        %5669 = vmatmul.mubr.bf16.gmra.mxu0 %v5174
        %v5670 = vpop.f32.mrf.mxu0
        %v5671 = vadd.f32 %v5211, %v5670
        %v5672 = vpop.f32.mrf.mxu0
        %v5673 = vpop.f32.mrf.mxu0
        %v5674 = vadd.f32 %v5211, %v5673
        %v5675 = vpop.f32.mrf.mxu0
        %5676 = vmatprep.mubr.bf16.mxu0 0
        %5677 = vmatmul.mubr.bf16.gmra.mxu0 %v5175
        %v5678 = vpop.f32.mrf.mxu0
        %v5679 = vadd.f32 %v5211, %v5678
        %v5680 = vpop.f32.mrf.mxu0
        %v5681 = vpop.f32.mrf.mxu0
        %v5682 = vadd.f32 %v5211, %v5681
        %v5683 = vpop.f32.mrf.mxu0
        %5684 = vmatprep.mubr.bf16.mxu0 0
        %5685 = vmatmul.mubr.bf16.gmra.mxu0 %v5176
        %v5686 = vpop.f32.mrf.mxu0
        %v5687 = vadd.f32 %v5211, %v5686
        %v5688 = vpop.f32.mrf.mxu0
        %v5689 = vpop.f32.mrf.mxu0
        %v5690 = vadd.f32 %v5211, %v5689
        %v5691 = vpop.f32.mrf.mxu0
        %5692 = vmatprep.mubr.bf16.mxu0 0
        %5693 = vmatmul.mubr.bf16.gmra.mxu0 %v5177
        %v5694 = vpop.f32.mrf.mxu0
        %v5695 = vadd.f32 %v5211, %v5694
        %v5696 = vpop.f32.mrf.mxu0
        %v5697 = vpop.f32.mrf.mxu0
        %v5698 = vadd.f32 %v5211, %v5697
        %v5699 = vpop.f32.mrf.mxu0
        %5700 = vmatprep.mubr.bf16.mxu0 0
        %5701 = vmatmul.mubr.bf16.gmra.mxu0 %v5178
        %v5702 = vpop.f32.mrf.mxu0
        %v5703 = vadd.f32 %v5211, %v5702
        %v5704 = vpop.f32.mrf.mxu0
        %v5705 = vpop.f32.mrf.mxu0
        %v5706 = vadd.f32 %v5211, %v5705
        %v5707 = vpop.f32.mrf.mxu0
        %5708 = vmatprep.mubr.bf16.mxu0 0
        %5709 = vmatmul.mubr.bf16.gmra.mxu0 %v5179
        %v5710 = vpop.f32.mrf.mxu0
        %v5711 = vadd.f32 %v5211, %v5710
        %v5712 = vpop.f32.mrf.mxu0
        %v5713 = vpop.f32.mrf.mxu0
        %v5714 = vadd.f32 %v5211, %v5713
        %v5715 = vpop.f32.mrf.mxu0
        %5716 = vmatprep.mubr.bf16.mxu0 0
        %5717 = vmatmul.mubr.bf16.gmra.mxu0 %v5180
        %v5718 = vpop.f32.mrf.mxu0
        %v5719 = vadd.f32 %v5211, %v5718
        %v5720 = vpop.f32.mrf.mxu0
        %v5721 = vpop.f32.mrf.mxu0
        %v5722 = vadd.f32 %v5211, %v5721
        %v5723 = vpop.f32.mrf.mxu0
        %5724 = vmatprep.mubr.bf16.mxu0 0
        %5725 = vmatmul.mubr.bf16.gmra.mxu0 %v5181
        %v5726 = vpop.f32.mrf.mxu0
        %v5727 = vadd.f32 %v5211, %v5726
        %v5728 = vpop.f32.mrf.mxu0
        %v5729 = vpop.f32.mrf.mxu0
        %v5730 = vadd.f32 %v5211, %v5729
        %v5731 = vpop.f32.mrf.mxu0
        %5732 = vmatprep.mubr.bf16.mxu0 0
        %5733 = vmatmul.mubr.bf16.gmra.mxu0 %v5182
        %v5734 = vpop.f32.mrf.mxu0
        %v5735 = vadd.f32 %v5211, %v5734
        %v5736 = vpop.f32.mrf.mxu0
        %v5737 = vpop.f32.mrf.mxu0
        %v5738 = vadd.f32 %v5211, %v5737
        %v5739 = vpop.f32.mrf.mxu0
        %5740 = vmatprep.mubr.bf16.mxu0 0
        %5741 = vmatmul.mubr.bf16.gmra.mxu0 %v5183
        %v5742 = vpop.f32.mrf.mxu0
        %v5743 = vadd.f32 %v5211, %v5742
        %v5744 = vpop.f32.mrf.mxu0
        %v5745 = vpop.f32.mrf.mxu0
        %v5746 = vadd.f32 %v5211, %v5745
        %v5747 = vpop.f32.mrf.mxu0
        %5748 = vmatprep.mubr.bf16.mxu0 0
        %5749 = vmatmul.mubr.bf16.gmra.mxu0 %v5184
        %v5750 = vpop.f32.mrf.mxu0
        %v5751 = vadd.f32 %v5211, %v5750
        %v5752 = vpop.f32.mrf.mxu0
        %v5753 = vpop.f32.mrf.mxu0
        %v5754 = vadd.f32 %v5211, %v5753
        %v5755 = vpop.f32.mrf.mxu0
        %5756 = vmatprep.mubr.bf16.mxu0 0
        %5757 = vmatmul.mubr.bf16.gmra.mxu0 %v5185
        %v5758 = vpop.f32.mrf.mxu0
        %v5759 = vadd.f32 %v5211, %v5758
        %v5760 = vpop.f32.mrf.mxu0
        %v5761 = vpop.f32.mrf.mxu0
        %v5762 = vadd.f32 %v5211, %v5761
        %v5763 = vpop.f32.mrf.mxu0
        %5764 = vmatprep.mubr.bf16.mxu0 0
        %5765 = vmatmul.mubr.bf16.gmra.mxu0 %v5186
        %v5766 = vpop.f32.mrf.mxu0
        %v5767 = vadd.f32 %v5211, %v5766
        %v5768 = vpop.f32.mrf.mxu0
        %v5769 = vpop.f32.mrf.mxu0
        %v5770 = vadd.f32 %v5211, %v5769
        %v5771 = vpop.f32.mrf.mxu0
        %5772 = vmatprep.mubr.bf16.mxu0 0
        %5773 = vmatmul.mubr.bf16.gmra.mxu0 %v5187
        %v5774 = vpop.f32.mrf.mxu0
        %v5775 = vadd.f32 %v5211, %v5774
        %v5776 = vpop.f32.mrf.mxu0
        %v5777 = vpop.f32.mrf.mxu0
        %v5778 = vadd.f32 %v5211, %v5777
        %v5779 = vpop.f32.mrf.mxu0
        %5780 = vmatprep.mubr.bf16.mxu0 0
        %5781 = vmatmul.mubr.bf16.gmra.mxu0 %v5188
        %v5782 = vpop.f32.mrf.mxu0
        %v5783 = vadd.f32 %v5211, %v5782
        %v5784 = vpop.f32.mrf.mxu0
        %v5785 = vpop.f32.mrf.mxu0
        %v5786 = vadd.f32 %v5211, %v5785
        %v5787 = vpop.f32.mrf.mxu0
        %5788 = vmatprep.mubr.bf16.mxu0 0
        %5789 = vmatmul.mubr.bf16.gmra.mxu0 %v5189
        %v5790 = vpop.f32.mrf.mxu0
        %v5791 = vadd.f32 %v5211, %v5790
        %v5792 = vpop.f32.mrf.mxu0
        %v5793 = vpop.f32.mrf.mxu0
        %v5794 = vadd.f32 %v5211, %v5793
        %v5795 = vpop.f32.mrf.mxu0
        %5796 = vmatprep.mubr.bf16.mxu0 0
        %5797 = vmatmul.mubr.bf16.gmra.mxu0 %v5190
        %v5798 = vpop.f32.mrf.mxu0
        %v5799 = vadd.f32 %v5211, %v5798
        %v5800 = vpop.f32.mrf.mxu0
        %v5801 = vpop.f32.mrf.mxu0
        %v5802 = vadd.f32 %v5211, %v5801
        %v5803 = vpop.f32.mrf.mxu0
        %5804 = vdwg.mxu0
        %v5805 = vmax.f32 %v5295, 0.0
        %v5806 = vmax.f32 %v5298, 0.0
        %v5807 = vmax.f32 %v5303, 0.0
        %v5808 = vmax.f32 %v5306, 0.0
        %v5809 = vmax.f32 %v5311, 0.0
        %v5810 = vmax.f32 %v5314, 0.0
        %v5811 = vmax.f32 %v5319, 0.0
        %v5812 = vmax.f32 %v5322, 0.0
        %v5813 = vmax.f32 %v5327, 0.0
        %v5814 = vmax.f32 %v5330, 0.0
        %v5815 = vmax.f32 %v5335, 0.0
        %v5816 = vmax.f32 %v5338, 0.0
        %v5817 = vmax.f32 %v5343, 0.0
        %v5818 = vmax.f32 %v5346, 0.0
        %v5819 = vmax.f32 %v5351, 0.0
        %v5820 = vmax.f32 %v5354, 0.0
        %v5821 = vmax.f32 %v5359, 0.0
        %v5822 = vmax.f32 %v5362, 0.0
        %v5823 = vmax.f32 %v5367, 0.0
        %v5824 = vmax.f32 %v5370, 0.0
        %v5825 = vmax.f32 %v5375, 0.0
        %v5826 = vmax.f32 %v5378, 0.0
        %v5827 = vmax.f32 %v5383, 0.0
        %v5828 = vmax.f32 %v5386, 0.0
        %v5829 = vmax.f32 %v5391, 0.0
        %v5830 = vmax.f32 %v5394, 0.0
        %v5831 = vmax.f32 %v5399, 0.0
        %v5832 = vmax.f32 %v5402, 0.0
        %v5833 = vmax.f32 %v5407, 0.0
        %v5834 = vmax.f32 %v5410, 0.0
        %v5835 = vmax.f32 %v5415, 0.0
        %v5836 = vmax.f32 %v5418, 0.0
        %v5837 = vmax.f32 %v5423, 0.0
        %v5838 = vmax.f32 %v5426, 0.0
        %v5839 = vmax.f32 %v5431, 0.0
        %v5840 = vmax.f32 %v5434, 0.0
        %v5841 = vmax.f32 %v5439, 0.0
        %v5842 = vmax.f32 %v5442, 0.0
        %v5843 = vmax.f32 %v5447, 0.0
        %v5844 = vmax.f32 %v5450, 0.0
        %v5845 = vmax.f32 %v5455, 0.0
        %v5846 = vmax.f32 %v5458, 0.0
        %v5847 = vmax.f32 %v5463, 0.0
        %v5848 = vmax.f32 %v5466, 0.0
        %v5849 = vmax.f32 %v5471, 0.0
        %v5850 = vmax.f32 %v5474, 0.0
        %v5851 = vmax.f32 %v5479, 0.0
        %v5852 = vmax.f32 %v5482, 0.0
        %v5853 = vmax.f32 %v5487, 0.0
        %v5854 = vmax.f32 %v5490, 0.0
        %v5855 = vmax.f32 %v5495, 0.0
        %v5856 = vmax.f32 %v5498, 0.0
        %v5857 = vmax.f32 %v5503, 0.0
        %v5858 = vmax.f32 %v5506, 0.0
        %v5859 = vmax.f32 %v5511, 0.0
        %v5860 = vmax.f32 %v5514, 0.0
        %v5861 = vmax.f32 %v5519, 0.0
        %v5862 = vmax.f32 %v5522, 0.0
        %v5863 = vmax.f32 %v5527, 0.0
        %v5864 = vmax.f32 %v5530, 0.0
        %v5865 = vmax.f32 %v5535, 0.0
        %v5866 = vmax.f32 %v5538, 0.0
        %v5867 = vmax.f32 %v5543, 0.0
        %v5868 = vmax.f32 %v5546, 0.0
        %v5869 = vmax.f32 %v5551, 0.0
        %v5870 = vmax.f32 %v5554, 0.0
        %v5871 = vmax.f32 %v5559, 0.0
        %v5872 = vmax.f32 %v5562, 0.0
        %v5873 = vmax.f32 %v5567, 0.0
        %v5874 = vmax.f32 %v5570, 0.0
        %v5875 = vmax.f32 %v5575, 0.0
        %v5876 = vmax.f32 %v5578, 0.0
        %v5877 = vmax.f32 %v5583, 0.0
        %v5878 = vmax.f32 %v5586, 0.0
        %v5879 = vmax.f32 %v5591, 0.0
        %v5880 = vmax.f32 %v5594, 0.0
        %v5881 = vmax.f32 %v5599, 0.0
        %v5882 = vmax.f32 %v5602, 0.0
        %v5883 = vmax.f32 %v5607, 0.0
        %v5884 = vmax.f32 %v5610, 0.0
        %v5885 = vmax.f32 %v5615, 0.0
        %v5886 = vmax.f32 %v5618, 0.0
        %v5887 = vmax.f32 %v5623, 0.0
        %v5888 = vmax.f32 %v5626, 0.0
        %v5889 = vmax.f32 %v5631, 0.0
        %v5890 = vmax.f32 %v5634, 0.0
        %v5891 = vmax.f32 %v5639, 0.0
        %v5892 = vmax.f32 %v5642, 0.0
        %v5893 = vmax.f32 %v5647, 0.0
        %v5894 = vmax.f32 %v5650, 0.0
        %v5895 = vmax.f32 %v5655, 0.0
        %v5896 = vmax.f32 %v5658, 0.0
        %v5897 = vmax.f32 %v5663, 0.0
        %v5898 = vmax.f32 %v5666, 0.0
        %v5899 = vmax.f32 %v5671, 0.0
        %v5900 = vmax.f32 %v5674, 0.0
        %v5901 = vmax.f32 %v5679, 0.0
        %v5902 = vmax.f32 %v5682, 0.0
        %v5903 = vmax.f32 %v5687, 0.0
        %v5904 = vmax.f32 %v5690, 0.0
        %v5905 = vmax.f32 %v5695, 0.0
        %v5906 = vmax.f32 %v5698, 0.0
        %v5907 = vmax.f32 %v5703, 0.0
        %v5908 = vmax.f32 %v5706, 0.0
        %v5909 = vmax.f32 %v5711, 0.0
        %v5910 = vmax.f32 %v5714, 0.0
        %v5911 = vmax.f32 %v5719, 0.0
        %v5912 = vmax.f32 %v5722, 0.0
        %v5913 = vmax.f32 %v5727, 0.0
        %v5914 = vmax.f32 %v5730, 0.0
        %v5915 = vmax.f32 %v5735, 0.0
        %v5916 = vmax.f32 %v5738, 0.0
        %v5917 = vmax.f32 %v5743, 0.0
        %v5918 = vmax.f32 %v5746, 0.0
        %v5919 = vmax.f32 %v5751, 0.0
        %v5920 = vmax.f32 %v5754, 0.0
        %v5921 = vmax.f32 %v5759, 0.0
        %v5922 = vmax.f32 %v5762, 0.0
        %v5923 = vmax.f32 %v5767, 0.0
        %v5924 = vmax.f32 %v5770, 0.0
        %v5925 = vmax.f32 %v5775, 0.0
        %v5926 = vmax.f32 %v5778, 0.0
        %v5927 = vmax.f32 %v5783, 0.0
        %v5928 = vmax.f32 %v5786, 0.0
        %v5929 = vmax.f32 %v5791, 0.0
        %v5930 = vmax.f32 %v5794, 0.0
        %v5931 = vmax.f32 %v5799, 0.0
        %v5932 = vmax.f32 %v5802, 0.0
        %v5933 = vmax.f32 %v5805, %v5806
        %v5934 = vmax.f32 %v5933, %v5807
        %v5935 = vmax.f32 %v5934, %v5808
        %v5936 = vmax.f32 %v5935, %v5809
        %v5937 = vmax.f32 %v5936, %v5810
        %v5938 = vmax.f32 %v5937, %v5811
        %v5939 = vmax.f32 %v5938, %v5812
        %v5940 = vmax.f32 %v5939, %v5813
        %v5941 = vmax.f32 %v5940, %v5814
        %v5942 = vmax.f32 %v5941, %v5815
        %v5943 = vmax.f32 %v5942, %v5816
        %v5944 = vmax.f32 %v5943, %v5817
        %v5945 = vmax.f32 %v5944, %v5818
        %v5946 = vmax.f32 %v5945, %v5819
        %v5947 = vmax.f32 %v5946, %v5820
        %v5948 = vrot.slane %v5947, 4
        %v5949 = vmax.f32 %v5947, %v5948
        %v5950 = vrot.slane %v5949, 2
        %v5951 = vmax.f32 %v5949, %v5950
        %v5952 = vrot.slane %v5951, 1
        %v5953 = vmax.f32 %v5951, %v5952
        %v5954 = vmax.f32 %v5821, %v5822
        %v5955 = vmax.f32 %v5954, %v5823
        %v5956 = vmax.f32 %v5955, %v5824
        %v5957 = vmax.f32 %v5956, %v5825
        %v5958 = vmax.f32 %v5957, %v5826
        %v5959 = vmax.f32 %v5958, %v5827
        %v5960 = vmax.f32 %v5959, %v5828
        %v5961 = vmax.f32 %v5960, %v5829
        %v5962 = vmax.f32 %v5961, %v5830
        %v5963 = vmax.f32 %v5962, %v5831
        %v5964 = vmax.f32 %v5963, %v5832
        %v5965 = vmax.f32 %v5964, %v5833
        %v5966 = vmax.f32 %v5965, %v5834
        %v5967 = vmax.f32 %v5966, %v5835
        %v5968 = vmax.f32 %v5967, %v5836
        %v5969 = vrot.slane %v5968, 4
        %v5970 = vmax.f32 %v5968, %v5969
        %v5971 = vrot.slane %v5970, 2
        %v5972 = vmax.f32 %v5970, %v5971
        %v5973 = vrot.slane %v5972, 1
        %v5974 = vmax.f32 %v5972, %v5973
        %v5975 = vmax.f32 %v5837, %v5838
        %v5976 = vmax.f32 %v5975, %v5839
        %v5977 = vmax.f32 %v5976, %v5840
        %v5978 = vmax.f32 %v5977, %v5841
        %v5979 = vmax.f32 %v5978, %v5842
        %v5980 = vmax.f32 %v5979, %v5843
        %v5981 = vmax.f32 %v5980, %v5844
        %v5982 = vmax.f32 %v5981, %v5845
        %v5983 = vmax.f32 %v5982, %v5846
        %v5984 = vmax.f32 %v5983, %v5847
        %v5985 = vmax.f32 %v5984, %v5848
        %v5986 = vmax.f32 %v5985, %v5849
        %v5987 = vmax.f32 %v5986, %v5850
        %v5988 = vmax.f32 %v5987, %v5851
        %v5989 = vmax.f32 %v5988, %v5852
        %v5990 = vrot.slane %v5989, 4
        %v5991 = vmax.f32 %v5989, %v5990
        %v5992 = vrot.slane %v5991, 2
        %v5993 = vmax.f32 %v5991, %v5992
        %v5994 = vrot.slane %v5993, 1
        %v5995 = vmax.f32 %v5993, %v5994
        %v5996 = vmax.f32 %v5853, %v5854
        %v5997 = vmax.f32 %v5996, %v5855
        %v5998 = vmax.f32 %v5997, %v5856
        %v5999 = vmax.f32 %v5998, %v5857
        %v6000 = vmax.f32 %v5999, %v5858
        %v6001 = vmax.f32 %v6000, %v5859
        %v6002 = vmax.f32 %v6001, %v5860
        %v6003 = vmax.f32 %v6002, %v5861
        %v6004 = vmax.f32 %v6003, %v5862
        %v6005 = vmax.f32 %v6004, %v5863
        %v6006 = vmax.f32 %v6005, %v5864
        %v6007 = vmax.f32 %v6006, %v5865
        %v6008 = vmax.f32 %v6007, %v5866
        %v6009 = vmax.f32 %v6008, %v5867
        %v6010 = vmax.f32 %v6009, %v5868
        %v6011 = vrot.slane %v6010, 4
        %v6012 = vmax.f32 %v6010, %v6011
        %v6013 = vrot.slane %v6012, 2
        %v6014 = vmax.f32 %v6012, %v6013
        %v6015 = vrot.slane %v6014, 1
        %v6016 = vmax.f32 %v6014, %v6015
        %v6017 = vmax.f32 %v5869, %v5870
        %v6018 = vmax.f32 %v6017, %v5871
        %v6019 = vmax.f32 %v6018, %v5872
        %v6020 = vmax.f32 %v6019, %v5873
        %v6021 = vmax.f32 %v6020, %v5874
        %v6022 = vmax.f32 %v6021, %v5875
        %v6023 = vmax.f32 %v6022, %v5876
        %v6024 = vmax.f32 %v6023, %v5877
        %v6025 = vmax.f32 %v6024, %v5878
        %v6026 = vmax.f32 %v6025, %v5879
        %v6027 = vmax.f32 %v6026, %v5880
        %v6028 = vmax.f32 %v6027, %v5881
        %v6029 = vmax.f32 %v6028, %v5882
        %v6030 = vmax.f32 %v6029, %v5883
        %v6031 = vmax.f32 %v6030, %v5884
        %v6032 = vrot.slane %v6031, 4
        %v6033 = vmax.f32 %v6031, %v6032
        %v6034 = vrot.slane %v6033, 2
        %v6035 = vmax.f32 %v6033, %v6034
        %v6036 = vrot.slane %v6035, 1
        %v6037 = vmax.f32 %v6035, %v6036
        %v6038 = vmax.f32 %v5885, %v5886
        %v6039 = vmax.f32 %v6038, %v5887
        %v6040 = vmax.f32 %v6039, %v5888
        %v6041 = vmax.f32 %v6040, %v5889
        %v6042 = vmax.f32 %v6041, %v5890
        %v6043 = vmax.f32 %v6042, %v5891
        %v6044 = vmax.f32 %v6043, %v5892
        %v6045 = vmax.f32 %v6044, %v5893
        %v6046 = vmax.f32 %v6045, %v5894
        %v6047 = vmax.f32 %v6046, %v5895
        %v6048 = vmax.f32 %v6047, %v5896
        %v6049 = vmax.f32 %v6048, %v5897
        %v6050 = vmax.f32 %v6049, %v5898
        %v6051 = vmax.f32 %v6050, %v5899
        %v6052 = vmax.f32 %v6051, %v5900
        %v6053 = vrot.slane %v6052, 4
        %v6054 = vmax.f32 %v6052, %v6053
        %v6055 = vrot.slane %v6054, 2
        %v6056 = vmax.f32 %v6054, %v6055
        %v6057 = vrot.slane %v6056, 1
        %v6058 = vmax.f32 %v6056, %v6057
        %v6059 = vmax.f32 %v5901, %v5902
        %v6060 = vmax.f32 %v6059, %v5903
        %v6061 = vmax.f32 %v6060, %v5904
        %v6062 = vmax.f32 %v6061, %v5905
        %v6063 = vmax.f32 %v6062, %v5906
        %v6064 = vmax.f32 %v6063, %v5907
        %v6065 = vmax.f32 %v6064, %v5908
        %v6066 = vmax.f32 %v6065, %v5909
        %v6067 = vmax.f32 %v6066, %v5910
        %v6068 = vmax.f32 %v6067, %v5911
        %v6069 = vmax.f32 %v6068, %v5912
        %v6070 = vmax.f32 %v6069, %v5913
        %v6071 = vmax.f32 %v6070, %v5914
        %v6072 = vmax.f32 %v6071, %v5915
        %v6073 = vmax.f32 %v6072, %v5916
        %v6074 = vrot.slane %v6073, 4
        %v6075 = vmax.f32 %v6073, %v6074
        %v6076 = vrot.slane %v6075, 2
        %v6077 = vmax.f32 %v6075, %v6076
        %v6078 = vrot.slane %v6077, 1
        %v6079 = vmax.f32 %v6077, %v6078
        %v6080 = vmax.f32 %v5917, %v5918
        %v6081 = vmax.f32 %v6080, %v5919
        %v6082 = vmax.f32 %v6081, %v5920
        %v6083 = vmax.f32 %v6082, %v5921
        %v6084 = vmax.f32 %v6083, %v5922
        %v6085 = vmax.f32 %v6084, %v5923
        %v6086 = vmax.f32 %v6085, %v5924
        %v6087 = vmax.f32 %v6086, %v5925
        %v6088 = vmax.f32 %v6087, %v5926
        %v6089 = vmax.f32 %v6088, %v5927
        %v6090 = vmax.f32 %v6089, %v5928
        %v6091 = vmax.f32 %v6090, %v5929
        %v6092 = vmax.f32 %v6091, %v5930
        %v6093 = vmax.f32 %v6092, %v5931
        %v6094 = vmax.f32 %v6093, %v5932
        %v6095 = vrot.slane %v6094, 4
        %v6096 = vmax.f32 %v6094, %v6095
        %v6097 = vrot.slane %v6096, 2
        %v6098 = vmax.f32 %v6096, %v6097
        %v6099 = vrot.slane %v6098, 1
        %v6100 = vmax.f32 %v6098, %v6099
        %v6101 = vld [vmem:[#allocation2] sm:$0xff]
        %vm6110 = vcmask 1041409
        %v6111 = vsel %vm6110, %v5974, %v5953
        %vm6112 = vcmask 1042434
        %v6113 = vsel %vm6112, %v5995, %v6111
        %vm6114 = vcmask 1043459
        %v6115 = vsel %vm6114, %v6016, %v6113
        %vm6116 = vcmask 1044484
        %v6117 = vsel %vm6116, %v6037, %v6115
        %vm6118 = vcmask 1045509
        %v6119 = vsel %vm6118, %v6058, %v6117
        %vm6120 = vcmask 1046534
        %v6121 = vsel %vm6120, %v6079, %v6119
        %vm6122 = vcmask 1047559
        %v6123 = vsel %vm6122, %v6100, %v6121
        %v6125 = vmax.f32 %v6101, %v6123
        %6126 = vst [vmem:[#allocation2] sm:$0xff] %v6125
        %p6127 = scmp.eq.s32.totalorder %s24, 1
        // Predicated region
        $region83: #{tpu_custom_call.1} parent=73 // pred_check
          %p6128 = pneg %p6127
        $region84: #{tpu_custom_call.1} parent=73 // pred_check_branch
          %6130 = sbr.rel (%p6128) target = $region86
        $region85: #{tpu_custom_call.1} parent=73 // pred_region
          %v6131 = vld [vmem:[#allocation2] sm:$0xff]
          %v6132 = vpack.c.bf16 %v6131, %v6131
          %s6133 = scalar_lea.vmem %s2, 256
          %v6134 = vld [vmem:[%s6133] sm:$0xf]
          %v6135 = vld [vmem:[%s6133 + $0x4] sm:$0xf]
          %v6136 = vld [vmem:[%s6133 + $0x8] sm:$0xf]
          %v6137 = vld [vmem:[%s6133 + $0xc] sm:$0xf]
          %v6138 = vld [vmem:[%s6133 + $0x10] sm:$0xf]
          %v6139 = vld [vmem:[%s6133 + $0x14] sm:$0xf]
          %v6140 = vld [vmem:[%s6133 + $0x18] sm:$0xf]
          %v6141 = vld [vmem:[%s6133 + $0x1c] sm:$0xf]
          %v6142 = vld [vmem:[%s6133 + $0x20] sm:$0xf]
          %v6143 = vld [vmem:[%s6133 + $0x24] sm:$0xf]
          %v6144 = vld [vmem:[%s6133 + $0x28] sm:$0xf]
          %v6145 = vld [vmem:[%s6133 + $0x2c] sm:$0xf]
          %v6146 = vld [vmem:[%s6133 + $0x30] sm:$0xf]
          %v6147 = vld [vmem:[%s6133 + $0x34] sm:$0xf]
          %v6148 = vld [vmem:[%s6133 + $0x38] sm:$0xf]
          %v6149 = vld [vmem:[%s6133 + $0x3c] sm:$0xf]
          %v6150 = vld [vmem:[%s802] sm:$0xff]
          %v6167 = vunpack.c.l.b16 %v6134
          %v6168 = vunpack.c.l.b16 %v6135
          %v6169 = vunpack.c.l.b16 %v6136
          %v6170 = vunpack.c.l.b16 %v6137
          %v6171 = vunpack.c.l.b16 %v6138
          %v6172 = vunpack.c.l.b16 %v6139
          %v6173 = vunpack.c.l.b16 %v6140
          %v6174 = vunpack.c.l.b16 %v6141
          %v6175 = vunpack.c.l.b16 %v6142
          %v6176 = vunpack.c.l.b16 %v6143
          %v6177 = vunpack.c.l.b16 %v6144
          %v6178 = vunpack.c.l.b16 %v6145
          %v6179 = vunpack.c.l.b16 %v6146
          %v6180 = vunpack.c.l.b16 %v6147
          %v6181 = vunpack.c.l.b16 %v6148
          %v6182 = vunpack.c.l.b16 %v6149
          %v6183 = vpack.c.b16 %v6168, %v6167
          %v6184 = vpack.c.b16 %v6170, %v6169
          %v6185 = vpack.c.b16 %v6172, %v6171
          %v6186 = vpack.c.b16 %v6174, %v6173
          %v6187 = vpack.c.b16 %v6176, %v6175
          %v6188 = vpack.c.b16 %v6178, %v6177
          %v6189 = vpack.c.b16 %v6180, %v6179
          %v6190 = vpack.c.b16 %v6182, %v6181
          %6199 = vmatprep.subr.bf16.mxu0 0
          %6200 = vmatpush1.bf16.msra.mxu0 %v6190
          %6201 = vmatprep.subr.bf16.mxu0 0
          %6202 = vmatpush1.bf16.msra.mxu0 %v6189
          %6203 = vmatprep.subr.bf16.mxu0 0
          %6204 = vmatpush1.bf16.msra.mxu0 %v6188
          %6205 = vmatprep.subr.bf16.mxu0 0
          %6206 = vmatpush1.bf16.msra.mxu0 %v6187
          %6207 = vmatprep.subr.bf16.mxu0 0
          %6208 = vmatpush1.bf16.msra.mxu0 %v6186
          %6209 = vmatprep.subr.bf16.mxu0 0
          %6210 = vmatpush1.bf16.msra.mxu0 %v6185
          %6211 = vmatprep.subr.bf16.mxu0 0
          %6212 = vmatpush1.bf16.msra.mxu0 %v6184
          %6213 = vmatprep.subr.bf16.mxu0 0
          %6214 = vmatpush1.bf16.msra.mxu0 %v6183
          %6215 = vmatprep.subr.bf16.mxu0 0
          %6216 = vmatpush2.bf16.msra.mxu0 0
          %6217 = vmatprep.subr.bf16.mxu0 0
          %6218 = vmatpush2.bf16.msra.mxu0 0
          %6219 = vmatprep.subr.bf16.mxu0 0
          %6220 = vmatpush2.bf16.msra.mxu0 0
          %6221 = vmatprep.subr.bf16.mxu0 0
          %6222 = vmatpush2.bf16.msra.mxu0 0
          %6223 = vmatprep.subr.bf16.mxu0 0
          %6224 = vmatpush2.bf16.msra.mxu0 0
          %6225 = vmatprep.subr.bf16.mxu0 0
          %6226 = vmatpush2.bf16.msra.mxu0 0
          %6227 = vmatprep.subr.bf16.mxu0 0
          %6228 = vmatpush2.bf16.msra.mxu0 0
          %6229 = vmatprep.subr.bf16.mxu0 0
          %6230 = vmatpush2.bf16.msra.mxu0 0
          %6231 = vmatprep.mubr.bf16.mxu0 0
          %6232 = vmatmul.mubr.bf16.gmra.mxu0 %v6132
          %v6233 = vpop.f32.mrf.mxu0
          %v6234 = vadd.f32 %v6150, %v6233
          %v6235 = vpop.f32.mrf.mxu0
          %v6236 = vpop.f32.mrf.mxu0
          %v6237 = vpop.f32.mrf.mxu0
          %6238 = vdwg.mxu0
          %v6239 = vmax.f32 %v6234, 0.0
          %v6240 = vpack.c.bf16 %v6239, %v6239
          %s6241 = scalar_lea.vmem %s2, 320
          %v6242 = vld [vmem:[%s6241] sm:$0xf]
          %v6243 = vld [vmem:[%s6241 + $0x4] sm:$0xf]
          %v6244 = vld [vmem:[%s6241 + $0x8] sm:$0xf]
          %v6245 = vld [vmem:[%s6241 + $0xc] sm:$0xf]
          %v6246 = vld [vmem:[%s6241 + $0x10] sm:$0xf]
          %v6247 = vld [vmem:[%s6241 + $0x14] sm:$0xf]
          %v6248 = vld [vmem:[%s6241 + $0x18] sm:$0xf]
          %v6249 = vld [vmem:[%s6241 + $0x1c] sm:$0xf]
          %v6250 = vld [vmem:[%s6241 + $0x20] sm:$0xf]
          %v6251 = vld [vmem:[%s6241 + $0x24] sm:$0xf]
          %v6252 = vld [vmem:[%s6241 + $0x28] sm:$0xf]
          %v6253 = vld [vmem:[%s6241 + $0x2c] sm:$0xf]
          %v6254 = vld [vmem:[%s6241 + $0x30] sm:$0xf]
          %v6255 = vld [vmem:[%s6241 + $0x34] sm:$0xf]
          %v6256 = vld [vmem:[%s6241 + $0x38] sm:$0xf]
          %v6257 = vld [vmem:[%s6241 + $0x3c] sm:$0xf]
          %v6258 = vlaneseq
          %v6259 = vshrl.u32 %v6258, 7
          %v6260 = vsub.s32 5, %v6259
          %v6261 = vrot.slane %v938, %v6260
          %v6278 = vunpack.c.l.b16 %v6242
          %v6279 = vunpack.c.l.b16 %v6243
          %v6280 = vunpack.c.l.b16 %v6244
          %v6281 = vunpack.c.l.b16 %v6245
          %v6282 = vunpack.c.l.b16 %v6246
          %v6283 = vunpack.c.l.b16 %v6247
          %v6284 = vunpack.c.l.b16 %v6248
          %v6285 = vunpack.c.l.b16 %v6249
          %v6286 = vunpack.c.l.b16 %v6250
          %v6287 = vunpack.c.l.b16 %v6251
          %v6288 = vunpack.c.l.b16 %v6252
          %v6289 = vunpack.c.l.b16 %v6253
          %v6290 = vunpack.c.l.b16 %v6254
          %v6291 = vunpack.c.l.b16 %v6255
          %v6292 = vunpack.c.l.b16 %v6256
          %v6293 = vunpack.c.l.b16 %v6257
          %v6294 = vpack.c.b16 %v6279, %v6278
          %v6295 = vpack.c.b16 %v6281, %v6280
          %v6296 = vpack.c.b16 %v6283, %v6282
          %v6297 = vpack.c.b16 %v6285, %v6284
          %v6298 = vpack.c.b16 %v6287, %v6286
          %v6299 = vpack.c.b16 %v6289, %v6288
          %v6300 = vpack.c.b16 %v6291, %v6290
          %v6301 = vpack.c.b16 %v6293, %v6292
          %6310 = vmatprep.subr.bf16.mxu0 0
          %6311 = vmatpush1.bf16.msra.mxu0 %v6301
          %6312 = vmatprep.subr.bf16.mxu0 0
          %6313 = vmatpush1.bf16.msra.mxu0 %v6300
          %6314 = vmatprep.subr.bf16.mxu0 0
          %6315 = vmatpush1.bf16.msra.mxu0 %v6299
          %6316 = vmatprep.subr.bf16.mxu0 0
          %6317 = vmatpush1.bf16.msra.mxu0 %v6298
          %6318 = vmatprep.subr.bf16.mxu0 0
          %6319 = vmatpush1.bf16.msra.mxu0 %v6297
          %6320 = vmatprep.subr.bf16.mxu0 0
          %6321 = vmatpush1.bf16.msra.mxu0 %v6296
          %6322 = vmatprep.subr.bf16.mxu0 0
          %6323 = vmatpush1.bf16.msra.mxu0 %v6295
          %6324 = vmatprep.subr.bf16.mxu0 0
          %6325 = vmatpush1.bf16.msra.mxu0 %v6294
          %6326 = vmatprep.subr.bf16.mxu0 0
          %6327 = vmatpush2.bf16.msra.mxu0 0
          %6328 = vmatprep.subr.bf16.mxu0 0
          %6329 = vmatpush2.bf16.msra.mxu0 0
          %6330 = vmatprep.subr.bf16.mxu0 0
          %6331 = vmatpush2.bf16.msra.mxu0 0
          %6332 = vmatprep.subr.bf16.mxu0 0
          %6333 = vmatpush2.bf16.msra.mxu0 0
          %6334 = vmatprep.subr.bf16.mxu0 0
          %6335 = vmatpush2.bf16.msra.mxu0 0
          %6336 = vmatprep.subr.bf16.mxu0 0
          %6337 = vmatpush2.bf16.msra.mxu0 0
          %6338 = vmatprep.subr.bf16.mxu0 0
          %6339 = vmatpush2.bf16.msra.mxu0 0
          %6340 = vmatprep.subr.bf16.mxu0 0
          %6341 = vmatpush2.bf16.msra.mxu0 0
          %6342 = vmatprep.mubr.bf16.mxu0 0
          %6343 = vmatmul.mubr.bf16.gmra.mxu0 %v6240
          %v6344 = vpop.f32.mrf.mxu0
          %v6345 = vadd.f32 %v6261, %v6344
          %v6346 = vpop.f32.mrf.mxu0
          %v6347 = vpop.f32.mrf.mxu0
          %v6348 = vpop.f32.mrf.mxu0
          %6349 = vdwg.mxu0
          %v6350 = vmax.f32 %v6345, 0.0
          %v6351 = vpack.c.bf16 %v6350, %v6350
          %s6352 = scalar_lea.vmem %s2, 384
          %v6353 = vld [vmem:[%s6352] sm:$0xf]
          %v6354 = vld [vmem:[%s6352 + $0x4] sm:$0xf]
          %v6355 = vld [vmem:[%s6352 + $0x8] sm:$0xf]
          %v6356 = vld [vmem:[%s6352 + $0xc] sm:$0xf]
          %v6357 = vld [vmem:[%s6352 + $0x10] sm:$0xf]
          %v6358 = vld [vmem:[%s6352 + $0x14] sm:$0xf]
          %v6359 = vld [vmem:[%s6352 + $0x18] sm:$0xf]
          %v6360 = vld [vmem:[%s6352 + $0x1c] sm:$0xf]
          %v6361 = vld [vmem:[%s6352 + $0x20] sm:$0xf]
          %v6362 = vld [vmem:[%s6352 + $0x24] sm:$0xf]
          %v6363 = vld [vmem:[%s6352 + $0x28] sm:$0xf]
          %v6364 = vld [vmem:[%s6352 + $0x2c] sm:$0xf]
          %v6365 = vld [vmem:[%s6352 + $0x30] sm:$0xf]
          %v6366 = vld [vmem:[%s6352 + $0x34] sm:$0xf]
          %v6367 = vld [vmem:[%s6352 + $0x38] sm:$0xf]
          %v6368 = vld [vmem:[%s6352 + $0x3c] sm:$0xf]
          %v6369 = vlaneseq
          %v6370 = vshrl.u32 %v6369, 7
          %v6371 = vsub.s32 6, %v6370
          %v6372 = vrot.slane %v938, %v6371
          %v6389 = vunpack.c.l.b16 %v6353
          %v6390 = vunpack.c.l.b16 %v6354
          %v6391 = vunpack.c.l.b16 %v6355
          %v6392 = vunpack.c.l.b16 %v6356
          %v6393 = vunpack.c.l.b16 %v6357
          %v6394 = vunpack.c.l.b16 %v6358
          %v6395 = vunpack.c.l.b16 %v6359
          %v6396 = vunpack.c.l.b16 %v6360
          %v6397 = vunpack.c.l.b16 %v6361
          %v6398 = vunpack.c.l.b16 %v6362
          %v6399 = vunpack.c.l.b16 %v6363
          %v6400 = vunpack.c.l.b16 %v6364
          %v6401 = vunpack.c.l.b16 %v6365
          %v6402 = vunpack.c.l.b16 %v6366
          %v6403 = vunpack.c.l.b16 %v6367
          %v6404 = vunpack.c.l.b16 %v6368
          %v6405 = vpack.c.b16 %v6390, %v6389
          %v6406 = vpack.c.b16 %v6392, %v6391
          %v6407 = vpack.c.b16 %v6394, %v6393
          %v6408 = vpack.c.b16 %v6396, %v6395
          %v6409 = vpack.c.b16 %v6398, %v6397
          %v6410 = vpack.c.b16 %v6400, %v6399
          %v6411 = vpack.c.b16 %v6402, %v6401
          %v6412 = vpack.c.b16 %v6404, %v6403
          %6421 = vmatprep.subr.bf16.mxu0 0
          %6422 = vmatpush1.bf16.msra.mxu0 %v6412
          %6423 = vmatprep.subr.bf16.mxu0 0
          %6424 = vmatpush1.bf16.msra.mxu0 %v6411
          %6425 = vmatprep.subr.bf16.mxu0 0
          %6426 = vmatpush1.bf16.msra.mxu0 %v6410
          %6427 = vmatprep.subr.bf16.mxu0 0
          %6428 = vmatpush1.bf16.msra.mxu0 %v6409
          %6429 = vmatprep.subr.bf16.mxu0 0
          %6430 = vmatpush1.bf16.msra.mxu0 %v6408
          %6431 = vmatprep.subr.bf16.mxu0 0
          %6432 = vmatpush1.bf16.msra.mxu0 %v6407
          %6433 = vmatprep.subr.bf16.mxu0 0
          %6434 = vmatpush1.bf16.msra.mxu0 %v6406
          %6435 = vmatprep.subr.bf16.mxu0 0
          %6436 = vmatpush1.bf16.msra.mxu0 %v6405
          %6437 = vmatprep.subr.bf16.mxu0 0
          %6438 = vmatpush2.bf16.msra.mxu0 0
          %6439 = vmatprep.subr.bf16.mxu0 0
          %6440 = vmatpush2.bf16.msra.mxu0 0
          %6441 = vmatprep.subr.bf16.mxu0 0
          %6442 = vmatpush2.bf16.msra.mxu0 0
          %6443 = vmatprep.subr.bf16.mxu0 0
          %6444 = vmatpush2.bf16.msra.mxu0 0
          %6445 = vmatprep.subr.bf16.mxu0 0
          %6446 = vmatpush2.bf16.msra.mxu0 0
          %6447 = vmatprep.subr.bf16.mxu0 0
          %6448 = vmatpush2.bf16.msra.mxu0 0
          %6449 = vmatprep.subr.bf16.mxu0 0
          %6450 = vmatpush2.bf16.msra.mxu0 0
          %6451 = vmatprep.subr.bf16.mxu0 0
          %6452 = vmatpush2.bf16.msra.mxu0 0
          %6453 = vmatprep.mubr.bf16.mxu0 0
          %6454 = vmatmul.mubr.bf16.gmra.mxu0 %v6351
          %v6455 = vpop.f32.mrf.mxu0
          %v6456 = vadd.f32 %v6372, %v6455
          %v6457 = vpop.f32.mrf.mxu0
          %v6458 = vpop.f32.mrf.mxu0
          %v6459 = vpop.f32.mrf.mxu0
          %6460 = vdwg.mxu0
          %6461 = vst [vmem:[%s796] sm:$0xff] %v6456
        $region86: #{tpu_custom_call.1} parent=73 // pred_fallthru
          _
        %s6462 = sand.u32 %s156, 1
        %s6463 = scalar_lea.sflag [#allocation5], %s6462
        %s6464 = sand.u32 %s156, 1
        %s6465 = smul.addr %s6464, 8
        %s6466 = scalar_lea.vmem [#allocation4], %s6465
        // Predicated region
        $region87: #{tpu_custom_call.1} parent=73 // pred_check
          %p6467 = pneg %p166
        $region88: #{tpu_custom_call.1} parent=73 // pred_check_branch
          %6469 = sbr.rel (%p6467) target = $region90
        $region89: #{tpu_custom_call.1} parent=73 // pred_region
          %s6471 = ssub.s32 128, 128
          %6472 = vsyncadd %s6463, %s6471
          %s6473 = smul.addr %s23, 128
          %s6474 = scalar_lea.hbm %s5, %s6473
          %s6476 = sshll.u32 %s6466, 4
          %s6477 = int_to_ptr.vmem [resolvable:$true] %s6476
          %6479 = dma.vmem_to_hbm [thread:$0]  %s6477, 128, %s6474, %s6463
        $region90: #{tpu_custom_call.1} parent=73 // pred_fallthru
          _
      $region74: #{tpu_custom_call.1} parent=5 // pred_fallthru
        _
      %p6480 = scmp.le.s32.totalorder 2, %s14
      // Predicated region
      $region91: #{tpu_custom_call.1} parent=5 // pred_check
        %p6481 = pneg %p6480
      $region92: #{tpu_custom_call.1} parent=5 // pred_check_branch
        %6483 = sbr.rel (%p6481) target = $region94
      $region93: #{tpu_custom_call.1} parent=5 // pred_region
        %s6484 = ssub.s32 %s14, 2
        // Predicated region
        $region95: #{tpu_custom_call.1} parent=93 // pred_check
          %p6485 = pneg %p172
        $region96: #{tpu_custom_call.1} parent=93 // pred_check_branch
          %6487 = sbr.rel (%p6485) target = $region98
        $region97: #{tpu_custom_call.1} parent=93 // pred_region
          %s6488 = sand.u32 %s157, 1
          %s6489 = scalar_lea.sflag [#allocation5], %s6488
          %s6490 = sand.u32 %s157, 1
          %s6491 = smul.addr %s6490, 8
          %s6492 = scalar_lea.vmem [#allocation4], %s6491
          %6493 = dma.done %s6489, 128
        $region98: #{tpu_custom_call.1} parent=93 // pred_fallthru
          _
      $region94: #{tpu_custom_call.1} parent=5 // pred_fallthru
        _
    $region6: #{tpu_custom_call.1} parent=1 // loop_footer
      %s18 = sadd.s32 1, %s14
    $region7: #{tpu_custom_call.1} parent=1 // loop_footer_branch
      %13 = sbr.rel target = $region3
    $region8: #{tpu_custom_call.1} parent=1 // loop_exit
      _
    %6494 = vsyncpa [#allocation5], 1
    %s6495 = scalar_lea.sflag [#allocation5], 1
    %6496 = vsyncpa %s6495, 1

</llo_original>
